<compile_context>
chip_gen: v7x
topology: tpu7x:2x2x1
jax: 0.10.0
libtpu: 0.0.40
codegen_flags: <defaults>
</compile_context>

<pallas_src>
import jax
import jax.numpy as jnp
from jax.experimental import pallas as pl
from jax.experimental.pallas import tpu as pltpu  # noqa: F401  (TPU backend)


def _se_conv1x1_kernel(x_ref, g_ref, w_ref, o_ref):
    # x_ref: (Cin, HW)   f32   input, channels as rows, pixels along lanes
    # g_ref: (Cin, 1)    f32   per-channel gate logits (column -> lane broadcast)
    # w_ref: (Cout, Cin) f32   1x1-conv weight
    # o_ref: (Cout, HW)  f32   output block
    gate = jax.nn.sigmoid(g_ref[...])                       # (Cin, 1), EUP
    xg = (x_ref[...] * gate).astype(jnp.bfloat16)           # (Cin, HW)
    w = w_ref[...].astype(jnp.bfloat16)                     # (Cout, Cin)
    # bf16 MXU operands, f32 accumulation.
    o_ref[...] = jnp.dot(w, xg, preferred_element_type=jnp.float32)


def se_conv1x1(x_nchw, gate_nc11, weight_oi11):
    """x: [1, Cin, H, W], gate: [1, Cin, 1, 1], weight: [Cout, Cin, 1, 1]."""
    N, Cin, H, W = x_nchw.shape
    Cout = weight_oi11.shape[0]
    assert N == 1, "gate/layout handling assumes N == 1 (matches the module)"
    HW = H * W

    # ---- layout plumbing: reshapes only, no transposes / copies of x ----
    x_rows = x_nchw.reshape(Cin, HW)
    gate_col = gate_nc11.reshape(Cin, 1)
    w_kn = weight_oi11.reshape(Cout, Cin)
    # TODO(synk): if the producer of x433 / the weight constant can emit bf16,
    # feed bf16 here to halve the dominant HBM traffic (pure win, DMA-bound).

    cost = pl.CostEstimate(
        flops=2 * Cout * Cin * HW,                         # ~94 MFLOP
        transcendentals=Cin,                               # sigmoid per channel
        bytes_accessed=4 * (Cin * HW + Cin + Cout * Cin + Cout * HW),
    )

    out_rows = pl.pallas_call(
        _se_conv1x1_kernel,
        out_shape=jax.ShapeDtypeStruct((Cout, HW), jnp.float32),
        # No grid: the whole problem is a single VMEM-resident block.
        in_specs=[
            pl.BlockSpec((Cin, HW), lambda: (0, 0)),       # x
            pl.BlockSpec((Cin, 1), lambda: (0, 0)),        # gate
            pl.BlockSpec((Cout, Cin), lambda: (0, 0)),     # weight
        ],
        out_specs=pl.BlockSpec((Cout, HW), lambda: (0, 0)),
        cost_estimate=cost,
    )(x_rows, gate_col, w_kn)

    # (Cout, H*W) -> (1, Cout, H, W): reshape only, no transpose.
    return out_rows.reshape(N, Cout, H, W).astype(x_nchw.dtype)


if __name__ == "__main__":
    key = jax.random.PRNGKey(0)
    k_x, k_g, k_w = jax.random.split(key, 3)

    # Shapes implied by the module's forward pass.
    N, Cin, Cout, H, W = 1, 1200, 200, 14, 14

    x433 = jax.random.normal(k_x, (N, Cin, H, W), dtype=jnp.float32)
    x437 = jax.random.normal(k_g, (N, Cin, 1, 1), dtype=jnp.float32)
    w147 = jax.random.normal(k_w, (Cout, Cin, 1, 1), dtype=jnp.float32) * 0.02

    out = se_conv1x1(x433, x437, w147)
    out = jax.block_until_ready(out)

    # Reference in plain f32 JAX (sigmoid-gate + 1x1 conv as matmul).
    gated = x433 * jax.nn.sigmoid(x437)
    ref = jnp.einsum("nchw,oc->nohw", gated, w147.reshape(Cout, Cin))
    assert out.shape == (N, Cout, H, W)
    # bf16 matmul operands with f32 accumulation over K=1200 -> ~1e-2 relative
    # error vs the pure-f32 reference.
    assert jnp.allclose(out, ref, atol=3e-2, rtol=3e-2)

    print("KERNEL_OK")
</pallas_src>

<mosaic_0001>
module attributes {stable_mosaic.version = 11 : i64} {
  func.func @_se_conv1x1_kernel(%arg0: memref<1200x196xf32, #tpu.memory_space<vmem>>, %arg1: memref<1200x1xf32, #tpu.memory_space<vmem>>, %arg2: memref<200x1200xf32, #tpu.memory_space<vmem>>, %arg3: memref<200x196xf32, #tpu.memory_space<vmem>>) attributes {dimension_semantics = [], scalar_prefetch = 0 : i64, scratch_operands = 0 : i64, tpu.core_type = #tpu.core_type<tc>} {
    %c0 = arith.constant 0 : index
    %c0_0 = arith.constant 0 : index
    %0 = vector.load %arg1[%c0, %c0_0] : memref<1200x1xf32, #tpu.memory_space<vmem>>, vector<1200x1xf32>
    %1 = arith.negf %0 : vector<1200x1xf32>
    %2 = math.exp %1 : vector<1200x1xf32>
    %cst = arith.constant 1.000000e+00 : f32
    %3 = vector.broadcast %cst : f32 to vector<1200x1xf32>
    %4 = arith.addf %3, %2 : vector<1200x1xf32>
    %5 = arith.divf %3, %4 : vector<1200x1xf32>
    %c0_1 = arith.constant 0 : index
    %c0_2 = arith.constant 0 : index
    %6 = vector.load %arg0[%c0_1, %c0_2] : memref<1200x196xf32, #tpu.memory_space<vmem>>, vector<1200x196xf32>
    %7 = vector.broadcast %5 : vector<1200x1xf32> to vector<1200x196xf32>
    %8 = arith.mulf %6, %7 : vector<1200x196xf32>
    %9 = arith.truncf %8 : vector<1200x196xf32> to vector<1200x196xbf16>
    %c0_3 = arith.constant 0 : index
    %c0_4 = arith.constant 0 : index
    %10 = vector.load %arg2[%c0_3, %c0_4] : memref<200x1200xf32, #tpu.memory_space<vmem>>, vector<200x1200xf32>
    %11 = arith.truncf %10 : vector<200x1200xf32> to vector<200x1200xbf16>
    %cst_5 = arith.constant dense<0.000000e+00> : vector<200x196xf32>
    %12 = tpu.matmul %11, %9, %cst_5 {dimension_numbers = #tpu.dot_dimension_numbers<[1], [0], [0], [1], [0, 0, 1, 1], [], []>} : vector<200x1200xbf16>, vector<1200x196xbf16>, vector<200x196xf32> -> vector<200x196xf32>
    %c0_6 = arith.constant 0 : index
    %c0_7 = arith.constant 0 : index
    %13 = vector.load %arg3[%c0_6, %c0_7] : memref<200x196xf32, #tpu.memory_space<vmem>>, vector<200x196xf32>
    tpu.vector_store %arg3[%c0_6, %c0_7], %12 {strides = array<i32>} : memref<200x196xf32, #tpu.memory_space<vmem>>, vector<200x196xf32>,
    return
  }
}

</mosaic_0001>

<llo_original>
// kernel: tpu_custom_call.1
$region0: #{tpu_custom_call.1}
  #allocation0 [shape = 'u32[]', space=smem, size = 0x4, offset = 0x4, fixed_abs, tag = 'smem constant byte address 0x4 - core index']
  #allocation1 [shape = 'u32[144,128]{1,0:T(1,128)}', space=vmem, size = 0x12000, scoped, tag = 'internal scratch']
  %s0 = inlined_call_operand.vmem [shape: f32[1200,196], index: 0, kind: input, shape index: {}]
  %s1 = inlined_call_operand.vmem [shape: f32[1200,1], index: 1, kind: input, shape index: {}]
  %s2 = inlined_call_operand.vmem [shape: f32[200,1200], index: 2, kind: input, shape index: {}]
  %s3 = inlined_call_operand.hbm [shape: f32[200,196], index: 3, kind: output, shape index: {}]
  %s4 = sld [smem:[#allocation0]]
  $region22: #{tpu_custom_call.1} parent=0
    _
  %s6 = ssub.s32 1, %s4
  %s7 = scalar_select 0, %s6, %s4
  $region1: #{tpu_custom_call.1} parent=0
    #allocation2 [shape = 'u8[204800]{0}', space=vmem, size = 0x32000, scoped, tag = 'output window, operand 0, single buffered']
    #allocation3 [shape = 's32[1]{0}', space=sflag, size = 0x4, scoped, tag = 'scoped memory for tpu_custom_call.1']
    %8 = vsyncpa [#allocation3], 0
    // Predicated region
    $region2: #{tpu_custom_call.1} parent=1 // pred_check
      _
    $region3: #{tpu_custom_call.1} parent=1 // pred_check_branch
      %10 = sbr.rel (0) target = $region5
    $region4: #{tpu_custom_call.1} parent=1 // pred_region
      _
    $region5: #{tpu_custom_call.1} parent=1 // pred_fallthru
      _
    // Predicated region
    $region6: #{tpu_custom_call.1} parent=1 // pred_check
      _
    $region7: #{tpu_custom_call.1} parent=1 // pred_check_branch
      %12 = sbr.rel (0) target = $region9
    $region8: #{tpu_custom_call.1} parent=1 // pred_region
      _
    $region9: #{tpu_custom_call.1} parent=1 // pred_fallthru
      _
    // Predicated region
    $region10: #{tpu_custom_call.1} parent=1 // pred_check
      _
    $region11: #{tpu_custom_call.1} parent=1 // pred_check_branch
      %14 = sbr.rel (0) target = $region13
    $region12: #{tpu_custom_call.1} parent=1 // pred_region
      _
    $region13: #{tpu_custom_call.1} parent=1 // pred_fallthru
      _
    %v16 = vld [vmem:[%s1] sm:$0xff]
    %v17 = vld [vmem:[%s1 + $0x8] sm:$0xff]
    %v18 = vld [vmem:[%s1 + $0x10] sm:$0xff]
    %v19 = vld [vmem:[%s1 + $0x18] sm:$0xff]
    %v20 = vld [vmem:[%s1 + $0x20] sm:$0xff]
    %v21 = vld [vmem:[%s1 + $0x28] sm:$0xff]
    %v22 = vld [vmem:[%s1 + $0x30] sm:$0xff]
    %v23 = vld [vmem:[%s1 + $0x38] sm:$0xff]
    %v24 = vld [vmem:[%s1 + $0x40] sm:$0xff]
    %v25 = vld [vmem:[%s1 + $0x48] sm:$0xff]
    %v26 = vld [vmem:[%s1 + $0x50] sm:$0xff]
    %v27 = vld [vmem:[%s1 + $0x58] sm:$0xff]
    %v28 = vld [vmem:[%s1 + $0x60] sm:$0xff]
    %v29 = vld [vmem:[%s1 + $0x68] sm:$0xff]
    %v30 = vld [vmem:[%s1 + $0x70] sm:$0xff]
    %v31 = vld [vmem:[%s1 + $0x78] sm:$0xff]
    %v32 = vld [vmem:[%s1 + $0x80] sm:$0xff]
    %v33 = vld [vmem:[%s1 + $0x88] sm:$0xff]
    %v34 = vld [vmem:[%s1 + $0x90] sm:$0xff]
    %v35 = vld [vmem:[%s1 + $0x98] sm:$0xff]
    %v36 = vld [vmem:[%s1 + $0xa0] sm:$0xff]
    %v37 = vld [vmem:[%s1 + $0xa8] sm:$0xff]
    %v38 = vld [vmem:[%s1 + $0xb0] sm:$0xff]
    %v39 = vld [vmem:[%s1 + $0xb8] sm:$0xff]
    %v40 = vld [vmem:[%s1 + $0xc0] sm:$0xff]
    %v41 = vld [vmem:[%s1 + $0xc8] sm:$0xff]
    %v42 = vld [vmem:[%s1 + $0xd0] sm:$0xff]
    %v43 = vld [vmem:[%s1 + $0xd8] sm:$0xff]
    %v44 = vld [vmem:[%s1 + $0xe0] sm:$0xff]
    %v45 = vld [vmem:[%s1 + $0xe8] sm:$0xff]
    %v46 = vld [vmem:[%s1 + $0xf0] sm:$0xff]
    %v47 = vld [vmem:[%s1 + $0xf8] sm:$0xff]
    %v48 = vld [vmem:[%s1 + $0x100] sm:$0xff]
    %v49 = vld [vmem:[%s1 + $0x108] sm:$0xff]
    %v50 = vld [vmem:[%s1 + $0x110] sm:$0xff]
    %v51 = vld [vmem:[%s1 + $0x118] sm:$0xff]
    %v52 = vld [vmem:[%s1 + $0x120] sm:$0xff]
    %v53 = vld [vmem:[%s1 + $0x128] sm:$0xff]
    %v54 = vld [vmem:[%s1 + $0x130] sm:$0xff]
    %v55 = vld [vmem:[%s1 + $0x138] sm:$0xff]
    %v56 = vld [vmem:[%s1 + $0x140] sm:$0xff]
    %v57 = vld [vmem:[%s1 + $0x148] sm:$0xff]
    %v58 = vld [vmem:[%s1 + $0x150] sm:$0xff]
    %v59 = vld [vmem:[%s1 + $0x158] sm:$0xff]
    %v60 = vld [vmem:[%s1 + $0x160] sm:$0xff]
    %v61 = vld [vmem:[%s1 + $0x168] sm:$0xff]
    %v62 = vld [vmem:[%s1 + $0x170] sm:$0xff]
    %v63 = vld [vmem:[%s1 + $0x178] sm:$0xff]
    %v64 = vld [vmem:[%s1 + $0x180] sm:$0xff]
    %v65 = vld [vmem:[%s1 + $0x188] sm:$0xff]
    %v66 = vld [vmem:[%s1 + $0x190] sm:$0xff]
    %v67 = vld [vmem:[%s1 + $0x198] sm:$0xff]
    %v68 = vld [vmem:[%s1 + $0x1a0] sm:$0xff]
    %v69 = vld [vmem:[%s1 + $0x1a8] sm:$0xff]
    %v70 = vld [vmem:[%s1 + $0x1b0] sm:$0xff]
    %v71 = vld [vmem:[%s1 + $0x1b8] sm:$0xff]
    %v72 = vld [vmem:[%s1 + $0x1c0] sm:$0xff]
    %v73 = vld [vmem:[%s1 + $0x1c8] sm:$0xff]
    %v74 = vld [vmem:[%s1 + $0x1d0] sm:$0xff]
    %v75 = vld [vmem:[%s1 + $0x1d8] sm:$0xff]
    %v76 = vld [vmem:[%s1 + $0x1e0] sm:$0xff]
    %v77 = vld [vmem:[%s1 + $0x1e8] sm:$0xff]
    %v78 = vld [vmem:[%s1 + $0x1f0] sm:$0xff]
    %v79 = vld [vmem:[%s1 + $0x1f8] sm:$0xff]
    %v80 = vld [vmem:[%s1 + $0x200] sm:$0xff]
    %v81 = vld [vmem:[%s1 + $0x208] sm:$0xff]
    %v82 = vld [vmem:[%s1 + $0x210] sm:$0xff]
    %v83 = vld [vmem:[%s1 + $0x218] sm:$0xff]
    %v84 = vld [vmem:[%s1 + $0x220] sm:$0xff]
    %v85 = vld [vmem:[%s1 + $0x228] sm:$0xff]
    %v86 = vld [vmem:[%s1 + $0x230] sm:$0xff]
    %v87 = vld [vmem:[%s1 + $0x238] sm:$0xff]
    %v88 = vld [vmem:[%s1 + $0x240] sm:$0xff]
    %v89 = vld [vmem:[%s1 + $0x248] sm:$0xff]
    %v90 = vld [vmem:[%s1 + $0x250] sm:$0xff]
    %v91 = vld [vmem:[%s1 + $0x258] sm:$0xff]
    %v92 = vld [vmem:[%s1 + $0x260] sm:$0xff]
    %v93 = vld [vmem:[%s1 + $0x268] sm:$0xff]
    %v94 = vld [vmem:[%s1 + $0x270] sm:$0xff]
    %v95 = vld [vmem:[%s1 + $0x278] sm:$0xff]
    %v96 = vld [vmem:[%s1 + $0x280] sm:$0xff]
    %v97 = vld [vmem:[%s1 + $0x288] sm:$0xff]
    %v98 = vld [vmem:[%s1 + $0x290] sm:$0xff]
    %v99 = vld [vmem:[%s1 + $0x298] sm:$0xff]
    %v100 = vld [vmem:[%s1 + $0x2a0] sm:$0xff]
    %v101 = vld [vmem:[%s1 + $0x2a8] sm:$0xff]
    %v102 = vld [vmem:[%s1 + $0x2b0] sm:$0xff]
    %v103 = vld [vmem:[%s1 + $0x2b8] sm:$0xff]
    %v104 = vld [vmem:[%s1 + $0x2c0] sm:$0xff]
    %v105 = vld [vmem:[%s1 + $0x2c8] sm:$0xff]
    %v106 = vld [vmem:[%s1 + $0x2d0] sm:$0xff]
    %v107 = vld [vmem:[%s1 + $0x2d8] sm:$0xff]
    %v108 = vld [vmem:[%s1 + $0x2e0] sm:$0xff]
    %v109 = vld [vmem:[%s1 + $0x2e8] sm:$0xff]
    %v110 = vld [vmem:[%s1 + $0x2f0] sm:$0xff]
    %v111 = vld [vmem:[%s1 + $0x2f8] sm:$0xff]
    %v112 = vld [vmem:[%s1 + $0x300] sm:$0xff]
    %v113 = vld [vmem:[%s1 + $0x308] sm:$0xff]
    %v114 = vld [vmem:[%s1 + $0x310] sm:$0xff]
    %v115 = vld [vmem:[%s1 + $0x318] sm:$0xff]
    %v116 = vld [vmem:[%s1 + $0x320] sm:$0xff]
    %v117 = vld [vmem:[%s1 + $0x328] sm:$0xff]
    %v118 = vld [vmem:[%s1 + $0x330] sm:$0xff]
    %v119 = vld [vmem:[%s1 + $0x338] sm:$0xff]
    %v120 = vld [vmem:[%s1 + $0x340] sm:$0xff]
    %v121 = vld [vmem:[%s1 + $0x348] sm:$0xff]
    %v122 = vld [vmem:[%s1 + $0x350] sm:$0xff]
    %v123 = vld [vmem:[%s1 + $0x358] sm:$0xff]
    %v124 = vld [vmem:[%s1 + $0x360] sm:$0xff]
    %v125 = vld [vmem:[%s1 + $0x368] sm:$0xff]
    %v126 = vld [vmem:[%s1 + $0x370] sm:$0xff]
    %v127 = vld [vmem:[%s1 + $0x378] sm:$0xff]
    %v128 = vld [vmem:[%s1 + $0x380] sm:$0xff]
    %v129 = vld [vmem:[%s1 + $0x388] sm:$0xff]
    %v130 = vld [vmem:[%s1 + $0x390] sm:$0xff]
    %v131 = vld [vmem:[%s1 + $0x398] sm:$0xff]
    %v132 = vld [vmem:[%s1 + $0x3a0] sm:$0xff]
    %v133 = vld [vmem:[%s1 + $0x3a8] sm:$0xff]
    %v134 = vld [vmem:[%s1 + $0x3b0] sm:$0xff]
    %v135 = vld [vmem:[%s1 + $0x3b8] sm:$0xff]
    %v136 = vld [vmem:[%s1 + $0x3c0] sm:$0xff]
    %v137 = vld [vmem:[%s1 + $0x3c8] sm:$0xff]
    %v138 = vld [vmem:[%s1 + $0x3d0] sm:$0xff]
    %v139 = vld [vmem:[%s1 + $0x3d8] sm:$0xff]
    %v140 = vld [vmem:[%s1 + $0x3e0] sm:$0xff]
    %v141 = vld [vmem:[%s1 + $0x3e8] sm:$0xff]
    %v142 = vld [vmem:[%s1 + $0x3f0] sm:$0xff]
    %v143 = vld [vmem:[%s1 + $0x3f8] sm:$0xff]
    %v144 = vld [vmem:[%s1 + $0x400] sm:$0xff]
    %v145 = vld [vmem:[%s1 + $0x408] sm:$0xff]
    %v146 = vld [vmem:[%s1 + $0x410] sm:$0xff]
    %v147 = vld [vmem:[%s1 + $0x418] sm:$0xff]
    %v148 = vld [vmem:[%s1 + $0x420] sm:$0xff]
    %v149 = vld [vmem:[%s1 + $0x428] sm:$0xff]
    %v150 = vld [vmem:[%s1 + $0x430] sm:$0xff]
    %v151 = vld [vmem:[%s1 + $0x438] sm:$0xff]
    %v152 = vld [vmem:[%s1 + $0x440] sm:$0xff]
    %v153 = vld [vmem:[%s1 + $0x448] sm:$0xff]
    %v154 = vld [vmem:[%s1 + $0x450] sm:$0xff]
    %v155 = vld [vmem:[%s1 + $0x458] sm:$0xff]
    %v156 = vld [vmem:[%s1 + $0x460] sm:$0xff]
    %v157 = vld [vmem:[%s1 + $0x468] sm:$0xff]
    %v158 = vld [vmem:[%s1 + $0x470] sm:$0xff]
    %v159 = vld [vmem:[%s1 + $0x478] sm:$0xff]
    %v160 = vld [vmem:[%s1 + $0x480] sm:$0xff]
    %v161 = vld [vmem:[%s1 + $0x488] sm:$0xff]
    %v162 = vld [vmem:[%s1 + $0x490] sm:$0xff]
    %v163 = vld [vmem:[%s1 + $0x498] sm:$0xff]
    %v164 = vld [vmem:[%s1 + $0x4a0] sm:$0xff]
    %v165 = vld [vmem:[%s1 + $0x4a8] sm:$0xff]
    %v166 = vxor.u32 %v16, 2147483648
    %v167 = vxor.u32 %v17, 2147483648
    %v168 = vxor.u32 %v18, 2147483648
    %v169 = vxor.u32 %v19, 2147483648
    %v170 = vxor.u32 %v20, 2147483648
    %v171 = vxor.u32 %v21, 2147483648
    %v172 = vxor.u32 %v22, 2147483648
    %v173 = vxor.u32 %v23, 2147483648
    %v174 = vxor.u32 %v24, 2147483648
    %v175 = vxor.u32 %v25, 2147483648
    %v176 = vxor.u32 %v26, 2147483648
    %v177 = vxor.u32 %v27, 2147483648
    %v178 = vxor.u32 %v28, 2147483648
    %v179 = vxor.u32 %v29, 2147483648
    %v180 = vxor.u32 %v30, 2147483648
    %v181 = vxor.u32 %v31, 2147483648
    %v182 = vxor.u32 %v32, 2147483648
    %v183 = vxor.u32 %v33, 2147483648
    %v184 = vxor.u32 %v34, 2147483648
    %v185 = vxor.u32 %v35, 2147483648
    %v186 = vxor.u32 %v36, 2147483648
    %v187 = vxor.u32 %v37, 2147483648
    %v188 = vxor.u32 %v38, 2147483648
    %v189 = vxor.u32 %v39, 2147483648
    %v190 = vxor.u32 %v40, 2147483648
    %v191 = vxor.u32 %v41, 2147483648
    %v192 = vxor.u32 %v42, 2147483648
    %v193 = vxor.u32 %v43, 2147483648
    %v194 = vxor.u32 %v44, 2147483648
    %v195 = vxor.u32 %v45, 2147483648
    %v196 = vxor.u32 %v46, 2147483648
    %v197 = vxor.u32 %v47, 2147483648
    %v198 = vxor.u32 %v48, 2147483648
    %v199 = vxor.u32 %v49, 2147483648
    %v200 = vxor.u32 %v50, 2147483648
    %v201 = vxor.u32 %v51, 2147483648
    %v202 = vxor.u32 %v52, 2147483648
    %v203 = vxor.u32 %v53, 2147483648
    %v204 = vxor.u32 %v54, 2147483648
    %v205 = vxor.u32 %v55, 2147483648
    %v206 = vxor.u32 %v56, 2147483648
    %v207 = vxor.u32 %v57, 2147483648
    %v208 = vxor.u32 %v58, 2147483648
    %v209 = vxor.u32 %v59, 2147483648
    %v210 = vxor.u32 %v60, 2147483648
    %v211 = vxor.u32 %v61, 2147483648
    %v212 = vxor.u32 %v62, 2147483648
    %v213 = vxor.u32 %v63, 2147483648
    %v214 = vxor.u32 %v64, 2147483648
    %v215 = vxor.u32 %v65, 2147483648
    %v216 = vxor.u32 %v66, 2147483648
    %v217 = vxor.u32 %v67, 2147483648
    %v218 = vxor.u32 %v68, 2147483648
    %v219 = vxor.u32 %v69, 2147483648
    %v220 = vxor.u32 %v70, 2147483648
    %v221 = vxor.u32 %v71, 2147483648
    %v222 = vxor.u32 %v72, 2147483648
    %v223 = vxor.u32 %v73, 2147483648
    %v224 = vxor.u32 %v74, 2147483648
    %v225 = vxor.u32 %v75, 2147483648
    %v226 = vxor.u32 %v76, 2147483648
    %v227 = vxor.u32 %v77, 2147483648
    %v228 = vxor.u32 %v78, 2147483648
    %v229 = vxor.u32 %v79, 2147483648
    %v230 = vxor.u32 %v80, 2147483648
    %v231 = vxor.u32 %v81, 2147483648
    %v232 = vxor.u32 %v82, 2147483648
    %v233 = vxor.u32 %v83, 2147483648
    %v234 = vxor.u32 %v84, 2147483648
    %v235 = vxor.u32 %v85, 2147483648
    %v236 = vxor.u32 %v86, 2147483648
    %v237 = vxor.u32 %v87, 2147483648
    %v238 = vxor.u32 %v88, 2147483648
    %v239 = vxor.u32 %v89, 2147483648
    %v240 = vxor.u32 %v90, 2147483648
    %v241 = vxor.u32 %v91, 2147483648
    %v242 = vxor.u32 %v92, 2147483648
    %v243 = vxor.u32 %v93, 2147483648
    %v244 = vxor.u32 %v94, 2147483648
    %v245 = vxor.u32 %v95, 2147483648
    %v246 = vxor.u32 %v96, 2147483648
    %v247 = vxor.u32 %v97, 2147483648
    %v248 = vxor.u32 %v98, 2147483648
    %v249 = vxor.u32 %v99, 2147483648
    %v250 = vxor.u32 %v100, 2147483648
    %v251 = vxor.u32 %v101, 2147483648
    %v252 = vxor.u32 %v102, 2147483648
    %v253 = vxor.u32 %v103, 2147483648
    %v254 = vxor.u32 %v104, 2147483648
    %v255 = vxor.u32 %v105, 2147483648
    %v256 = vxor.u32 %v106, 2147483648
    %v257 = vxor.u32 %v107, 2147483648
    %v258 = vxor.u32 %v108, 2147483648
    %v259 = vxor.u32 %v109, 2147483648
    %v260 = vxor.u32 %v110, 2147483648
    %v261 = vxor.u32 %v111, 2147483648
    %v262 = vxor.u32 %v112, 2147483648
    %v263 = vxor.u32 %v113, 2147483648
    %v264 = vxor.u32 %v114, 2147483648
    %v265 = vxor.u32 %v115, 2147483648
    %v266 = vxor.u32 %v116, 2147483648
    %v267 = vxor.u32 %v117, 2147483648
    %v268 = vxor.u32 %v118, 2147483648
    %v269 = vxor.u32 %v119, 2147483648
    %v270 = vxor.u32 %v120, 2147483648
    %v271 = vxor.u32 %v121, 2147483648
    %v272 = vxor.u32 %v122, 2147483648
    %v273 = vxor.u32 %v123, 2147483648
    %v274 = vxor.u32 %v124, 2147483648
    %v275 = vxor.u32 %v125, 2147483648
    %v276 = vxor.u32 %v126, 2147483648
    %v277 = vxor.u32 %v127, 2147483648
    %v278 = vxor.u32 %v128, 2147483648
    %v279 = vxor.u32 %v129, 2147483648
    %v280 = vxor.u32 %v130, 2147483648
    %v281 = vxor.u32 %v131, 2147483648
    %v282 = vxor.u32 %v132, 2147483648
    %v283 = vxor.u32 %v133, 2147483648
    %v284 = vxor.u32 %v134, 2147483648
    %v285 = vxor.u32 %v135, 2147483648
    %v286 = vxor.u32 %v136, 2147483648
    %v287 = vxor.u32 %v137, 2147483648
    %v288 = vxor.u32 %v138, 2147483648
    %v289 = vxor.u32 %v139, 2147483648
    %v290 = vxor.u32 %v140, 2147483648
    %v291 = vxor.u32 %v141, 2147483648
    %v292 = vxor.u32 %v142, 2147483648
    %v293 = vxor.u32 %v143, 2147483648
    %v294 = vxor.u32 %v144, 2147483648
    %v295 = vxor.u32 %v145, 2147483648
    %v296 = vxor.u32 %v146, 2147483648
    %v297 = vxor.u32 %v147, 2147483648
    %v298 = vxor.u32 %v148, 2147483648
    %v299 = vxor.u32 %v149, 2147483648
    %v300 = vxor.u32 %v150, 2147483648
    %v301 = vxor.u32 %v151, 2147483648
    %v302 = vxor.u32 %v152, 2147483648
    %v303 = vxor.u32 %v153, 2147483648
    %v304 = vxor.u32 %v154, 2147483648
    %v305 = vxor.u32 %v155, 2147483648
    %v306 = vxor.u32 %v156, 2147483648
    %v307 = vxor.u32 %v157, 2147483648
    %v308 = vxor.u32 %v158, 2147483648
    %v309 = vxor.u32 %v159, 2147483648
    %v310 = vxor.u32 %v160, 2147483648
    %v311 = vxor.u32 %v161, 2147483648
    %v312 = vxor.u32 %v162, 2147483648
    %v313 = vxor.u32 %v163, 2147483648
    %v314 = vxor.u32 %v164, 2147483648
    %v315 = vxor.u32 %v165, 2147483648
    %v316 = vmul.f32 %v166, 1.442695
    %v317 = vpow.pop %v316
    %v318 = vmul.f32 %v167, 1.442695
    %v319 = vpow.pop %v318
    %v320 = vmul.f32 %v168, 1.442695
    %v321 = vpow.pop %v320
    %v322 = vmul.f32 %v169, 1.442695
    %v323 = vpow.pop %v322
    %v324 = vmul.f32 %v170, 1.442695
    %v325 = vpow.pop %v324
    %v326 = vmul.f32 %v171, 1.442695
    %v327 = vpow.pop %v326
    %v328 = vmul.f32 %v172, 1.442695
    %v329 = vpow.pop %v328
    %v330 = vmul.f32 %v173, 1.442695
    %v331 = vpow.pop %v330
    %v332 = vmul.f32 %v174, 1.442695
    %v333 = vpow.pop %v332
    %v334 = vmul.f32 %v175, 1.442695
    %v335 = vpow.pop %v334
    %v336 = vmul.f32 %v176, 1.442695
    %v337 = vpow.pop %v336
    %v338 = vmul.f32 %v177, 1.442695
    %v339 = vpow.pop %v338
    %v340 = vmul.f32 %v178, 1.442695
    %v341 = vpow.pop %v340
    %v342 = vmul.f32 %v179, 1.442695
    %v343 = vpow.pop %v342
    %v344 = vmul.f32 %v180, 1.442695
    %v345 = vpow.pop %v344
    %v346 = vmul.f32 %v181, 1.442695
    %v347 = vpow.pop %v346
    %v348 = vmul.f32 %v182, 1.442695
    %v349 = vpow.pop %v348
    %v350 = vmul.f32 %v183, 1.442695
    %v351 = vpow.pop %v350
    %v352 = vmul.f32 %v184, 1.442695
    %v353 = vpow.pop %v352
    %v354 = vmul.f32 %v185, 1.442695
    %v355 = vpow.pop %v354
    %v356 = vmul.f32 %v186, 1.442695
    %v357 = vpow.pop %v356
    %v358 = vmul.f32 %v187, 1.442695
    %v359 = vpow.pop %v358
    %v360 = vmul.f32 %v188, 1.442695
    %v361 = vpow.pop %v360
    %v362 = vmul.f32 %v189, 1.442695
    %v363 = vpow.pop %v362
    %v364 = vmul.f32 %v190, 1.442695
    %v365 = vpow.pop %v364
    %v366 = vmul.f32 %v191, 1.442695
    %v367 = vpow.pop %v366
    %v368 = vmul.f32 %v192, 1.442695
    %v369 = vpow.pop %v368
    %v370 = vmul.f32 %v193, 1.442695
    %v371 = vpow.pop %v370
    %v372 = vmul.f32 %v194, 1.442695
    %v373 = vpow.pop %v372
    %v374 = vmul.f32 %v195, 1.442695
    %v375 = vpow.pop %v374
    %v376 = vmul.f32 %v196, 1.442695
    %v377 = vpow.pop %v376
    %v378 = vmul.f32 %v197, 1.442695
    %v379 = vpow.pop %v378
    %v380 = vmul.f32 %v198, 1.442695
    %v381 = vpow.pop %v380
    %v382 = vmul.f32 %v199, 1.442695
    %v383 = vpow.pop %v382
    %v384 = vmul.f32 %v200, 1.442695
    %v385 = vpow.pop %v384
    %v386 = vmul.f32 %v201, 1.442695
    %v387 = vpow.pop %v386
    %v388 = vmul.f32 %v202, 1.442695
    %v389 = vpow.pop %v388
    %v390 = vmul.f32 %v203, 1.442695
    %v391 = vpow.pop %v390
    %v392 = vmul.f32 %v204, 1.442695
    %v393 = vpow.pop %v392
    %v394 = vmul.f32 %v205, 1.442695
    %v395 = vpow.pop %v394
    %v396 = vmul.f32 %v206, 1.442695
    %v397 = vpow.pop %v396
    %v398 = vmul.f32 %v207, 1.442695
    %v399 = vpow.pop %v398
    %v400 = vmul.f32 %v208, 1.442695
    %v401 = vpow.pop %v400
    %v402 = vmul.f32 %v209, 1.442695
    %v403 = vpow.pop %v402
    %v404 = vmul.f32 %v210, 1.442695
    %v405 = vpow.pop %v404
    %v406 = vmul.f32 %v211, 1.442695
    %v407 = vpow.pop %v406
    %v408 = vmul.f32 %v212, 1.442695
    %v409 = vpow.pop %v408
    %v410 = vmul.f32 %v213, 1.442695
    %v411 = vpow.pop %v410
    %v412 = vmul.f32 %v214, 1.442695
    %v413 = vpow.pop %v412
    %v414 = vmul.f32 %v215, 1.442695
    %v415 = vpow.pop %v414
    %v416 = vmul.f32 %v216, 1.442695
    %v417 = vpow.pop %v416
    %v418 = vmul.f32 %v217, 1.442695
    %v419 = vpow.pop %v418
    %v420 = vmul.f32 %v218, 1.442695
    %v421 = vpow.pop %v420
    %v422 = vmul.f32 %v219, 1.442695
    %v423 = vpow.pop %v422
    %v424 = vmul.f32 %v220, 1.442695
    %v425 = vpow.pop %v424
    %v426 = vmul.f32 %v221, 1.442695
    %v427 = vpow.pop %v426
    %v428 = vmul.f32 %v222, 1.442695
    %v429 = vpow.pop %v428
    %v430 = vmul.f32 %v223, 1.442695
    %v431 = vpow.pop %v430
    %v432 = vmul.f32 %v224, 1.442695
    %v433 = vpow.pop %v432
    %v434 = vmul.f32 %v225, 1.442695
    %v435 = vpow.pop %v434
    %v436 = vmul.f32 %v226, 1.442695
    %v437 = vpow.pop %v436
    %v438 = vmul.f32 %v227, 1.442695
    %v439 = vpow.pop %v438
    %v440 = vmul.f32 %v228, 1.442695
    %v441 = vpow.pop %v440
    %v442 = vmul.f32 %v229, 1.442695
    %v443 = vpow.pop %v442
    %v444 = vmul.f32 %v230, 1.442695
    %v445 = vpow.pop %v444
    %v446 = vmul.f32 %v231, 1.442695
    %v447 = vpow.pop %v446
    %v448 = vmul.f32 %v232, 1.442695
    %v449 = vpow.pop %v448
    %v450 = vmul.f32 %v233, 1.442695
    %v451 = vpow.pop %v450
    %v452 = vmul.f32 %v234, 1.442695
    %v453 = vpow.pop %v452
    %v454 = vmul.f32 %v235, 1.442695
    %v455 = vpow.pop %v454
    %v456 = vmul.f32 %v236, 1.442695
    %v457 = vpow.pop %v456
    %v458 = vmul.f32 %v237, 1.442695
    %v459 = vpow.pop %v458
    %v460 = vmul.f32 %v238, 1.442695
    %v461 = vpow.pop %v460
    %v462 = vmul.f32 %v239, 1.442695
    %v463 = vpow.pop %v462
    %v464 = vmul.f32 %v240, 1.442695
    %v465 = vpow.pop %v464
    %v466 = vmul.f32 %v241, 1.442695
    %v467 = vpow.pop %v466
    %v468 = vmul.f32 %v242, 1.442695
    %v469 = vpow.pop %v468
    %v470 = vmul.f32 %v243, 1.442695
    %v471 = vpow.pop %v470
    %v472 = vmul.f32 %v244, 1.442695
    %v473 = vpow.pop %v472
    %v474 = vmul.f32 %v245, 1.442695
    %v475 = vpow.pop %v474
    %v476 = vmul.f32 %v246, 1.442695
    %v477 = vpow.pop %v476
    %v478 = vmul.f32 %v247, 1.442695
    %v479 = vpow.pop %v478
    %v480 = vmul.f32 %v248, 1.442695
    %v481 = vpow.pop %v480
    %v482 = vmul.f32 %v249, 1.442695
    %v483 = vpow.pop %v482
    %v484 = vmul.f32 %v250, 1.442695
    %v485 = vpow.pop %v484
    %v486 = vmul.f32 %v251, 1.442695
    %v487 = vpow.pop %v486
    %v488 = vmul.f32 %v252, 1.442695
    %v489 = vpow.pop %v488
    %v490 = vmul.f32 %v253, 1.442695
    %v491 = vpow.pop %v490
    %v492 = vmul.f32 %v254, 1.442695
    %v493 = vpow.pop %v492
    %v494 = vmul.f32 %v255, 1.442695
    %v495 = vpow.pop %v494
    %v496 = vmul.f32 %v256, 1.442695
    %v497 = vpow.pop %v496
    %v498 = vmul.f32 %v257, 1.442695
    %v499 = vpow.pop %v498
    %v500 = vmul.f32 %v258, 1.442695
    %v501 = vpow.pop %v500
    %v502 = vmul.f32 %v259, 1.442695
    %v503 = vpow.pop %v502
    %v504 = vmul.f32 %v260, 1.442695
    %v505 = vpow.pop %v504
    %v506 = vmul.f32 %v261, 1.442695
    %v507 = vpow.pop %v506
    %v508 = vmul.f32 %v262, 1.442695
    %v509 = vpow.pop %v508
    %v510 = vmul.f32 %v263, 1.442695
    %v511 = vpow.pop %v510
    %v512 = vmul.f32 %v264, 1.442695
    %v513 = vpow.pop %v512
    %v514 = vmul.f32 %v265, 1.442695
    %v515 = vpow.pop %v514
    %v516 = vmul.f32 %v266, 1.442695
    %v517 = vpow.pop %v516
    %v518 = vmul.f32 %v267, 1.442695
    %v519 = vpow.pop %v518
    %v520 = vmul.f32 %v268, 1.442695
    %v521 = vpow.pop %v520
    %v522 = vmul.f32 %v269, 1.442695
    %v523 = vpow.pop %v522
    %v524 = vmul.f32 %v270, 1.442695
    %v525 = vpow.pop %v524
    %v526 = vmul.f32 %v271, 1.442695
    %v527 = vpow.pop %v526
    %v528 = vmul.f32 %v272, 1.442695
    %v529 = vpow.pop %v528
    %v530 = vmul.f32 %v273, 1.442695
    %v531 = vpow.pop %v530
    %v532 = vmul.f32 %v274, 1.442695
    %v533 = vpow.pop %v532
    %v534 = vmul.f32 %v275, 1.442695
    %v535 = vpow.pop %v534
    %v536 = vmul.f32 %v276, 1.442695
    %v537 = vpow.pop %v536
    %v538 = vmul.f32 %v277, 1.442695
    %v539 = vpow.pop %v538
    %v540 = vmul.f32 %v278, 1.442695
    %v541 = vpow.pop %v540
    %v542 = vmul.f32 %v279, 1.442695
    %v543 = vpow.pop %v542
    %v544 = vmul.f32 %v280, 1.442695
    %v545 = vpow.pop %v544
    %v546 = vmul.f32 %v281, 1.442695
    %v547 = vpow.pop %v546
    %v548 = vmul.f32 %v282, 1.442695
    %v549 = vpow.pop %v548
    %v550 = vmul.f32 %v283, 1.442695
    %v551 = vpow.pop %v550
    %v552 = vmul.f32 %v284, 1.442695
    %v553 = vpow.pop %v552
    %v554 = vmul.f32 %v285, 1.442695
    %v555 = vpow.pop %v554
    %v556 = vmul.f32 %v286, 1.442695
    %v557 = vpow.pop %v556
    %v558 = vmul.f32 %v287, 1.442695
    %v559 = vpow.pop %v558
    %v560 = vmul.f32 %v288, 1.442695
    %v561 = vpow.pop %v560
    %v562 = vmul.f32 %v289, 1.442695
    %v563 = vpow.pop %v562
    %v564 = vmul.f32 %v290, 1.442695
    %v565 = vpow.pop %v564
    %v566 = vmul.f32 %v291, 1.442695
    %v567 = vpow.pop %v566
    %v568 = vmul.f32 %v292, 1.442695
    %v569 = vpow.pop %v568
    %v570 = vmul.f32 %v293, 1.442695
    %v571 = vpow.pop %v570
    %v572 = vmul.f32 %v294, 1.442695
    %v573 = vpow.pop %v572
    %v574 = vmul.f32 %v295, 1.442695
    %v575 = vpow.pop %v574
    %v576 = vmul.f32 %v296, 1.442695
    %v577 = vpow.pop %v576
    %v578 = vmul.f32 %v297, 1.442695
    %v579 = vpow.pop %v578
    %v580 = vmul.f32 %v298, 1.442695
    %v581 = vpow.pop %v580
    %v582 = vmul.f32 %v299, 1.442695
    %v583 = vpow.pop %v582
    %v584 = vmul.f32 %v300, 1.442695
    %v585 = vpow.pop %v584
    %v586 = vmul.f32 %v301, 1.442695
    %v587 = vpow.pop %v586
    %v588 = vmul.f32 %v302, 1.442695
    %v589 = vpow.pop %v588
    %v590 = vmul.f32 %v303, 1.442695
    %v591 = vpow.pop %v590
    %v592 = vmul.f32 %v304, 1.442695
    %v593 = vpow.pop %v592
    %v594 = vmul.f32 %v305, 1.442695
    %v595 = vpow.pop %v594
    %v596 = vmul.f32 %v306, 1.442695
    %v597 = vpow.pop %v596
    %v598 = vmul.f32 %v307, 1.442695
    %v599 = vpow.pop %v598
    %v600 = vmul.f32 %v308, 1.442695
    %v601 = vpow.pop %v600
    %v602 = vmul.f32 %v309, 1.442695
    %v603 = vpow.pop %v602
    %v604 = vmul.f32 %v310, 1.442695
    %v605 = vpow.pop %v604
    %v606 = vmul.f32 %v311, 1.442695
    %v607 = vpow.pop %v606
    %v608 = vmul.f32 %v312, 1.442695
    %v609 = vpow.pop %v608
    %v610 = vmul.f32 %v313, 1.442695
    %v611 = vpow.pop %v610
    %v612 = vmul.f32 %v314, 1.442695
    %v613 = vpow.pop %v612
    %v614 = vmul.f32 %v315, 1.442695
    %v615 = vpow.pop %v614
    %v616 = vadd.f32 %v317, 1.0
    %v617 = vadd.f32 %v319, 1.0
    %v618 = vadd.f32 %v321, 1.0
    %v619 = vadd.f32 %v323, 1.0
    %v620 = vadd.f32 %v325, 1.0
    %v621 = vadd.f32 %v327, 1.0
    %v622 = vadd.f32 %v329, 1.0
    %v623 = vadd.f32 %v331, 1.0
    %v624 = vadd.f32 %v333, 1.0
    %v625 = vadd.f32 %v335, 1.0
    %v626 = vadd.f32 %v337, 1.0
    %v627 = vadd.f32 %v339, 1.0
    %v628 = vadd.f32 %v341, 1.0
    %v629 = vadd.f32 %v343, 1.0
    %v630 = vadd.f32 %v345, 1.0
    %v631 = vadd.f32 %v347, 1.0
    %v632 = vadd.f32 %v349, 1.0
    %v633 = vadd.f32 %v351, 1.0
    %v634 = vadd.f32 %v353, 1.0
    %v635 = vadd.f32 %v355, 1.0
    %v636 = vadd.f32 %v357, 1.0
    %v637 = vadd.f32 %v359, 1.0
    %v638 = vadd.f32 %v361, 1.0
    %v639 = vadd.f32 %v363, 1.0
    %v640 = vadd.f32 %v365, 1.0
    %v641 = vadd.f32 %v367, 1.0
    %v642 = vadd.f32 %v369, 1.0
    %v643 = vadd.f32 %v371, 1.0
    %v644 = vadd.f32 %v373, 1.0
    %v645 = vadd.f32 %v375, 1.0
    %v646 = vadd.f32 %v377, 1.0
    %v647 = vadd.f32 %v379, 1.0
    %v648 = vadd.f32 %v381, 1.0
    %v649 = vadd.f32 %v383, 1.0
    %v650 = vadd.f32 %v385, 1.0
    %v651 = vadd.f32 %v387, 1.0
    %v652 = vadd.f32 %v389, 1.0
    %v653 = vadd.f32 %v391, 1.0
    %v654 = vadd.f32 %v393, 1.0
    %v655 = vadd.f32 %v395, 1.0
    %v656 = vadd.f32 %v397, 1.0
    %v657 = vadd.f32 %v399, 1.0
    %v658 = vadd.f32 %v401, 1.0
    %v659 = vadd.f32 %v403, 1.0
    %v660 = vadd.f32 %v405, 1.0
    %v661 = vadd.f32 %v407, 1.0
    %v662 = vadd.f32 %v409, 1.0
    %v663 = vadd.f32 %v411, 1.0
    %v664 = vadd.f32 %v413, 1.0
    %v665 = vadd.f32 %v415, 1.0
    %v666 = vadd.f32 %v417, 1.0
    %v667 = vadd.f32 %v419, 1.0
    %v668 = vadd.f32 %v421, 1.0
    %v669 = vadd.f32 %v423, 1.0
    %v670 = vadd.f32 %v425, 1.0
    %v671 = vadd.f32 %v427, 1.0
    %v672 = vadd.f32 %v429, 1.0
    %v673 = vadd.f32 %v431, 1.0
    %v674 = vadd.f32 %v433, 1.0
    %v675 = vadd.f32 %v435, 1.0
    %v676 = vadd.f32 %v437, 1.0
    %v677 = vadd.f32 %v439, 1.0
    %v678 = vadd.f32 %v441, 1.0
    %v679 = vadd.f32 %v443, 1.0
    %v680 = vadd.f32 %v445, 1.0
    %v681 = vadd.f32 %v447, 1.0
    %v682 = vadd.f32 %v449, 1.0
    %v683 = vadd.f32 %v451, 1.0
    %v684 = vadd.f32 %v453, 1.0
    %v685 = vadd.f32 %v455, 1.0
    %v686 = vadd.f32 %v457, 1.0
    %v687 = vadd.f32 %v459, 1.0
    %v688 = vadd.f32 %v461, 1.0
    %v689 = vadd.f32 %v463, 1.0
    %v690 = vadd.f32 %v465, 1.0
    %v691 = vadd.f32 %v467, 1.0
    %v692 = vadd.f32 %v469, 1.0
    %v693 = vadd.f32 %v471, 1.0
    %v694 = vadd.f32 %v473, 1.0
    %v695 = vadd.f32 %v475, 1.0
    %v696 = vadd.f32 %v477, 1.0
    %v697 = vadd.f32 %v479, 1.0
    %v698 = vadd.f32 %v481, 1.0
    %v699 = vadd.f32 %v483, 1.0
    %v700 = vadd.f32 %v485, 1.0
    %v701 = vadd.f32 %v487, 1.0
    %v702 = vadd.f32 %v489, 1.0
    %v703 = vadd.f32 %v491, 1.0
    %v704 = vadd.f32 %v493, 1.0
    %v705 = vadd.f32 %v495, 1.0
    %v706 = vadd.f32 %v497, 1.0
    %v707 = vadd.f32 %v499, 1.0
    %v708 = vadd.f32 %v501, 1.0
    %v709 = vadd.f32 %v503, 1.0
    %v710 = vadd.f32 %v505, 1.0
    %v711 = vadd.f32 %v507, 1.0
    %v712 = vadd.f32 %v509, 1.0
    %v713 = vadd.f32 %v511, 1.0
    %v714 = vadd.f32 %v513, 1.0
    %v715 = vadd.f32 %v515, 1.0
    %v716 = vadd.f32 %v517, 1.0
    %v717 = vadd.f32 %v519, 1.0
    %v718 = vadd.f32 %v521, 1.0
    %v719 = vadd.f32 %v523, 1.0
    %v720 = vadd.f32 %v525, 1.0
    %v721 = vadd.f32 %v527, 1.0
    %v722 = vadd.f32 %v529, 1.0
    %v723 = vadd.f32 %v531, 1.0
    %v724 = vadd.f32 %v533, 1.0
    %v725 = vadd.f32 %v535, 1.0
    %v726 = vadd.f32 %v537, 1.0
    %v727 = vadd.f32 %v539, 1.0
    %v728 = vadd.f32 %v541, 1.0
    %v729 = vadd.f32 %v543, 1.0
    %v730 = vadd.f32 %v545, 1.0
    %v731 = vadd.f32 %v547, 1.0
    %v732 = vadd.f32 %v549, 1.0
    %v733 = vadd.f32 %v551, 1.0
    %v734 = vadd.f32 %v553, 1.0
    %v735 = vadd.f32 %v555, 1.0
    %v736 = vadd.f32 %v557, 1.0
    %v737 = vadd.f32 %v559, 1.0
    %v738 = vadd.f32 %v561, 1.0
    %v739 = vadd.f32 %v563, 1.0
    %v740 = vadd.f32 %v565, 1.0
    %v741 = vadd.f32 %v567, 1.0
    %v742 = vadd.f32 %v569, 1.0
    %v743 = vadd.f32 %v571, 1.0
    %v744 = vadd.f32 %v573, 1.0
    %v745 = vadd.f32 %v575, 1.0
    %v746 = vadd.f32 %v577, 1.0
    %v747 = vadd.f32 %v579, 1.0
    %v748 = vadd.f32 %v581, 1.0
    %v749 = vadd.f32 %v583, 1.0
    %v750 = vadd.f32 %v585, 1.0
    %v751 = vadd.f32 %v587, 1.0
    %v752 = vadd.f32 %v589, 1.0
    %v753 = vadd.f32 %v591, 1.0
    %v754 = vadd.f32 %v593, 1.0
    %v755 = vadd.f32 %v595, 1.0
    %v756 = vadd.f32 %v597, 1.0
    %v757 = vadd.f32 %v599, 1.0
    %v758 = vadd.f32 %v601, 1.0
    %v759 = vadd.f32 %v603, 1.0
    %v760 = vadd.f32 %v605, 1.0
    %v761 = vadd.f32 %v607, 1.0
    %v762 = vadd.f32 %v609, 1.0
    %v763 = vadd.f32 %v611, 1.0
    %v764 = vadd.f32 %v613, 1.0
    %v765 = vadd.f32 %v615, 1.0
    %v766 = vrcp.pop %v616
    %v767 = vmul.f32 1.0, %v766
    %v768 = vrcp.pop %v617
    %v769 = vmul.f32 1.0, %v768
    %v770 = vrcp.pop %v618
    %v771 = vmul.f32 1.0, %v770
    %v772 = vrcp.pop %v619
    %v773 = vmul.f32 1.0, %v772
    %v774 = vrcp.pop %v620
    %v775 = vmul.f32 1.0, %v774
    %v776 = vrcp.pop %v621
    %v777 = vmul.f32 1.0, %v776
    %v778 = vrcp.pop %v622
    %v779 = vmul.f32 1.0, %v778
    %v780 = vrcp.pop %v623
    %v781 = vmul.f32 1.0, %v780
    %v782 = vrcp.pop %v624
    %v783 = vmul.f32 1.0, %v782
    %v784 = vrcp.pop %v625
    %v785 = vmul.f32 1.0, %v784
    %v786 = vrcp.pop %v626
    %v787 = vmul.f32 1.0, %v786
    %v788 = vrcp.pop %v627
    %v789 = vmul.f32 1.0, %v788
    %v790 = vrcp.pop %v628
    %v791 = vmul.f32 1.0, %v790
    %v792 = vrcp.pop %v629
    %v793 = vmul.f32 1.0, %v792
    %v794 = vrcp.pop %v630
    %v795 = vmul.f32 1.0, %v794
    %v796 = vrcp.pop %v631
    %v797 = vmul.f32 1.0, %v796
    %v798 = vrcp.pop %v632
    %v799 = vmul.f32 1.0, %v798
    %v800 = vrcp.pop %v633
    %v801 = vmul.f32 1.0, %v800
    %v802 = vrcp.pop %v634
    %v803 = vmul.f32 1.0, %v802
    %v804 = vrcp.pop %v635
    %v805 = vmul.f32 1.0, %v804
    %v806 = vrcp.pop %v636
    %v807 = vmul.f32 1.0, %v806
    %v808 = vrcp.pop %v637
    %v809 = vmul.f32 1.0, %v808
    %v810 = vrcp.pop %v638
    %v811 = vmul.f32 1.0, %v810
    %v812 = vrcp.pop %v639
    %v813 = vmul.f32 1.0, %v812
    %v814 = vrcp.pop %v640
    %v815 = vmul.f32 1.0, %v814
    %v816 = vrcp.pop %v641
    %v817 = vmul.f32 1.0, %v816
    %v818 = vrcp.pop %v642
    %v819 = vmul.f32 1.0, %v818
    %v820 = vrcp.pop %v643
    %v821 = vmul.f32 1.0, %v820
    %v822 = vrcp.pop %v644
    %v823 = vmul.f32 1.0, %v822
    %v824 = vrcp.pop %v645
    %v825 = vmul.f32 1.0, %v824
    %v826 = vrcp.pop %v646
    %v827 = vmul.f32 1.0, %v826
    %v828 = vrcp.pop %v647
    %v829 = vmul.f32 1.0, %v828
    %v830 = vrcp.pop %v648
    %v831 = vmul.f32 1.0, %v830
    %v832 = vrcp.pop %v649
    %v833 = vmul.f32 1.0, %v832
    %v834 = vrcp.pop %v650
    %v835 = vmul.f32 1.0, %v834
    %v836 = vrcp.pop %v651
    %v837 = vmul.f32 1.0, %v836
    %v838 = vrcp.pop %v652
    %v839 = vmul.f32 1.0, %v838
    %v840 = vrcp.pop %v653
    %v841 = vmul.f32 1.0, %v840
    %v842 = vrcp.pop %v654
    %v843 = vmul.f32 1.0, %v842
    %v844 = vrcp.pop %v655
    %v845 = vmul.f32 1.0, %v844
    %v846 = vrcp.pop %v656
    %v847 = vmul.f32 1.0, %v846
    %v848 = vrcp.pop %v657
    %v849 = vmul.f32 1.0, %v848
    %v850 = vrcp.pop %v658
    %v851 = vmul.f32 1.0, %v850
    %v852 = vrcp.pop %v659
    %v853 = vmul.f32 1.0, %v852
    %v854 = vrcp.pop %v660
    %v855 = vmul.f32 1.0, %v854
    %v856 = vrcp.pop %v661
    %v857 = vmul.f32 1.0, %v856
    %v858 = vrcp.pop %v662
    %v859 = vmul.f32 1.0, %v858
    %v860 = vrcp.pop %v663
    %v861 = vmul.f32 1.0, %v860
    %v862 = vrcp.pop %v664
    %v863 = vmul.f32 1.0, %v862
    %v864 = vrcp.pop %v665
    %v865 = vmul.f32 1.0, %v864
    %v866 = vrcp.pop %v666
    %v867 = vmul.f32 1.0, %v866
    %v868 = vrcp.pop %v667
    %v869 = vmul.f32 1.0, %v868
    %v870 = vrcp.pop %v668
    %v871 = vmul.f32 1.0, %v870
    %v872 = vrcp.pop %v669
    %v873 = vmul.f32 1.0, %v872
    %v874 = vrcp.pop %v670
    %v875 = vmul.f32 1.0, %v874
    %v876 = vrcp.pop %v671
    %v877 = vmul.f32 1.0, %v876
    %v878 = vrcp.pop %v672
    %v879 = vmul.f32 1.0, %v878
    %v880 = vrcp.pop %v673
    %v881 = vmul.f32 1.0, %v880
    %v882 = vrcp.pop %v674
    %v883 = vmul.f32 1.0, %v882
    %v884 = vrcp.pop %v675
    %v885 = vmul.f32 1.0, %v884
    %v886 = vrcp.pop %v676
    %v887 = vmul.f32 1.0, %v886
    %v888 = vrcp.pop %v677
    %v889 = vmul.f32 1.0, %v888
    %v890 = vrcp.pop %v678
    %v891 = vmul.f32 1.0, %v890
    %v892 = vrcp.pop %v679
    %v893 = vmul.f32 1.0, %v892
    %v894 = vrcp.pop %v680
    %v895 = vmul.f32 1.0, %v894
    %v896 = vrcp.pop %v681
    %v897 = vmul.f32 1.0, %v896
    %v898 = vrcp.pop %v682
    %v899 = vmul.f32 1.0, %v898
    %v900 = vrcp.pop %v683
    %v901 = vmul.f32 1.0, %v900
    %v902 = vrcp.pop %v684
    %v903 = vmul.f32 1.0, %v902
    %v904 = vrcp.pop %v685
    %v905 = vmul.f32 1.0, %v904
    %v906 = vrcp.pop %v686
    %v907 = vmul.f32 1.0, %v906
    %v908 = vrcp.pop %v687
    %v909 = vmul.f32 1.0, %v908
    %v910 = vrcp.pop %v688
    %v911 = vmul.f32 1.0, %v910
    %v912 = vrcp.pop %v689
    %v913 = vmul.f32 1.0, %v912
    %v914 = vrcp.pop %v690
    %v915 = vmul.f32 1.0, %v914
    %v916 = vrcp.pop %v691
    %v917 = vmul.f32 1.0, %v916
    %v918 = vrcp.pop %v692
    %v919 = vmul.f32 1.0, %v918
    %v920 = vrcp.pop %v693
    %v921 = vmul.f32 1.0, %v920
    %v922 = vrcp.pop %v694
    %v923 = vmul.f32 1.0, %v922
    %v924 = vrcp.pop %v695
    %v925 = vmul.f32 1.0, %v924
    %v926 = vrcp.pop %v696
    %v927 = vmul.f32 1.0, %v926
    %v928 = vrcp.pop %v697
    %v929 = vmul.f32 1.0, %v928
    %v930 = vrcp.pop %v698
    %v931 = vmul.f32 1.0, %v930
    %v932 = vrcp.pop %v699
    %v933 = vmul.f32 1.0, %v932
    %v934 = vrcp.pop %v700
    %v935 = vmul.f32 1.0, %v934
    %v936 = vrcp.pop %v701
    %v937 = vmul.f32 1.0, %v936
    %v938 = vrcp.pop %v702
    %v939 = vmul.f32 1.0, %v938
    %v940 = vrcp.pop %v703
    %v941 = vmul.f32 1.0, %v940
    %v942 = vrcp.pop %v704
    %v943 = vmul.f32 1.0, %v942
    %v944 = vrcp.pop %v705
    %v945 = vmul.f32 1.0, %v944
    %v946 = vrcp.pop %v706
    %v947 = vmul.f32 1.0, %v946
    %v948 = vrcp.pop %v707
    %v949 = vmul.f32 1.0, %v948
    %v950 = vrcp.pop %v708
    %v951 = vmul.f32 1.0, %v950
    %v952 = vrcp.pop %v709
    %v953 = vmul.f32 1.0, %v952
    %v954 = vrcp.pop %v710
    %v955 = vmul.f32 1.0, %v954
    %v956 = vrcp.pop %v711
    %v957 = vmul.f32 1.0, %v956
    %v958 = vrcp.pop %v712
    %v959 = vmul.f32 1.0, %v958
    %v960 = vrcp.pop %v713
    %v961 = vmul.f32 1.0, %v960
    %v962 = vrcp.pop %v714
    %v963 = vmul.f32 1.0, %v962
    %v964 = vrcp.pop %v715
    %v965 = vmul.f32 1.0, %v964
    %v966 = vrcp.pop %v716
    %v967 = vmul.f32 1.0, %v966
    %v968 = vrcp.pop %v717
    %v969 = vmul.f32 1.0, %v968
    %v970 = vrcp.pop %v718
    %v971 = vmul.f32 1.0, %v970
    %v972 = vrcp.pop %v719
    %v973 = vmul.f32 1.0, %v972
    %v974 = vrcp.pop %v720
    %v975 = vmul.f32 1.0, %v974
    %v976 = vrcp.pop %v721
    %v977 = vmul.f32 1.0, %v976
    %v978 = vrcp.pop %v722
    %v979 = vmul.f32 1.0, %v978
    %v980 = vrcp.pop %v723
    %v981 = vmul.f32 1.0, %v980
    %v982 = vrcp.pop %v724
    %v983 = vmul.f32 1.0, %v982
    %v984 = vrcp.pop %v725
    %v985 = vmul.f32 1.0, %v984
    %v986 = vrcp.pop %v726
    %v987 = vmul.f32 1.0, %v986
    %v988 = vrcp.pop %v727
    %v989 = vmul.f32 1.0, %v988
    %v990 = vrcp.pop %v728
    %v991 = vmul.f32 1.0, %v990
    %v992 = vrcp.pop %v729
    %v993 = vmul.f32 1.0, %v992
    %v994 = vrcp.pop %v730
    %v995 = vmul.f32 1.0, %v994
    %v996 = vrcp.pop %v731
    %v997 = vmul.f32 1.0, %v996
    %v998 = vrcp.pop %v732
    %v999 = vmul.f32 1.0, %v998
    %v1000 = vrcp.pop %v733
    %v1001 = vmul.f32 1.0, %v1000
    %v1002 = vrcp.pop %v734
    %v1003 = vmul.f32 1.0, %v1002
    %v1004 = vrcp.pop %v735
    %v1005 = vmul.f32 1.0, %v1004
    %v1006 = vrcp.pop %v736
    %v1007 = vmul.f32 1.0, %v1006
    %v1008 = vrcp.pop %v737
    %v1009 = vmul.f32 1.0, %v1008
    %v1010 = vrcp.pop %v738
    %v1011 = vmul.f32 1.0, %v1010
    %v1012 = vrcp.pop %v739
    %v1013 = vmul.f32 1.0, %v1012
    %v1014 = vrcp.pop %v740
    %v1015 = vmul.f32 1.0, %v1014
    %v1016 = vrcp.pop %v741
    %v1017 = vmul.f32 1.0, %v1016
    %v1018 = vrcp.pop %v742
    %v1019 = vmul.f32 1.0, %v1018
    %v1020 = vrcp.pop %v743
    %v1021 = vmul.f32 1.0, %v1020
    %v1022 = vrcp.pop %v744
    %v1023 = vmul.f32 1.0, %v1022
    %v1024 = vrcp.pop %v745
    %v1025 = vmul.f32 1.0, %v1024
    %v1026 = vrcp.pop %v746
    %v1027 = vmul.f32 1.0, %v1026
    %v1028 = vrcp.pop %v747
    %v1029 = vmul.f32 1.0, %v1028
    %v1030 = vrcp.pop %v748
    %v1031 = vmul.f32 1.0, %v1030
    %v1032 = vrcp.pop %v749
    %v1033 = vmul.f32 1.0, %v1032
    %v1034 = vrcp.pop %v750
    %v1035 = vmul.f32 1.0, %v1034
    %v1036 = vrcp.pop %v751
    %v1037 = vmul.f32 1.0, %v1036
    %v1038 = vrcp.pop %v752
    %v1039 = vmul.f32 1.0, %v1038
    %v1040 = vrcp.pop %v753
    %v1041 = vmul.f32 1.0, %v1040
    %v1042 = vrcp.pop %v754
    %v1043 = vmul.f32 1.0, %v1042
    %v1044 = vrcp.pop %v755
    %v1045 = vmul.f32 1.0, %v1044
    %v1046 = vrcp.pop %v756
    %v1047 = vmul.f32 1.0, %v1046
    %v1048 = vrcp.pop %v757
    %v1049 = vmul.f32 1.0, %v1048
    %v1050 = vrcp.pop %v758
    %v1051 = vmul.f32 1.0, %v1050
    %v1052 = vrcp.pop %v759
    %v1053 = vmul.f32 1.0, %v1052
    %v1054 = vrcp.pop %v760
    %v1055 = vmul.f32 1.0, %v1054
    %v1056 = vrcp.pop %v761
    %v1057 = vmul.f32 1.0, %v1056
    %v1058 = vrcp.pop %v762
    %v1059 = vmul.f32 1.0, %v1058
    %v1060 = vrcp.pop %v763
    %v1061 = vmul.f32 1.0, %v1060
    %v1062 = vrcp.pop %v764
    %v1063 = vmul.f32 1.0, %v1062
    %v1064 = vrcp.pop %v765
    %v1065 = vmul.f32 1.0, %v1064
    %v1066 = vld [vmem:[%s0] sm:$0xff]
    %v1067 = vld [vmem:[%s0 + $0x8] sm:$0xff]
    %v1068 = vld [vmem:[%s0 + $0x10] sm:$0xff]
    %v1069 = vld [vmem:[%s0 + $0x18] sm:$0xff]
    %v1070 = vld [vmem:[%s0 + $0x20] sm:$0xff]
    %v1071 = vld [vmem:[%s0 + $0x28] sm:$0xff]
    %v1072 = vld [vmem:[%s0 + $0x30] sm:$0xff]
    %v1073 = vld [vmem:[%s0 + $0x38] sm:$0xff]
    %v1074 = vld [vmem:[%s0 + $0x40] sm:$0xff]
    %v1075 = vld [vmem:[%s0 + $0x48] sm:$0xff]
    %v1076 = vld [vmem:[%s0 + $0x50] sm:$0xff]
    %v1077 = vld [vmem:[%s0 + $0x58] sm:$0xff]
    %v1078 = vld [vmem:[%s0 + $0x60] sm:$0xff]
    %v1079 = vld [vmem:[%s0 + $0x68] sm:$0xff]
    %v1080 = vld [vmem:[%s0 + $0x70] sm:$0xff]
    %v1081 = vld [vmem:[%s0 + $0x78] sm:$0xff]
    %v1082 = vld [vmem:[%s0 + $0x80] sm:$0xff]
    %v1083 = vld [vmem:[%s0 + $0x88] sm:$0xff]
    %v1084 = vld [vmem:[%s0 + $0x90] sm:$0xff]
    %v1085 = vld [vmem:[%s0 + $0x98] sm:$0xff]
    %v1086 = vld [vmem:[%s0 + $0xa0] sm:$0xff]
    %v1087 = vld [vmem:[%s0 + $0xa8] sm:$0xff]
    %v1088 = vld [vmem:[%s0 + $0xb0] sm:$0xff]
    %v1089 = vld [vmem:[%s0 + $0xb8] sm:$0xff]
    %v1090 = vld [vmem:[%s0 + $0xc0] sm:$0xff]
    %v1091 = vld [vmem:[%s0 + $0xc8] sm:$0xff]
    %v1092 = vld [vmem:[%s0 + $0xd0] sm:$0xff]
    %v1093 = vld [vmem:[%s0 + $0xd8] sm:$0xff]
    %v1094 = vld [vmem:[%s0 + $0xe0] sm:$0xff]
    %v1095 = vld [vmem:[%s0 + $0xe8] sm:$0xff]
    %v1096 = vld [vmem:[%s0 + $0xf0] sm:$0xff]
    %v1097 = vld [vmem:[%s0 + $0xf8] sm:$0xff]
    %v1098 = vld [vmem:[%s0 + $0x100] sm:$0xff]
    %v1099 = vld [vmem:[%s0 + $0x108] sm:$0xff]
    %v1100 = vld [vmem:[%s0 + $0x110] sm:$0xff]
    %v1101 = vld [vmem:[%s0 + $0x118] sm:$0xff]
    %v1102 = vld [vmem:[%s0 + $0x120] sm:$0xff]
    %v1103 = vld [vmem:[%s0 + $0x128] sm:$0xff]
    %v1104 = vld [vmem:[%s0 + $0x130] sm:$0xff]
    %v1105 = vld [vmem:[%s0 + $0x138] sm:$0xff]
    %v1106 = vld [vmem:[%s0 + $0x140] sm:$0xff]
    %v1107 = vld [vmem:[%s0 + $0x148] sm:$0xff]
    %v1108 = vld [vmem:[%s0 + $0x150] sm:$0xff]
    %v1109 = vld [vmem:[%s0 + $0x158] sm:$0xff]
    %v1110 = vld [vmem:[%s0 + $0x160] sm:$0xff]
    %v1111 = vld [vmem:[%s0 + $0x168] sm:$0xff]
    %v1112 = vld [vmem:[%s0 + $0x170] sm:$0xff]
    %v1113 = vld [vmem:[%s0 + $0x178] sm:$0xff]
    %v1114 = vld [vmem:[%s0 + $0x180] sm:$0xff]
    %v1115 = vld [vmem:[%s0 + $0x188] sm:$0xff]
    %v1116 = vld [vmem:[%s0 + $0x190] sm:$0xff]
    %v1117 = vld [vmem:[%s0 + $0x198] sm:$0xff]
    %v1118 = vld [vmem:[%s0 + $0x1a0] sm:$0xff]
    %v1119 = vld [vmem:[%s0 + $0x1a8] sm:$0xff]
    %v1120 = vld [vmem:[%s0 + $0x1b0] sm:$0xff]
    %v1121 = vld [vmem:[%s0 + $0x1b8] sm:$0xff]
    %v1122 = vld [vmem:[%s0 + $0x1c0] sm:$0xff]
    %v1123 = vld [vmem:[%s0 + $0x1c8] sm:$0xff]
    %v1124 = vld [vmem:[%s0 + $0x1d0] sm:$0xff]
    %v1125 = vld [vmem:[%s0 + $0x1d8] sm:$0xff]
    %v1126 = vld [vmem:[%s0 + $0x1e0] sm:$0xff]
    %v1127 = vld [vmem:[%s0 + $0x1e8] sm:$0xff]
    %v1128 = vld [vmem:[%s0 + $0x1f0] sm:$0xff]
    %v1129 = vld [vmem:[%s0 + $0x1f8] sm:$0xff]
    %v1130 = vld [vmem:[%s0 + $0x200] sm:$0xff]
    %v1131 = vld [vmem:[%s0 + $0x208] sm:$0xff]
    %v1132 = vld [vmem:[%s0 + $0x210] sm:$0xff]
    %v1133 = vld [vmem:[%s0 + $0x218] sm:$0xff]
    %v1134 = vld [vmem:[%s0 + $0x220] sm:$0xff]
    %v1135 = vld [vmem:[%s0 + $0x228] sm:$0xff]
    %v1136 = vld [vmem:[%s0 + $0x230] sm:$0xff]
    %v1137 = vld [vmem:[%s0 + $0x238] sm:$0xff]
    %v1138 = vld [vmem:[%s0 + $0x240] sm:$0xff]
    %v1139 = vld [vmem:[%s0 + $0x248] sm:$0xff]
    %v1140 = vld [vmem:[%s0 + $0x250] sm:$0xff]
    %v1141 = vld [vmem:[%s0 + $0x258] sm:$0xff]
    %v1142 = vld [vmem:[%s0 + $0x260] sm:$0xff]
    %v1143 = vld [vmem:[%s0 + $0x268] sm:$0xff]
    %v1144 = vld [vmem:[%s0 + $0x270] sm:$0xff]
    %v1145 = vld [vmem:[%s0 + $0x278] sm:$0xff]
    %v1146 = vld [vmem:[%s0 + $0x280] sm:$0xff]
    %v1147 = vld [vmem:[%s0 + $0x288] sm:$0xff]
    %v1148 = vld [vmem:[%s0 + $0x290] sm:$0xff]
    %v1149 = vld [vmem:[%s0 + $0x298] sm:$0xff]
    %v1150 = vld [vmem:[%s0 + $0x2a0] sm:$0xff]
    %v1151 = vld [vmem:[%s0 + $0x2a8] sm:$0xff]
    %v1152 = vld [vmem:[%s0 + $0x2b0] sm:$0xff]
    %v1153 = vld [vmem:[%s0 + $0x2b8] sm:$0xff]
    %v1154 = vld [vmem:[%s0 + $0x2c0] sm:$0xff]
    %v1155 = vld [vmem:[%s0 + $0x2c8] sm:$0xff]
    %v1156 = vld [vmem:[%s0 + $0x2d0] sm:$0xff]
    %v1157 = vld [vmem:[%s0 + $0x2d8] sm:$0xff]
    %v1158 = vld [vmem:[%s0 + $0x2e0] sm:$0xff]
    %v1159 = vld [vmem:[%s0 + $0x2e8] sm:$0xff]
    %v1160 = vld [vmem:[%s0 + $0x2f0] sm:$0xff]
    %v1161 = vld [vmem:[%s0 + $0x2f8] sm:$0xff]
    %v1162 = vld [vmem:[%s0 + $0x300] sm:$0xff]
    %v1163 = vld [vmem:[%s0 + $0x308] sm:$0xff]
    %v1164 = vld [vmem:[%s0 + $0x310] sm:$0xff]
    %v1165 = vld [vmem:[%s0 + $0x318] sm:$0xff]
    %v1166 = vld [vmem:[%s0 + $0x320] sm:$0xff]
    %v1167 = vld [vmem:[%s0 + $0x328] sm:$0xff]
    %v1168 = vld [vmem:[%s0 + $0x330] sm:$0xff]
    %v1169 = vld [vmem:[%s0 + $0x338] sm:$0xff]
    %v1170 = vld [vmem:[%s0 + $0x340] sm:$0xff]
    %v1171 = vld [vmem:[%s0 + $0x348] sm:$0xff]
    %v1172 = vld [vmem:[%s0 + $0x350] sm:$0xff]
    %v1173 = vld [vmem:[%s0 + $0x358] sm:$0xff]
    %v1174 = vld [vmem:[%s0 + $0x360] sm:$0xff]
    %v1175 = vld [vmem:[%s0 + $0x368] sm:$0xff]
    %v1176 = vld [vmem:[%s0 + $0x370] sm:$0xff]
    %v1177 = vld [vmem:[%s0 + $0x378] sm:$0xff]
    %v1178 = vld [vmem:[%s0 + $0x380] sm:$0xff]
    %v1179 = vld [vmem:[%s0 + $0x388] sm:$0xff]
    %v1180 = vld [vmem:[%s0 + $0x390] sm:$0xff]
    %v1181 = vld [vmem:[%s0 + $0x398] sm:$0xff]
    %v1182 = vld [vmem:[%s0 + $0x3a0] sm:$0xff]
    %v1183 = vld [vmem:[%s0 + $0x3a8] sm:$0xff]
    %v1184 = vld [vmem:[%s0 + $0x3b0] sm:$0xff]
    %v1185 = vld [vmem:[%s0 + $0x3b8] sm:$0xff]
    %v1186 = vld [vmem:[%s0 + $0x3c0] sm:$0xff]
    %v1187 = vld [vmem:[%s0 + $0x3c8] sm:$0xff]
    %v1188 = vld [vmem:[%s0 + $0x3d0] sm:$0xff]
    %v1189 = vld [vmem:[%s0 + $0x3d8] sm:$0xff]
    %v1190 = vld [vmem:[%s0 + $0x3e0] sm:$0xff]
    %v1191 = vld [vmem:[%s0 + $0x3e8] sm:$0xff]
    %v1192 = vld [vmem:[%s0 + $0x3f0] sm:$0xff]
    %v1193 = vld [vmem:[%s0 + $0x3f8] sm:$0xff]
    %v1194 = vld [vmem:[%s0 + $0x400] sm:$0xff]
    %v1195 = vld [vmem:[%s0 + $0x408] sm:$0xff]
    %v1196 = vld [vmem:[%s0 + $0x410] sm:$0xff]
    %v1197 = vld [vmem:[%s0 + $0x418] sm:$0xff]
    %v1198 = vld [vmem:[%s0 + $0x420] sm:$0xff]
    %v1199 = vld [vmem:[%s0 + $0x428] sm:$0xff]
    %v1200 = vld [vmem:[%s0 + $0x430] sm:$0xff]
    %v1201 = vld [vmem:[%s0 + $0x438] sm:$0xff]
    %v1202 = vld [vmem:[%s0 + $0x440] sm:$0xff]
    %v1203 = vld [vmem:[%s0 + $0x448] sm:$0xff]
    %v1204 = vld [vmem:[%s0 + $0x450] sm:$0xff]
    %v1205 = vld [vmem:[%s0 + $0x458] sm:$0xff]
    %v1206 = vld [vmem:[%s0 + $0x460] sm:$0xff]
    %v1207 = vld [vmem:[%s0 + $0x468] sm:$0xff]
    %v1208 = vld [vmem:[%s0 + $0x470] sm:$0xff]
    %v1209 = vld [vmem:[%s0 + $0x478] sm:$0xff]
    %v1210 = vld [vmem:[%s0 + $0x480] sm:$0xff]
    %v1211 = vld [vmem:[%s0 + $0x488] sm:$0xff]
    %v1212 = vld [vmem:[%s0 + $0x490] sm:$0xff]
    %v1213 = vld [vmem:[%s0 + $0x498] sm:$0xff]
    %v1214 = vld [vmem:[%s0 + $0x4a0] sm:$0xff]
    %v1215 = vld [vmem:[%s0 + $0x4a8] sm:$0xff]
    %v1216 = vld [vmem:[%s0 + $0x4b0] sm:$0xff]
    %v1217 = vld [vmem:[%s0 + $0x4b8] sm:$0xff]
    %v1218 = vld [vmem:[%s0 + $0x4c0] sm:$0xff]
    %v1219 = vld [vmem:[%s0 + $0x4c8] sm:$0xff]
    %v1220 = vld [vmem:[%s0 + $0x4d0] sm:$0xff]
    %v1221 = vld [vmem:[%s0 + $0x4d8] sm:$0xff]
    %v1222 = vld [vmem:[%s0 + $0x4e0] sm:$0xff]
    %v1223 = vld [vmem:[%s0 + $0x4e8] sm:$0xff]
    %v1224 = vld [vmem:[%s0 + $0x4f0] sm:$0xff]
    %v1225 = vld [vmem:[%s0 + $0x4f8] sm:$0xff]
    %v1226 = vld [vmem:[%s0 + $0x500] sm:$0xff]
    %v1227 = vld [vmem:[%s0 + $0x508] sm:$0xff]
    %v1228 = vld [vmem:[%s0 + $0x510] sm:$0xff]
    %v1229 = vld [vmem:[%s0 + $0x518] sm:$0xff]
    %v1230 = vld [vmem:[%s0 + $0x520] sm:$0xff]
    %v1231 = vld [vmem:[%s0 + $0x528] sm:$0xff]
    %v1232 = vld [vmem:[%s0 + $0x530] sm:$0xff]
    %v1233 = vld [vmem:[%s0 + $0x538] sm:$0xff]
    %v1234 = vld [vmem:[%s0 + $0x540] sm:$0xff]
    %v1235 = vld [vmem:[%s0 + $0x548] sm:$0xff]
    %v1236 = vld [vmem:[%s0 + $0x550] sm:$0xff]
    %v1237 = vld [vmem:[%s0 + $0x558] sm:$0xff]
    %v1238 = vld [vmem:[%s0 + $0x560] sm:$0xff]
    %v1239 = vld [vmem:[%s0 + $0x568] sm:$0xff]
    %v1240 = vld [vmem:[%s0 + $0x570] sm:$0xff]
    %v1241 = vld [vmem:[%s0 + $0x578] sm:$0xff]
    %v1242 = vld [vmem:[%s0 + $0x580] sm:$0xff]
    %v1243 = vld [vmem:[%s0 + $0x588] sm:$0xff]
    %v1244 = vld [vmem:[%s0 + $0x590] sm:$0xff]
    %v1245 = vld [vmem:[%s0 + $0x598] sm:$0xff]
    %v1246 = vld [vmem:[%s0 + $0x5a0] sm:$0xff]
    %v1247 = vld [vmem:[%s0 + $0x5a8] sm:$0xff]
    %v1248 = vld [vmem:[%s0 + $0x5b0] sm:$0xff]
    %v1249 = vld [vmem:[%s0 + $0x5b8] sm:$0xff]
    %v1250 = vld [vmem:[%s0 + $0x5c0] sm:$0xff]
    %v1251 = vld [vmem:[%s0 + $0x5c8] sm:$0xff]
    %v1252 = vld [vmem:[%s0 + $0x5d0] sm:$0xff]
    %v1253 = vld [vmem:[%s0 + $0x5d8] sm:$0xff]
    %v1254 = vld [vmem:[%s0 + $0x5e0] sm:$0xff]
    %v1255 = vld [vmem:[%s0 + $0x5e8] sm:$0xff]
    %v1256 = vld [vmem:[%s0 + $0x5f0] sm:$0xff]
    %v1257 = vld [vmem:[%s0 + $0x5f8] sm:$0xff]
    %v1258 = vld [vmem:[%s0 + $0x600] sm:$0xff]
    %v1259 = vld [vmem:[%s0 + $0x608] sm:$0xff]
    %v1260 = vld [vmem:[%s0 + $0x610] sm:$0xff]
    %v1261 = vld [vmem:[%s0 + $0x618] sm:$0xff]
    %v1262 = vld [vmem:[%s0 + $0x620] sm:$0xff]
    %v1263 = vld [vmem:[%s0 + $0x628] sm:$0xff]
    %v1264 = vld [vmem:[%s0 + $0x630] sm:$0xff]
    %v1265 = vld [vmem:[%s0 + $0x638] sm:$0xff]
    %v1266 = vld [vmem:[%s0 + $0x640] sm:$0xff]
    %v1267 = vld [vmem:[%s0 + $0x648] sm:$0xff]
    %v1268 = vld [vmem:[%s0 + $0x650] sm:$0xff]
    %v1269 = vld [vmem:[%s0 + $0x658] sm:$0xff]
    %v1270 = vld [vmem:[%s0 + $0x660] sm:$0xff]
    %v1271 = vld [vmem:[%s0 + $0x668] sm:$0xff]
    %v1272 = vld [vmem:[%s0 + $0x670] sm:$0xff]
    %v1273 = vld [vmem:[%s0 + $0x678] sm:$0xff]
    %v1274 = vld [vmem:[%s0 + $0x680] sm:$0xff]
    %v1275 = vld [vmem:[%s0 + $0x688] sm:$0xff]
    %v1276 = vld [vmem:[%s0 + $0x690] sm:$0xff]
    %v1277 = vld [vmem:[%s0 + $0x698] sm:$0xff]
    %v1278 = vld [vmem:[%s0 + $0x6a0] sm:$0xff]
    %v1279 = vld [vmem:[%s0 + $0x6a8] sm:$0xff]
    %v1280 = vld [vmem:[%s0 + $0x6b0] sm:$0xff]
    %v1281 = vld [vmem:[%s0 + $0x6b8] sm:$0xff]
    %v1282 = vld [vmem:[%s0 + $0x6c0] sm:$0xff]
    %v1283 = vld [vmem:[%s0 + $0x6c8] sm:$0xff]
    %v1284 = vld [vmem:[%s0 + $0x6d0] sm:$0xff]
    %v1285 = vld [vmem:[%s0 + $0x6d8] sm:$0xff]
    %v1286 = vld [vmem:[%s0 + $0x6e0] sm:$0xff]
    %v1287 = vld [vmem:[%s0 + $0x6e8] sm:$0xff]
    %v1288 = vld [vmem:[%s0 + $0x6f0] sm:$0xff]
    %v1289 = vld [vmem:[%s0 + $0x6f8] sm:$0xff]
    %v1290 = vld [vmem:[%s0 + $0x700] sm:$0xff]
    %v1291 = vld [vmem:[%s0 + $0x708] sm:$0xff]
    %v1292 = vld [vmem:[%s0 + $0x710] sm:$0xff]
    %v1293 = vld [vmem:[%s0 + $0x718] sm:$0xff]
    %v1294 = vld [vmem:[%s0 + $0x720] sm:$0xff]
    %v1295 = vld [vmem:[%s0 + $0x728] sm:$0xff]
    %v1296 = vld [vmem:[%s0 + $0x730] sm:$0xff]
    %v1297 = vld [vmem:[%s0 + $0x738] sm:$0xff]
    %v1298 = vld [vmem:[%s0 + $0x740] sm:$0xff]
    %v1299 = vld [vmem:[%s0 + $0x748] sm:$0xff]
    %v1300 = vld [vmem:[%s0 + $0x750] sm:$0xff]
    %v1301 = vld [vmem:[%s0 + $0x758] sm:$0xff]
    %v1302 = vld [vmem:[%s0 + $0x760] sm:$0xff]
    %v1303 = vld [vmem:[%s0 + $0x768] sm:$0xff]
    %v1304 = vld [vmem:[%s0 + $0x770] sm:$0xff]
    %v1305 = vld [vmem:[%s0 + $0x778] sm:$0xff]
    %v1306 = vld [vmem:[%s0 + $0x780] sm:$0xff]
    %v1307 = vld [vmem:[%s0 + $0x788] sm:$0xff]
    %v1308 = vld [vmem:[%s0 + $0x790] sm:$0xff]
    %v1309 = vld [vmem:[%s0 + $0x798] sm:$0xff]
    %v1310 = vld [vmem:[%s0 + $0x7a0] sm:$0xff]
    %v1311 = vld [vmem:[%s0 + $0x7a8] sm:$0xff]
    %v1312 = vld [vmem:[%s0 + $0x7b0] sm:$0xff]
    %v1313 = vld [vmem:[%s0 + $0x7b8] sm:$0xff]
    %v1314 = vld [vmem:[%s0 + $0x7c0] sm:$0xff]
    %v1315 = vld [vmem:[%s0 + $0x7c8] sm:$0xff]
    %v1316 = vld [vmem:[%s0 + $0x7d0] sm:$0xff]
    %v1317 = vld [vmem:[%s0 + $0x7d8] sm:$0xff]
    %v1318 = vld [vmem:[%s0 + $0x7e0] sm:$0xff]
    %v1319 = vld [vmem:[%s0 + $0x7e8] sm:$0xff]
    %v1320 = vld [vmem:[%s0 + $0x7f0] sm:$0xff]
    %v1321 = vld [vmem:[%s0 + $0x7f8] sm:$0xff]
    %v1322 = vld [vmem:[%s0 + $0x800] sm:$0xff]
    %v1323 = vld [vmem:[%s0 + $0x808] sm:$0xff]
    %v1324 = vld [vmem:[%s0 + $0x810] sm:$0xff]
    %v1325 = vld [vmem:[%s0 + $0x818] sm:$0xff]
    %v1326 = vld [vmem:[%s0 + $0x820] sm:$0xff]
    %v1327 = vld [vmem:[%s0 + $0x828] sm:$0xff]
    %v1328 = vld [vmem:[%s0 + $0x830] sm:$0xff]
    %v1329 = vld [vmem:[%s0 + $0x838] sm:$0xff]
    %v1330 = vld [vmem:[%s0 + $0x840] sm:$0xff]
    %v1331 = vld [vmem:[%s0 + $0x848] sm:$0xff]
    %v1332 = vld [vmem:[%s0 + $0x850] sm:$0xff]
    %v1333 = vld [vmem:[%s0 + $0x858] sm:$0xff]
    %v1334 = vld [vmem:[%s0 + $0x860] sm:$0xff]
    %v1335 = vld [vmem:[%s0 + $0x868] sm:$0xff]
    %v1336 = vld [vmem:[%s0 + $0x870] sm:$0xff]
    %v1337 = vld [vmem:[%s0 + $0x878] sm:$0xff]
    %v1338 = vld [vmem:[%s0 + $0x880] sm:$0xff]
    %v1339 = vld [vmem:[%s0 + $0x888] sm:$0xff]
    %v1340 = vld [vmem:[%s0 + $0x890] sm:$0xff]
    %v1341 = vld [vmem:[%s0 + $0x898] sm:$0xff]
    %v1342 = vld [vmem:[%s0 + $0x8a0] sm:$0xff]
    %v1343 = vld [vmem:[%s0 + $0x8a8] sm:$0xff]
    %v1344 = vld [vmem:[%s0 + $0x8b0] sm:$0xff]
    %v1345 = vld [vmem:[%s0 + $0x8b8] sm:$0xff]
    %v1346 = vld [vmem:[%s0 + $0x8c0] sm:$0xff]
    %v1347 = vld [vmem:[%s0 + $0x8c8] sm:$0xff]
    %v1348 = vld [vmem:[%s0 + $0x8d0] sm:$0xff]
    %v1349 = vld [vmem:[%s0 + $0x8d8] sm:$0xff]
    %v1350 = vld [vmem:[%s0 + $0x8e0] sm:$0xff]
    %v1351 = vld [vmem:[%s0 + $0x8e8] sm:$0xff]
    %v1352 = vld [vmem:[%s0 + $0x8f0] sm:$0xff]
    %v1353 = vld [vmem:[%s0 + $0x8f8] sm:$0xff]
    %v1354 = vld [vmem:[%s0 + $0x900] sm:$0xff]
    %v1355 = vld [vmem:[%s0 + $0x908] sm:$0xff]
    %v1356 = vld [vmem:[%s0 + $0x910] sm:$0xff]
    %v1357 = vld [vmem:[%s0 + $0x918] sm:$0xff]
    %v1358 = vld [vmem:[%s0 + $0x920] sm:$0xff]
    %v1359 = vld [vmem:[%s0 + $0x928] sm:$0xff]
    %v1360 = vld [vmem:[%s0 + $0x930] sm:$0xff]
    %v1361 = vld [vmem:[%s0 + $0x938] sm:$0xff]
    %v1362 = vld [vmem:[%s0 + $0x940] sm:$0xff]
    %v1363 = vld [vmem:[%s0 + $0x948] sm:$0xff]
    %v1364 = vld [vmem:[%s0 + $0x950] sm:$0xff]
    %v1365 = vld [vmem:[%s0 + $0x958] sm:$0xff]
    %1367 = vset.pattern.permute.xlu0 0
    %1368 = vperm.xlu0 %1367, %v767
    %v1369 = vpop.permute.xlu0 %1368
    %1372 = vset.pattern.permute.xlu0 0
    %1373 = vperm.xlu0 %1372, %v769
    %v1374 = vpop.permute.xlu0 %1373
    %1377 = vset.pattern.permute.xlu0 0
    %1378 = vperm.xlu0 %1377, %v771
    %v1379 = vpop.permute.xlu0 %1378
    %1382 = vset.pattern.permute.xlu0 0
    %1383 = vperm.xlu0 %1382, %v773
    %v1384 = vpop.permute.xlu0 %1383
    %1387 = vset.pattern.permute.xlu0 0
    %1388 = vperm.xlu0 %1387, %v775
    %v1389 = vpop.permute.xlu0 %1388
    %1392 = vset.pattern.permute.xlu0 0
    %1393 = vperm.xlu0 %1392, %v777
    %v1394 = vpop.permute.xlu0 %1393
    %1397 = vset.pattern.permute.xlu0 0
    %1398 = vperm.xlu0 %1397, %v779
    %v1399 = vpop.permute.xlu0 %1398
    %1402 = vset.pattern.permute.xlu0 0
    %1403 = vperm.xlu0 %1402, %v781
    %v1404 = vpop.permute.xlu0 %1403
    %1407 = vset.pattern.permute.xlu0 0
    %1408 = vperm.xlu0 %1407, %v783
    %v1409 = vpop.permute.xlu0 %1408
    %1412 = vset.pattern.permute.xlu0 0
    %1413 = vperm.xlu0 %1412, %v785
    %v1414 = vpop.permute.xlu0 %1413
    %1417 = vset.pattern.permute.xlu0 0
    %1418 = vperm.xlu0 %1417, %v787
    %v1419 = vpop.permute.xlu0 %1418
    %1422 = vset.pattern.permute.xlu0 0
    %1423 = vperm.xlu0 %1422, %v789
    %v1424 = vpop.permute.xlu0 %1423
    %1427 = vset.pattern.permute.xlu0 0
    %1428 = vperm.xlu0 %1427, %v791
    %v1429 = vpop.permute.xlu0 %1428
    %1432 = vset.pattern.permute.xlu0 0
    %1433 = vperm.xlu0 %1432, %v793
    %v1434 = vpop.permute.xlu0 %1433
    %1437 = vset.pattern.permute.xlu0 0
    %1438 = vperm.xlu0 %1437, %v795
    %v1439 = vpop.permute.xlu0 %1438
    %1442 = vset.pattern.permute.xlu0 0
    %1443 = vperm.xlu0 %1442, %v797
    %v1444 = vpop.permute.xlu0 %1443
    %1447 = vset.pattern.permute.xlu0 0
    %1448 = vperm.xlu0 %1447, %v799
    %v1449 = vpop.permute.xlu0 %1448
    %1452 = vset.pattern.permute.xlu0 0
    %1453 = vperm.xlu0 %1452, %v801
    %v1454 = vpop.permute.xlu0 %1453
    %1457 = vset.pattern.permute.xlu0 0
    %1458 = vperm.xlu0 %1457, %v803
    %v1459 = vpop.permute.xlu0 %1458
    %1462 = vset.pattern.permute.xlu0 0
    %1463 = vperm.xlu0 %1462, %v805
    %v1464 = vpop.permute.xlu0 %1463
    %1467 = vset.pattern.permute.xlu0 0
    %1468 = vperm.xlu0 %1467, %v807
    %v1469 = vpop.permute.xlu0 %1468
    %1472 = vset.pattern.permute.xlu0 0
    %1473 = vperm.xlu0 %1472, %v809
    %v1474 = vpop.permute.xlu0 %1473
    %1477 = vset.pattern.permute.xlu0 0
    %1478 = vperm.xlu0 %1477, %v811
    %v1479 = vpop.permute.xlu0 %1478
    %1482 = vset.pattern.permute.xlu0 0
    %1483 = vperm.xlu0 %1482, %v813
    %v1484 = vpop.permute.xlu0 %1483
    %1487 = vset.pattern.permute.xlu0 0
    %1488 = vperm.xlu0 %1487, %v815
    %v1489 = vpop.permute.xlu0 %1488
    %1492 = vset.pattern.permute.xlu0 0
    %1493 = vperm.xlu0 %1492, %v817
    %v1494 = vpop.permute.xlu0 %1493
    %1497 = vset.pattern.permute.xlu0 0
    %1498 = vperm.xlu0 %1497, %v819
    %v1499 = vpop.permute.xlu0 %1498
    %1502 = vset.pattern.permute.xlu0 0
    %1503 = vperm.xlu0 %1502, %v821
    %v1504 = vpop.permute.xlu0 %1503
    %1507 = vset.pattern.permute.xlu0 0
    %1508 = vperm.xlu0 %1507, %v823
    %v1509 = vpop.permute.xlu0 %1508
    %1512 = vset.pattern.permute.xlu0 0
    %1513 = vperm.xlu0 %1512, %v825
    %v1514 = vpop.permute.xlu0 %1513
    %1517 = vset.pattern.permute.xlu0 0
    %1518 = vperm.xlu0 %1517, %v827
    %v1519 = vpop.permute.xlu0 %1518
    %1522 = vset.pattern.permute.xlu0 0
    %1523 = vperm.xlu0 %1522, %v829
    %v1524 = vpop.permute.xlu0 %1523
    %1527 = vset.pattern.permute.xlu0 0
    %1528 = vperm.xlu0 %1527, %v831
    %v1529 = vpop.permute.xlu0 %1528
    %1532 = vset.pattern.permute.xlu0 0
    %1533 = vperm.xlu0 %1532, %v833
    %v1534 = vpop.permute.xlu0 %1533
    %1537 = vset.pattern.permute.xlu0 0
    %1538 = vperm.xlu0 %1537, %v835
    %v1539 = vpop.permute.xlu0 %1538
    %1542 = vset.pattern.permute.xlu0 0
    %1543 = vperm.xlu0 %1542, %v837
    %v1544 = vpop.permute.xlu0 %1543
    %1547 = vset.pattern.permute.xlu0 0
    %1548 = vperm.xlu0 %1547, %v839
    %v1549 = vpop.permute.xlu0 %1548
    %1552 = vset.pattern.permute.xlu0 0
    %1553 = vperm.xlu0 %1552, %v841
    %v1554 = vpop.permute.xlu0 %1553
    %1557 = vset.pattern.permute.xlu0 0
    %1558 = vperm.xlu0 %1557, %v843
    %v1559 = vpop.permute.xlu0 %1558
    %1562 = vset.pattern.permute.xlu0 0
    %1563 = vperm.xlu0 %1562, %v845
    %v1564 = vpop.permute.xlu0 %1563
    %1567 = vset.pattern.permute.xlu0 0
    %1568 = vperm.xlu0 %1567, %v847
    %v1569 = vpop.permute.xlu0 %1568
    %1572 = vset.pattern.permute.xlu0 0
    %1573 = vperm.xlu0 %1572, %v849
    %v1574 = vpop.permute.xlu0 %1573
    %1577 = vset.pattern.permute.xlu0 0
    %1578 = vperm.xlu0 %1577, %v851
    %v1579 = vpop.permute.xlu0 %1578
    %1582 = vset.pattern.permute.xlu0 0
    %1583 = vperm.xlu0 %1582, %v853
    %v1584 = vpop.permute.xlu0 %1583
    %1587 = vset.pattern.permute.xlu0 0
    %1588 = vperm.xlu0 %1587, %v855
    %v1589 = vpop.permute.xlu0 %1588
    %1592 = vset.pattern.permute.xlu0 0
    %1593 = vperm.xlu0 %1592, %v857
    %v1594 = vpop.permute.xlu0 %1593
    %1597 = vset.pattern.permute.xlu0 0
    %1598 = vperm.xlu0 %1597, %v859
    %v1599 = vpop.permute.xlu0 %1598
    %1602 = vset.pattern.permute.xlu0 0
    %1603 = vperm.xlu0 %1602, %v861
    %v1604 = vpop.permute.xlu0 %1603
    %1607 = vset.pattern.permute.xlu0 0
    %1608 = vperm.xlu0 %1607, %v863
    %v1609 = vpop.permute.xlu0 %1608
    %1612 = vset.pattern.permute.xlu0 0
    %1613 = vperm.xlu0 %1612, %v865
    %v1614 = vpop.permute.xlu0 %1613
    %1617 = vset.pattern.permute.xlu0 0
    %1618 = vperm.xlu0 %1617, %v867
    %v1619 = vpop.permute.xlu0 %1618
    %1622 = vset.pattern.permute.xlu0 0
    %1623 = vperm.xlu0 %1622, %v869
    %v1624 = vpop.permute.xlu0 %1623
    %1627 = vset.pattern.permute.xlu0 0
    %1628 = vperm.xlu0 %1627, %v871
    %v1629 = vpop.permute.xlu0 %1628
    %1632 = vset.pattern.permute.xlu0 0
    %1633 = vperm.xlu0 %1632, %v873
    %v1634 = vpop.permute.xlu0 %1633
    %1637 = vset.pattern.permute.xlu0 0
    %1638 = vperm.xlu0 %1637, %v875
    %v1639 = vpop.permute.xlu0 %1638
    %1642 = vset.pattern.permute.xlu0 0
    %1643 = vperm.xlu0 %1642, %v877
    %v1644 = vpop.permute.xlu0 %1643
    %1647 = vset.pattern.permute.xlu0 0
    %1648 = vperm.xlu0 %1647, %v879
    %v1649 = vpop.permute.xlu0 %1648
    %1652 = vset.pattern.permute.xlu0 0
    %1653 = vperm.xlu0 %1652, %v881
    %v1654 = vpop.permute.xlu0 %1653
    %1657 = vset.pattern.permute.xlu0 0
    %1658 = vperm.xlu0 %1657, %v883
    %v1659 = vpop.permute.xlu0 %1658
    %1662 = vset.pattern.permute.xlu0 0
    %1663 = vperm.xlu0 %1662, %v885
    %v1664 = vpop.permute.xlu0 %1663
    %1667 = vset.pattern.permute.xlu0 0
    %1668 = vperm.xlu0 %1667, %v887
    %v1669 = vpop.permute.xlu0 %1668
    %1672 = vset.pattern.permute.xlu0 0
    %1673 = vperm.xlu0 %1672, %v889
    %v1674 = vpop.permute.xlu0 %1673
    %1677 = vset.pattern.permute.xlu0 0
    %1678 = vperm.xlu0 %1677, %v891
    %v1679 = vpop.permute.xlu0 %1678
    %1682 = vset.pattern.permute.xlu0 0
    %1683 = vperm.xlu0 %1682, %v893
    %v1684 = vpop.permute.xlu0 %1683
    %1687 = vset.pattern.permute.xlu0 0
    %1688 = vperm.xlu0 %1687, %v895
    %v1689 = vpop.permute.xlu0 %1688
    %1692 = vset.pattern.permute.xlu0 0
    %1693 = vperm.xlu0 %1692, %v897
    %v1694 = vpop.permute.xlu0 %1693
    %1697 = vset.pattern.permute.xlu0 0
    %1698 = vperm.xlu0 %1697, %v899
    %v1699 = vpop.permute.xlu0 %1698
    %1702 = vset.pattern.permute.xlu0 0
    %1703 = vperm.xlu0 %1702, %v901
    %v1704 = vpop.permute.xlu0 %1703
    %1707 = vset.pattern.permute.xlu0 0
    %1708 = vperm.xlu0 %1707, %v903
    %v1709 = vpop.permute.xlu0 %1708
    %1712 = vset.pattern.permute.xlu0 0
    %1713 = vperm.xlu0 %1712, %v905
    %v1714 = vpop.permute.xlu0 %1713
    %1717 = vset.pattern.permute.xlu0 0
    %1718 = vperm.xlu0 %1717, %v907
    %v1719 = vpop.permute.xlu0 %1718
    %1722 = vset.pattern.permute.xlu0 0
    %1723 = vperm.xlu0 %1722, %v909
    %v1724 = vpop.permute.xlu0 %1723
    %1727 = vset.pattern.permute.xlu0 0
    %1728 = vperm.xlu0 %1727, %v911
    %v1729 = vpop.permute.xlu0 %1728
    %1732 = vset.pattern.permute.xlu0 0
    %1733 = vperm.xlu0 %1732, %v913
    %v1734 = vpop.permute.xlu0 %1733
    %1737 = vset.pattern.permute.xlu0 0
    %1738 = vperm.xlu0 %1737, %v915
    %v1739 = vpop.permute.xlu0 %1738
    %1742 = vset.pattern.permute.xlu0 0
    %1743 = vperm.xlu0 %1742, %v917
    %v1744 = vpop.permute.xlu0 %1743
    %1747 = vset.pattern.permute.xlu0 0
    %1748 = vperm.xlu0 %1747, %v919
    %v1749 = vpop.permute.xlu0 %1748
    %1752 = vset.pattern.permute.xlu0 0
    %1753 = vperm.xlu0 %1752, %v921
    %v1754 = vpop.permute.xlu0 %1753
    %1757 = vset.pattern.permute.xlu0 0
    %1758 = vperm.xlu0 %1757, %v923
    %v1759 = vpop.permute.xlu0 %1758
    %1762 = vset.pattern.permute.xlu0 0
    %1763 = vperm.xlu0 %1762, %v925
    %v1764 = vpop.permute.xlu0 %1763
    %1767 = vset.pattern.permute.xlu0 0
    %1768 = vperm.xlu0 %1767, %v927
    %v1769 = vpop.permute.xlu0 %1768
    %1772 = vset.pattern.permute.xlu0 0
    %1773 = vperm.xlu0 %1772, %v929
    %v1774 = vpop.permute.xlu0 %1773
    %1777 = vset.pattern.permute.xlu0 0
    %1778 = vperm.xlu0 %1777, %v931
    %v1779 = vpop.permute.xlu0 %1778
    %1782 = vset.pattern.permute.xlu0 0
    %1783 = vperm.xlu0 %1782, %v933
    %v1784 = vpop.permute.xlu0 %1783
    %1787 = vset.pattern.permute.xlu0 0
    %1788 = vperm.xlu0 %1787, %v935
    %v1789 = vpop.permute.xlu0 %1788
    %1792 = vset.pattern.permute.xlu0 0
    %1793 = vperm.xlu0 %1792, %v937
    %v1794 = vpop.permute.xlu0 %1793
    %1797 = vset.pattern.permute.xlu0 0
    %1798 = vperm.xlu0 %1797, %v939
    %v1799 = vpop.permute.xlu0 %1798
    %1802 = vset.pattern.permute.xlu0 0
    %1803 = vperm.xlu0 %1802, %v941
    %v1804 = vpop.permute.xlu0 %1803
    %1807 = vset.pattern.permute.xlu0 0
    %1808 = vperm.xlu0 %1807, %v943
    %v1809 = vpop.permute.xlu0 %1808
    %1812 = vset.pattern.permute.xlu0 0
    %1813 = vperm.xlu0 %1812, %v945
    %v1814 = vpop.permute.xlu0 %1813
    %1817 = vset.pattern.permute.xlu0 0
    %1818 = vperm.xlu0 %1817, %v947
    %v1819 = vpop.permute.xlu0 %1818
    %1822 = vset.pattern.permute.xlu0 0
    %1823 = vperm.xlu0 %1822, %v949
    %v1824 = vpop.permute.xlu0 %1823
    %1827 = vset.pattern.permute.xlu0 0
    %1828 = vperm.xlu0 %1827, %v951
    %v1829 = vpop.permute.xlu0 %1828
    %1832 = vset.pattern.permute.xlu0 0
    %1833 = vperm.xlu0 %1832, %v953
    %v1834 = vpop.permute.xlu0 %1833
    %1837 = vset.pattern.permute.xlu0 0
    %1838 = vperm.xlu0 %1837, %v955
    %v1839 = vpop.permute.xlu0 %1838
    %1842 = vset.pattern.permute.xlu0 0
    %1843 = vperm.xlu0 %1842, %v957
    %v1844 = vpop.permute.xlu0 %1843
    %1847 = vset.pattern.permute.xlu0 0
    %1848 = vperm.xlu0 %1847, %v959
    %v1849 = vpop.permute.xlu0 %1848
    %1852 = vset.pattern.permute.xlu0 0
    %1853 = vperm.xlu0 %1852, %v961
    %v1854 = vpop.permute.xlu0 %1853
    %1857 = vset.pattern.permute.xlu0 0
    %1858 = vperm.xlu0 %1857, %v963
    %v1859 = vpop.permute.xlu0 %1858
    %1862 = vset.pattern.permute.xlu0 0
    %1863 = vperm.xlu0 %1862, %v965
    %v1864 = vpop.permute.xlu0 %1863
    %1867 = vset.pattern.permute.xlu0 0
    %1868 = vperm.xlu0 %1867, %v967
    %v1869 = vpop.permute.xlu0 %1868
    %1872 = vset.pattern.permute.xlu0 0
    %1873 = vperm.xlu0 %1872, %v969
    %v1874 = vpop.permute.xlu0 %1873
    %1877 = vset.pattern.permute.xlu0 0
    %1878 = vperm.xlu0 %1877, %v971
    %v1879 = vpop.permute.xlu0 %1878
    %1882 = vset.pattern.permute.xlu0 0
    %1883 = vperm.xlu0 %1882, %v973
    %v1884 = vpop.permute.xlu0 %1883
    %1887 = vset.pattern.permute.xlu0 0
    %1888 = vperm.xlu0 %1887, %v975
    %v1889 = vpop.permute.xlu0 %1888
    %1892 = vset.pattern.permute.xlu0 0
    %1893 = vperm.xlu0 %1892, %v977
    %v1894 = vpop.permute.xlu0 %1893
    %1897 = vset.pattern.permute.xlu0 0
    %1898 = vperm.xlu0 %1897, %v979
    %v1899 = vpop.permute.xlu0 %1898
    %1902 = vset.pattern.permute.xlu0 0
    %1903 = vperm.xlu0 %1902, %v981
    %v1904 = vpop.permute.xlu0 %1903
    %1907 = vset.pattern.permute.xlu0 0
    %1908 = vperm.xlu0 %1907, %v983
    %v1909 = vpop.permute.xlu0 %1908
    %1912 = vset.pattern.permute.xlu0 0
    %1913 = vperm.xlu0 %1912, %v985
    %v1914 = vpop.permute.xlu0 %1913
    %1917 = vset.pattern.permute.xlu0 0
    %1918 = vperm.xlu0 %1917, %v987
    %v1919 = vpop.permute.xlu0 %1918
    %1922 = vset.pattern.permute.xlu0 0
    %1923 = vperm.xlu0 %1922, %v989
    %v1924 = vpop.permute.xlu0 %1923
    %1927 = vset.pattern.permute.xlu0 0
    %1928 = vperm.xlu0 %1927, %v991
    %v1929 = vpop.permute.xlu0 %1928
    %1932 = vset.pattern.permute.xlu0 0
    %1933 = vperm.xlu0 %1932, %v993
    %v1934 = vpop.permute.xlu0 %1933
    %1937 = vset.pattern.permute.xlu0 0
    %1938 = vperm.xlu0 %1937, %v995
    %v1939 = vpop.permute.xlu0 %1938
    %1942 = vset.pattern.permute.xlu0 0
    %1943 = vperm.xlu0 %1942, %v997
    %v1944 = vpop.permute.xlu0 %1943
    %1947 = vset.pattern.permute.xlu0 0
    %1948 = vperm.xlu0 %1947, %v999
    %v1949 = vpop.permute.xlu0 %1948
    %1952 = vset.pattern.permute.xlu0 0
    %1953 = vperm.xlu0 %1952, %v1001
    %v1954 = vpop.permute.xlu0 %1953
    %1957 = vset.pattern.permute.xlu0 0
    %1958 = vperm.xlu0 %1957, %v1003
    %v1959 = vpop.permute.xlu0 %1958
    %1962 = vset.pattern.permute.xlu0 0
    %1963 = vperm.xlu0 %1962, %v1005
    %v1964 = vpop.permute.xlu0 %1963
    %1967 = vset.pattern.permute.xlu0 0
    %1968 = vperm.xlu0 %1967, %v1007
    %v1969 = vpop.permute.xlu0 %1968
    %1972 = vset.pattern.permute.xlu0 0
    %1973 = vperm.xlu0 %1972, %v1009
    %v1974 = vpop.permute.xlu0 %1973
    %1977 = vset.pattern.permute.xlu0 0
    %1978 = vperm.xlu0 %1977, %v1011
    %v1979 = vpop.permute.xlu0 %1978
    %1982 = vset.pattern.permute.xlu0 0
    %1983 = vperm.xlu0 %1982, %v1013
    %v1984 = vpop.permute.xlu0 %1983
    %1987 = vset.pattern.permute.xlu0 0
    %1988 = vperm.xlu0 %1987, %v1015
    %v1989 = vpop.permute.xlu0 %1988
    %1992 = vset.pattern.permute.xlu0 0
    %1993 = vperm.xlu0 %1992, %v1017
    %v1994 = vpop.permute.xlu0 %1993
    %1997 = vset.pattern.permute.xlu0 0
    %1998 = vperm.xlu0 %1997, %v1019
    %v1999 = vpop.permute.xlu0 %1998
    %2002 = vset.pattern.permute.xlu0 0
    %2003 = vperm.xlu0 %2002, %v1021
    %v2004 = vpop.permute.xlu0 %2003
    %2007 = vset.pattern.permute.xlu0 0
    %2008 = vperm.xlu0 %2007, %v1023
    %v2009 = vpop.permute.xlu0 %2008
    %2012 = vset.pattern.permute.xlu0 0
    %2013 = vperm.xlu0 %2012, %v1025
    %v2014 = vpop.permute.xlu0 %2013
    %2017 = vset.pattern.permute.xlu0 0
    %2018 = vperm.xlu0 %2017, %v1027
    %v2019 = vpop.permute.xlu0 %2018
    %2022 = vset.pattern.permute.xlu0 0
    %2023 = vperm.xlu0 %2022, %v1029
    %v2024 = vpop.permute.xlu0 %2023
    %2027 = vset.pattern.permute.xlu0 0
    %2028 = vperm.xlu0 %2027, %v1031
    %v2029 = vpop.permute.xlu0 %2028
    %2032 = vset.pattern.permute.xlu0 0
    %2033 = vperm.xlu0 %2032, %v1033
    %v2034 = vpop.permute.xlu0 %2033
    %2037 = vset.pattern.permute.xlu0 0
    %2038 = vperm.xlu0 %2037, %v1035
    %v2039 = vpop.permute.xlu0 %2038
    %2042 = vset.pattern.permute.xlu0 0
    %2043 = vperm.xlu0 %2042, %v1037
    %v2044 = vpop.permute.xlu0 %2043
    %2047 = vset.pattern.permute.xlu0 0
    %2048 = vperm.xlu0 %2047, %v1039
    %v2049 = vpop.permute.xlu0 %2048
    %2052 = vset.pattern.permute.xlu0 0
    %2053 = vperm.xlu0 %2052, %v1041
    %v2054 = vpop.permute.xlu0 %2053
    %2057 = vset.pattern.permute.xlu0 0
    %2058 = vperm.xlu0 %2057, %v1043
    %v2059 = vpop.permute.xlu0 %2058
    %2062 = vset.pattern.permute.xlu0 0
    %2063 = vperm.xlu0 %2062, %v1045
    %v2064 = vpop.permute.xlu0 %2063
    %2067 = vset.pattern.permute.xlu0 0
    %2068 = vperm.xlu0 %2067, %v1047
    %v2069 = vpop.permute.xlu0 %2068
    %2072 = vset.pattern.permute.xlu0 0
    %2073 = vperm.xlu0 %2072, %v1049
    %v2074 = vpop.permute.xlu0 %2073
    %2077 = vset.pattern.permute.xlu0 0
    %2078 = vperm.xlu0 %2077, %v1051
    %v2079 = vpop.permute.xlu0 %2078
    %2082 = vset.pattern.permute.xlu0 0
    %2083 = vperm.xlu0 %2082, %v1053
    %v2084 = vpop.permute.xlu0 %2083
    %2087 = vset.pattern.permute.xlu0 0
    %2088 = vperm.xlu0 %2087, %v1055
    %v2089 = vpop.permute.xlu0 %2088
    %2092 = vset.pattern.permute.xlu0 0
    %2093 = vperm.xlu0 %2092, %v1057
    %v2094 = vpop.permute.xlu0 %2093
    %2097 = vset.pattern.permute.xlu0 0
    %2098 = vperm.xlu0 %2097, %v1059
    %v2099 = vpop.permute.xlu0 %2098
    %2102 = vset.pattern.permute.xlu0 0
    %2103 = vperm.xlu0 %2102, %v1061
    %v2104 = vpop.permute.xlu0 %2103
    %2107 = vset.pattern.permute.xlu0 0
    %2108 = vperm.xlu0 %2107, %v1063
    %v2109 = vpop.permute.xlu0 %2108
    %2112 = vset.pattern.permute.xlu0 0
    %2113 = vperm.xlu0 %2112, %v1065
    %v2114 = vpop.permute.xlu0 %2113
    %v2116 = vmul.f32 %v1066, %v1369
    %v2117 = vmul.f32 %v1067, %v1369
    %v2118 = vmul.f32 %v1068, %v1374
    %v2119 = vmul.f32 %v1069, %v1374
    %v2120 = vmul.f32 %v1070, %v1379
    %v2121 = vmul.f32 %v1071, %v1379
    %v2122 = vmul.f32 %v1072, %v1384
    %v2123 = vmul.f32 %v1073, %v1384
    %v2124 = vmul.f32 %v1074, %v1389
    %v2125 = vmul.f32 %v1075, %v1389
    %v2126 = vmul.f32 %v1076, %v1394
    %v2127 = vmul.f32 %v1077, %v1394
    %v2128 = vmul.f32 %v1078, %v1399
    %v2129 = vmul.f32 %v1079, %v1399
    %v2130 = vmul.f32 %v1080, %v1404
    %v2131 = vmul.f32 %v1081, %v1404
    %v2132 = vmul.f32 %v1082, %v1409
    %v2133 = vmul.f32 %v1083, %v1409
    %v2134 = vmul.f32 %v1084, %v1414
    %v2135 = vmul.f32 %v1085, %v1414
    %v2136 = vmul.f32 %v1086, %v1419
    %v2137 = vmul.f32 %v1087, %v1419
    %v2138 = vmul.f32 %v1088, %v1424
    %v2139 = vmul.f32 %v1089, %v1424
    %v2140 = vmul.f32 %v1090, %v1429
    %v2141 = vmul.f32 %v1091, %v1429
    %v2142 = vmul.f32 %v1092, %v1434
    %v2143 = vmul.f32 %v1093, %v1434
    %v2144 = vmul.f32 %v1094, %v1439
    %v2145 = vmul.f32 %v1095, %v1439
    %v2146 = vmul.f32 %v1096, %v1444
    %v2147 = vmul.f32 %v1097, %v1444
    %v2148 = vmul.f32 %v1098, %v1449
    %v2149 = vmul.f32 %v1099, %v1449
    %v2150 = vmul.f32 %v1100, %v1454
    %v2151 = vmul.f32 %v1101, %v1454
    %v2152 = vmul.f32 %v1102, %v1459
    %v2153 = vmul.f32 %v1103, %v1459
    %v2154 = vmul.f32 %v1104, %v1464
    %v2155 = vmul.f32 %v1105, %v1464
    %v2156 = vmul.f32 %v1106, %v1469
    %v2157 = vmul.f32 %v1107, %v1469
    %v2158 = vmul.f32 %v1108, %v1474
    %v2159 = vmul.f32 %v1109, %v1474
    %v2160 = vmul.f32 %v1110, %v1479
    %v2161 = vmul.f32 %v1111, %v1479
    %v2162 = vmul.f32 %v1112, %v1484
    %v2163 = vmul.f32 %v1113, %v1484
    %v2164 = vmul.f32 %v1114, %v1489
    %v2165 = vmul.f32 %v1115, %v1489
    %v2166 = vmul.f32 %v1116, %v1494
    %v2167 = vmul.f32 %v1117, %v1494
    %v2168 = vmul.f32 %v1118, %v1499
    %v2169 = vmul.f32 %v1119, %v1499
    %v2170 = vmul.f32 %v1120, %v1504
    %v2171 = vmul.f32 %v1121, %v1504
    %v2172 = vmul.f32 %v1122, %v1509
    %v2173 = vmul.f32 %v1123, %v1509
    %v2174 = vmul.f32 %v1124, %v1514
    %v2175 = vmul.f32 %v1125, %v1514
    %v2176 = vmul.f32 %v1126, %v1519
    %v2177 = vmul.f32 %v1127, %v1519
    %v2178 = vmul.f32 %v1128, %v1524
    %v2179 = vmul.f32 %v1129, %v1524
    %v2180 = vmul.f32 %v1130, %v1529
    %v2181 = vmul.f32 %v1131, %v1529
    %v2182 = vmul.f32 %v1132, %v1534
    %v2183 = vmul.f32 %v1133, %v1534
    %v2184 = vmul.f32 %v1134, %v1539
    %v2185 = vmul.f32 %v1135, %v1539
    %v2186 = vmul.f32 %v1136, %v1544
    %v2187 = vmul.f32 %v1137, %v1544
    %v2188 = vmul.f32 %v1138, %v1549
    %v2189 = vmul.f32 %v1139, %v1549
    %v2190 = vmul.f32 %v1140, %v1554
    %v2191 = vmul.f32 %v1141, %v1554
    %v2192 = vmul.f32 %v1142, %v1559
    %v2193 = vmul.f32 %v1143, %v1559
    %v2194 = vmul.f32 %v1144, %v1564
    %v2195 = vmul.f32 %v1145, %v1564
    %v2196 = vmul.f32 %v1146, %v1569
    %v2197 = vmul.f32 %v1147, %v1569
    %v2198 = vmul.f32 %v1148, %v1574
    %v2199 = vmul.f32 %v1149, %v1574
    %v2200 = vmul.f32 %v1150, %v1579
    %v2201 = vmul.f32 %v1151, %v1579
    %v2202 = vmul.f32 %v1152, %v1584
    %v2203 = vmul.f32 %v1153, %v1584
    %v2204 = vmul.f32 %v1154, %v1589
    %v2205 = vmul.f32 %v1155, %v1589
    %v2206 = vmul.f32 %v1156, %v1594
    %v2207 = vmul.f32 %v1157, %v1594
    %v2208 = vmul.f32 %v1158, %v1599
    %v2209 = vmul.f32 %v1159, %v1599
    %v2210 = vmul.f32 %v1160, %v1604
    %v2211 = vmul.f32 %v1161, %v1604
    %v2212 = vmul.f32 %v1162, %v1609
    %v2213 = vmul.f32 %v1163, %v1609
    %v2214 = vmul.f32 %v1164, %v1614
    %v2215 = vmul.f32 %v1165, %v1614
    %v2216 = vmul.f32 %v1166, %v1619
    %v2217 = vmul.f32 %v1167, %v1619
    %v2218 = vmul.f32 %v1168, %v1624
    %v2219 = vmul.f32 %v1169, %v1624
    %v2220 = vmul.f32 %v1170, %v1629
    %v2221 = vmul.f32 %v1171, %v1629
    %v2222 = vmul.f32 %v1172, %v1634
    %v2223 = vmul.f32 %v1173, %v1634
    %v2224 = vmul.f32 %v1174, %v1639
    %v2225 = vmul.f32 %v1175, %v1639
    %v2226 = vmul.f32 %v1176, %v1644
    %v2227 = vmul.f32 %v1177, %v1644
    %v2228 = vmul.f32 %v1178, %v1649
    %v2229 = vmul.f32 %v1179, %v1649
    %v2230 = vmul.f32 %v1180, %v1654
    %v2231 = vmul.f32 %v1181, %v1654
    %v2232 = vmul.f32 %v1182, %v1659
    %v2233 = vmul.f32 %v1183, %v1659
    %v2234 = vmul.f32 %v1184, %v1664
    %v2235 = vmul.f32 %v1185, %v1664
    %v2236 = vmul.f32 %v1186, %v1669
    %v2237 = vmul.f32 %v1187, %v1669
    %v2238 = vmul.f32 %v1188, %v1674
    %v2239 = vmul.f32 %v1189, %v1674
    %v2240 = vmul.f32 %v1190, %v1679
    %v2241 = vmul.f32 %v1191, %v1679
    %v2242 = vmul.f32 %v1192, %v1684
    %v2243 = vmul.f32 %v1193, %v1684
    %v2244 = vmul.f32 %v1194, %v1689
    %v2245 = vmul.f32 %v1195, %v1689
    %v2246 = vmul.f32 %v1196, %v1694
    %v2247 = vmul.f32 %v1197, %v1694
    %v2248 = vmul.f32 %v1198, %v1699
    %v2249 = vmul.f32 %v1199, %v1699
    %v2250 = vmul.f32 %v1200, %v1704
    %v2251 = vmul.f32 %v1201, %v1704
    %v2252 = vmul.f32 %v1202, %v1709
    %v2253 = vmul.f32 %v1203, %v1709
    %v2254 = vmul.f32 %v1204, %v1714
    %v2255 = vmul.f32 %v1205, %v1714
    %v2256 = vmul.f32 %v1206, %v1719
    %v2257 = vmul.f32 %v1207, %v1719
    %v2258 = vmul.f32 %v1208, %v1724
    %v2259 = vmul.f32 %v1209, %v1724
    %v2260 = vmul.f32 %v1210, %v1729
    %v2261 = vmul.f32 %v1211, %v1729
    %v2262 = vmul.f32 %v1212, %v1734
    %v2263 = vmul.f32 %v1213, %v1734
    %v2264 = vmul.f32 %v1214, %v1739
    %v2265 = vmul.f32 %v1215, %v1739
    %v2266 = vmul.f32 %v1216, %v1744
    %v2267 = vmul.f32 %v1217, %v1744
    %v2268 = vmul.f32 %v1218, %v1749
    %v2269 = vmul.f32 %v1219, %v1749
    %v2270 = vmul.f32 %v1220, %v1754
    %v2271 = vmul.f32 %v1221, %v1754
    %v2272 = vmul.f32 %v1222, %v1759
    %v2273 = vmul.f32 %v1223, %v1759
    %v2274 = vmul.f32 %v1224, %v1764
    %v2275 = vmul.f32 %v1225, %v1764
    %v2276 = vmul.f32 %v1226, %v1769
    %v2277 = vmul.f32 %v1227, %v1769
    %v2278 = vmul.f32 %v1228, %v1774
    %v2279 = vmul.f32 %v1229, %v1774
    %v2280 = vmul.f32 %v1230, %v1779
    %v2281 = vmul.f32 %v1231, %v1779
    %v2282 = vmul.f32 %v1232, %v1784
    %v2283 = vmul.f32 %v1233, %v1784
    %v2284 = vmul.f32 %v1234, %v1789
    %v2285 = vmul.f32 %v1235, %v1789
    %v2286 = vmul.f32 %v1236, %v1794
    %v2287 = vmul.f32 %v1237, %v1794
    %v2288 = vmul.f32 %v1238, %v1799
    %v2289 = vmul.f32 %v1239, %v1799
    %v2290 = vmul.f32 %v1240, %v1804
    %v2291 = vmul.f32 %v1241, %v1804
    %v2292 = vmul.f32 %v1242, %v1809
    %v2293 = vmul.f32 %v1243, %v1809
    %v2294 = vmul.f32 %v1244, %v1814
    %v2295 = vmul.f32 %v1245, %v1814
    %v2296 = vmul.f32 %v1246, %v1819
    %v2297 = vmul.f32 %v1247, %v1819
    %v2298 = vmul.f32 %v1248, %v1824
    %v2299 = vmul.f32 %v1249, %v1824
    %v2300 = vmul.f32 %v1250, %v1829
    %v2301 = vmul.f32 %v1251, %v1829
    %v2302 = vmul.f32 %v1252, %v1834
    %v2303 = vmul.f32 %v1253, %v1834
    %v2304 = vmul.f32 %v1254, %v1839
    %v2305 = vmul.f32 %v1255, %v1839
    %v2306 = vmul.f32 %v1256, %v1844
    %v2307 = vmul.f32 %v1257, %v1844
    %v2308 = vmul.f32 %v1258, %v1849
    %v2309 = vmul.f32 %v1259, %v1849
    %v2310 = vmul.f32 %v1260, %v1854
    %v2311 = vmul.f32 %v1261, %v1854
    %v2312 = vmul.f32 %v1262, %v1859
    %v2313 = vmul.f32 %v1263, %v1859
    %v2314 = vmul.f32 %v1264, %v1864
    %v2315 = vmul.f32 %v1265, %v1864
    %v2316 = vmul.f32 %v1266, %v1869
    %v2317 = vmul.f32 %v1267, %v1869
    %v2318 = vmul.f32 %v1268, %v1874
    %v2319 = vmul.f32 %v1269, %v1874
    %v2320 = vmul.f32 %v1270, %v1879
    %v2321 = vmul.f32 %v1271, %v1879
    %v2322 = vmul.f32 %v1272, %v1884
    %v2323 = vmul.f32 %v1273, %v1884
    %v2324 = vmul.f32 %v1274, %v1889
    %v2325 = vmul.f32 %v1275, %v1889
    %v2326 = vmul.f32 %v1276, %v1894
    %v2327 = vmul.f32 %v1277, %v1894
    %v2328 = vmul.f32 %v1278, %v1899
    %v2329 = vmul.f32 %v1279, %v1899
    %v2330 = vmul.f32 %v1280, %v1904
    %v2331 = vmul.f32 %v1281, %v1904
    %v2332 = vmul.f32 %v1282, %v1909
    %v2333 = vmul.f32 %v1283, %v1909
    %v2334 = vmul.f32 %v1284, %v1914
    %v2335 = vmul.f32 %v1285, %v1914
    %v2336 = vmul.f32 %v1286, %v1919
    %v2337 = vmul.f32 %v1287, %v1919
    %v2338 = vmul.f32 %v1288, %v1924
    %v2339 = vmul.f32 %v1289, %v1924
    %v2340 = vmul.f32 %v1290, %v1929
    %v2341 = vmul.f32 %v1291, %v1929
    %v2342 = vmul.f32 %v1292, %v1934
    %v2343 = vmul.f32 %v1293, %v1934
    %v2344 = vmul.f32 %v1294, %v1939
    %v2345 = vmul.f32 %v1295, %v1939
    %v2346 = vmul.f32 %v1296, %v1944
    %v2347 = vmul.f32 %v1297, %v1944
    %v2348 = vmul.f32 %v1298, %v1949
    %v2349 = vmul.f32 %v1299, %v1949
    %v2350 = vmul.f32 %v1300, %v1954
    %v2351 = vmul.f32 %v1301, %v1954
    %v2352 = vmul.f32 %v1302, %v1959
    %v2353 = vmul.f32 %v1303, %v1959
    %v2354 = vmul.f32 %v1304, %v1964
    %v2355 = vmul.f32 %v1305, %v1964
    %v2356 = vmul.f32 %v1306, %v1969
    %v2357 = vmul.f32 %v1307, %v1969
    %v2358 = vmul.f32 %v1308, %v1974
    %v2359 = vmul.f32 %v1309, %v1974
    %v2360 = vmul.f32 %v1310, %v1979
    %v2361 = vmul.f32 %v1311, %v1979
    %v2362 = vmul.f32 %v1312, %v1984
    %v2363 = vmul.f32 %v1313, %v1984
    %v2364 = vmul.f32 %v1314, %v1989
    %v2365 = vmul.f32 %v1315, %v1989
    %v2366 = vmul.f32 %v1316, %v1994
    %v2367 = vmul.f32 %v1317, %v1994
    %v2368 = vmul.f32 %v1318, %v1999
    %v2369 = vmul.f32 %v1319, %v1999
    %v2370 = vmul.f32 %v1320, %v2004
    %v2371 = vmul.f32 %v1321, %v2004
    %v2372 = vmul.f32 %v1322, %v2009
    %v2373 = vmul.f32 %v1323, %v2009
    %v2374 = vmul.f32 %v1324, %v2014
    %v2375 = vmul.f32 %v1325, %v2014
    %v2376 = vmul.f32 %v1326, %v2019
    %v2377 = vmul.f32 %v1327, %v2019
    %v2378 = vmul.f32 %v1328, %v2024
    %v2379 = vmul.f32 %v1329, %v2024
    %v2380 = vmul.f32 %v1330, %v2029
    %v2381 = vmul.f32 %v1331, %v2029
    %v2382 = vmul.f32 %v1332, %v2034
    %v2383 = vmul.f32 %v1333, %v2034
    %v2384 = vmul.f32 %v1334, %v2039
    %v2385 = vmul.f32 %v1335, %v2039
    %v2386 = vmul.f32 %v1336, %v2044
    %v2387 = vmul.f32 %v1337, %v2044
    %v2388 = vmul.f32 %v1338, %v2049
    %v2389 = vmul.f32 %v1339, %v2049
    %v2390 = vmul.f32 %v1340, %v2054
    %v2391 = vmul.f32 %v1341, %v2054
    %v2392 = vmul.f32 %v1342, %v2059
    %v2393 = vmul.f32 %v1343, %v2059
    %v2394 = vmul.f32 %v1344, %v2064
    %v2395 = vmul.f32 %v1345, %v2064
    %v2396 = vmul.f32 %v1346, %v2069
    %v2397 = vmul.f32 %v1347, %v2069
    %v2398 = vmul.f32 %v1348, %v2074
    %v2399 = vmul.f32 %v1349, %v2074
    %v2400 = vmul.f32 %v1350, %v2079
    %v2401 = vmul.f32 %v1351, %v2079
    %v2402 = vmul.f32 %v1352, %v2084
    %v2403 = vmul.f32 %v1353, %v2084
    %v2404 = vmul.f32 %v1354, %v2089
    %v2405 = vmul.f32 %v1355, %v2089
    %v2406 = vmul.f32 %v1356, %v2094
    %v2407 = vmul.f32 %v1357, %v2094
    %v2408 = vmul.f32 %v1358, %v2099
    %v2409 = vmul.f32 %v1359, %v2099
    %v2410 = vmul.f32 %v1360, %v2104
    %v2411 = vmul.f32 %v1361, %v2104
    %v2412 = vmul.f32 %v1362, %v2109
    %v2413 = vmul.f32 %v1363, %v2109
    %v2414 = vmul.f32 %v1364, %v2114
    %v2415 = vmul.f32 %v1365, %v2114
    %v2416 = vpack.c.bf16 %v2118, %v2116
    %v2417 = vpack.c.bf16 %v2119, %v2117
    %v2418 = vpack.c.bf16 %v2122, %v2120
    %v2419 = vpack.c.bf16 %v2123, %v2121
    %v2420 = vpack.c.bf16 %v2126, %v2124
    %v2421 = vpack.c.bf16 %v2127, %v2125
    %v2422 = vpack.c.bf16 %v2130, %v2128
    %v2423 = vpack.c.bf16 %v2131, %v2129
    %v2424 = vpack.c.bf16 %v2134, %v2132
    %v2425 = vpack.c.bf16 %v2135, %v2133
    %v2426 = vpack.c.bf16 %v2138, %v2136
    %v2427 = vpack.c.bf16 %v2139, %v2137
    %v2428 = vpack.c.bf16 %v2142, %v2140
    %v2429 = vpack.c.bf16 %v2143, %v2141
    %v2430 = vpack.c.bf16 %v2146, %v2144
    %v2431 = vpack.c.bf16 %v2147, %v2145
    %v2432 = vpack.c.bf16 %v2150, %v2148
    %v2433 = vpack.c.bf16 %v2151, %v2149
    %v2434 = vpack.c.bf16 %v2154, %v2152
    %v2435 = vpack.c.bf16 %v2155, %v2153
    %v2436 = vpack.c.bf16 %v2158, %v2156
    %v2437 = vpack.c.bf16 %v2159, %v2157
    %v2438 = vpack.c.bf16 %v2162, %v2160
    %v2439 = vpack.c.bf16 %v2163, %v2161
    %v2440 = vpack.c.bf16 %v2166, %v2164
    %v2441 = vpack.c.bf16 %v2167, %v2165
    %v2442 = vpack.c.bf16 %v2170, %v2168
    %v2443 = vpack.c.bf16 %v2171, %v2169
    %v2444 = vpack.c.bf16 %v2174, %v2172
    %v2445 = vpack.c.bf16 %v2175, %v2173
    %v2446 = vpack.c.bf16 %v2178, %v2176
    %v2447 = vpack.c.bf16 %v2179, %v2177
    %v2448 = vpack.c.bf16 %v2182, %v2180
    %v2449 = vpack.c.bf16 %v2183, %v2181
    %v2450 = vpack.c.bf16 %v2186, %v2184
    %v2451 = vpack.c.bf16 %v2187, %v2185
    %v2452 = vpack.c.bf16 %v2190, %v2188
    %v2453 = vpack.c.bf16 %v2191, %v2189
    %v2454 = vpack.c.bf16 %v2194, %v2192
    %v2455 = vpack.c.bf16 %v2195, %v2193
    %v2456 = vpack.c.bf16 %v2198, %v2196
    %v2457 = vpack.c.bf16 %v2199, %v2197
    %v2458 = vpack.c.bf16 %v2202, %v2200
    %v2459 = vpack.c.bf16 %v2203, %v2201
    %v2460 = vpack.c.bf16 %v2206, %v2204
    %v2461 = vpack.c.bf16 %v2207, %v2205
    %v2462 = vpack.c.bf16 %v2210, %v2208
    %v2463 = vpack.c.bf16 %v2211, %v2209
    %v2464 = vpack.c.bf16 %v2214, %v2212
    %v2465 = vpack.c.bf16 %v2215, %v2213
    %v2466 = vpack.c.bf16 %v2218, %v2216
    %v2467 = vpack.c.bf16 %v2219, %v2217
    %v2468 = vpack.c.bf16 %v2222, %v2220
    %v2469 = vpack.c.bf16 %v2223, %v2221
    %v2470 = vpack.c.bf16 %v2226, %v2224
    %v2471 = vpack.c.bf16 %v2227, %v2225
    %v2472 = vpack.c.bf16 %v2230, %v2228
    %v2473 = vpack.c.bf16 %v2231, %v2229
    %v2474 = vpack.c.bf16 %v2234, %v2232
    %v2475 = vpack.c.bf16 %v2235, %v2233
    %v2476 = vpack.c.bf16 %v2238, %v2236
    %v2477 = vpack.c.bf16 %v2239, %v2237
    %v2478 = vpack.c.bf16 %v2242, %v2240
    %v2479 = vpack.c.bf16 %v2243, %v2241
    %v2480 = vpack.c.bf16 %v2246, %v2244
    %v2481 = vpack.c.bf16 %v2247, %v2245
    %v2482 = vpack.c.bf16 %v2250, %v2248
    %v2483 = vpack.c.bf16 %v2251, %v2249
    %v2484 = vpack.c.bf16 %v2254, %v2252
    %v2485 = vpack.c.bf16 %v2255, %v2253
    %v2486 = vpack.c.bf16 %v2258, %v2256
    %v2487 = vpack.c.bf16 %v2259, %v2257
    %v2488 = vpack.c.bf16 %v2262, %v2260
    %v2489 = vpack.c.bf16 %v2263, %v2261
    %v2490 = vpack.c.bf16 %v2266, %v2264
    %v2491 = vpack.c.bf16 %v2267, %v2265
    %v2492 = vpack.c.bf16 %v2270, %v2268
    %v2493 = vpack.c.bf16 %v2271, %v2269
    %v2494 = vpack.c.bf16 %v2274, %v2272
    %v2495 = vpack.c.bf16 %v2275, %v2273
    %v2496 = vpack.c.bf16 %v2278, %v2276
    %v2497 = vpack.c.bf16 %v2279, %v2277
    %v2498 = vpack.c.bf16 %v2282, %v2280
    %v2499 = vpack.c.bf16 %v2283, %v2281
    %v2500 = vpack.c.bf16 %v2286, %v2284
    %v2501 = vpack.c.bf16 %v2287, %v2285
    %v2502 = vpack.c.bf16 %v2290, %v2288
    %v2503 = vpack.c.bf16 %v2291, %v2289
    %v2504 = vpack.c.bf16 %v2294, %v2292
    %v2505 = vpack.c.bf16 %v2295, %v2293
    %v2506 = vpack.c.bf16 %v2298, %v2296
    %v2507 = vpack.c.bf16 %v2299, %v2297
    %v2508 = vpack.c.bf16 %v2302, %v2300
    %v2509 = vpack.c.bf16 %v2303, %v2301
    %v2510 = vpack.c.bf16 %v2306, %v2304
    %v2511 = vpack.c.bf16 %v2307, %v2305
    %v2512 = vpack.c.bf16 %v2310, %v2308
    %v2513 = vpack.c.bf16 %v2311, %v2309
    %v2514 = vpack.c.bf16 %v2314, %v2312
    %v2515 = vpack.c.bf16 %v2315, %v2313
    %v2516 = vpack.c.bf16 %v2318, %v2316
    %v2517 = vpack.c.bf16 %v2319, %v2317
    %v2518 = vpack.c.bf16 %v2322, %v2320
    %v2519 = vpack.c.bf16 %v2323, %v2321
    %v2520 = vpack.c.bf16 %v2326, %v2324
    %v2521 = vpack.c.bf16 %v2327, %v2325
    %v2522 = vpack.c.bf16 %v2330, %v2328
    %v2523 = vpack.c.bf16 %v2331, %v2329
    %v2524 = vpack.c.bf16 %v2334, %v2332
    %v2525 = vpack.c.bf16 %v2335, %v2333
    %v2526 = vpack.c.bf16 %v2338, %v2336
    %v2527 = vpack.c.bf16 %v2339, %v2337
    %v2528 = vpack.c.bf16 %v2342, %v2340
    %v2529 = vpack.c.bf16 %v2343, %v2341
    %v2530 = vpack.c.bf16 %v2346, %v2344
    %v2531 = vpack.c.bf16 %v2347, %v2345
    %v2532 = vpack.c.bf16 %v2350, %v2348
    %v2533 = vpack.c.bf16 %v2351, %v2349
    %v2534 = vpack.c.bf16 %v2354, %v2352
    %v2535 = vpack.c.bf16 %v2355, %v2353
    %v2536 = vpack.c.bf16 %v2358, %v2356
    %v2537 = vpack.c.bf16 %v2359, %v2357
    %v2538 = vpack.c.bf16 %v2362, %v2360
    %v2539 = vpack.c.bf16 %v2363, %v2361
    %v2540 = vpack.c.bf16 %v2366, %v2364
    %v2541 = vpack.c.bf16 %v2367, %v2365
    %v2542 = vpack.c.bf16 %v2370, %v2368
    %v2543 = vpack.c.bf16 %v2371, %v2369
    %v2544 = vpack.c.bf16 %v2374, %v2372
    %v2545 = vpack.c.bf16 %v2375, %v2373
    %v2546 = vpack.c.bf16 %v2378, %v2376
    %v2547 = vpack.c.bf16 %v2379, %v2377
    %v2548 = vpack.c.bf16 %v2382, %v2380
    %v2549 = vpack.c.bf16 %v2383, %v2381
    %v2550 = vpack.c.bf16 %v2386, %v2384
    %v2551 = vpack.c.bf16 %v2387, %v2385
    %v2552 = vpack.c.bf16 %v2390, %v2388
    %v2553 = vpack.c.bf16 %v2391, %v2389
    %v2554 = vpack.c.bf16 %v2394, %v2392
    %v2555 = vpack.c.bf16 %v2395, %v2393
    %v2556 = vpack.c.bf16 %v2398, %v2396
    %v2557 = vpack.c.bf16 %v2399, %v2397
    %v2558 = vpack.c.bf16 %v2402, %v2400
    %v2559 = vpack.c.bf16 %v2403, %v2401
    %v2560 = vpack.c.bf16 %v2406, %v2404
    %v2561 = vpack.c.bf16 %v2407, %v2405
    %v2562 = vpack.c.bf16 %v2410, %v2408
    %v2563 = vpack.c.bf16 %v2411, %v2409
    %v2564 = vpack.c.bf16 %v2414, %v2412
    %v2565 = vpack.c.bf16 %v2415, %v2413
    %v2566 = vld [vmem:[%s2] sm:$0xff]
    %v2567 = vld [vmem:[%s2 + $0x8] sm:$0xff]
    %v2568 = vld [vmem:[%s2 + $0x10] sm:$0xff]
    %v2569 = vld [vmem:[%s2 + $0x18] sm:$0xff]
    %v2570 = vld [vmem:[%s2 + $0x20] sm:$0xff]
    %v2571 = vld [vmem:[%s2 + $0x28] sm:$0xff]
    %v2572 = vld [vmem:[%s2 + $0x30] sm:$0xff]
    %v2573 = vld [vmem:[%s2 + $0x38] sm:$0xff]
    %v2574 = vld [vmem:[%s2 + $0x40] sm:$0xff]
    %v2575 = vld [vmem:[%s2 + $0x48] sm:$0xff]
    %v2576 = vld [vmem:[%s2 + $0x50] sm:$0xff]
    %v2577 = vld [vmem:[%s2 + $0x58] sm:$0xff]
    %v2578 = vld [vmem:[%s2 + $0x60] sm:$0xff]
    %v2579 = vld [vmem:[%s2 + $0x68] sm:$0xff]
    %v2580 = vld [vmem:[%s2 + $0x70] sm:$0xff]
    %v2581 = vld [vmem:[%s2 + $0x78] sm:$0xff]
    %v2582 = vld [vmem:[%s2 + $0x80] sm:$0xff]
    %v2583 = vld [vmem:[%s2 + $0x88] sm:$0xff]
    %v2584 = vld [vmem:[%s2 + $0x90] sm:$0xff]
    %v2585 = vld [vmem:[%s2 + $0x98] sm:$0xff]
    %v2586 = vld [vmem:[%s2 + $0xa0] sm:$0xff]
    %v2587 = vld [vmem:[%s2 + $0xa8] sm:$0xff]
    %v2588 = vld [vmem:[%s2 + $0xb0] sm:$0xff]
    %v2589 = vld [vmem:[%s2 + $0xb8] sm:$0xff]
    %v2590 = vld [vmem:[%s2 + $0xc0] sm:$0xff]
    %v2591 = vld [vmem:[%s2 + $0xc8] sm:$0xff]
    %v2592 = vld [vmem:[%s2 + $0xd0] sm:$0xff]
    %v2593 = vld [vmem:[%s2 + $0xd8] sm:$0xff]
    %v2594 = vld [vmem:[%s2 + $0xe0] sm:$0xff]
    %v2595 = vld [vmem:[%s2 + $0xe8] sm:$0xff]
    %v2596 = vld [vmem:[%s2 + $0xf0] sm:$0xff]
    %v2597 = vld [vmem:[%s2 + $0xf8] sm:$0xff]
    %v2598 = vld [vmem:[%s2 + $0x100] sm:$0xff]
    %v2599 = vld [vmem:[%s2 + $0x108] sm:$0xff]
    %v2600 = vld [vmem:[%s2 + $0x110] sm:$0xff]
    %v2601 = vld [vmem:[%s2 + $0x118] sm:$0xff]
    %v2602 = vld [vmem:[%s2 + $0x120] sm:$0xff]
    %v2603 = vld [vmem:[%s2 + $0x128] sm:$0xff]
    %v2604 = vld [vmem:[%s2 + $0x130] sm:$0xff]
    %v2605 = vld [vmem:[%s2 + $0x138] sm:$0xff]
    %v2606 = vld [vmem:[%s2 + $0x140] sm:$0xff]
    %v2607 = vld [vmem:[%s2 + $0x148] sm:$0xff]
    %v2608 = vld [vmem:[%s2 + $0x150] sm:$0xff]
    %v2609 = vld [vmem:[%s2 + $0x158] sm:$0xff]
    %v2610 = vld [vmem:[%s2 + $0x160] sm:$0xff]
    %v2611 = vld [vmem:[%s2 + $0x168] sm:$0xff]
    %v2612 = vld [vmem:[%s2 + $0x170] sm:$0xff]
    %v2613 = vld [vmem:[%s2 + $0x178] sm:$0xff]
    %v2614 = vld [vmem:[%s2 + $0x180] sm:$0xff]
    %v2615 = vld [vmem:[%s2 + $0x188] sm:$0xff]
    %v2616 = vld [vmem:[%s2 + $0x190] sm:$0xff]
    %v2617 = vld [vmem:[%s2 + $0x198] sm:$0xff]
    %v2618 = vld [vmem:[%s2 + $0x1a0] sm:$0xff]
    %v2619 = vld [vmem:[%s2 + $0x1a8] sm:$0xff]
    %v2620 = vld [vmem:[%s2 + $0x1b0] sm:$0xff]
    %v2621 = vld [vmem:[%s2 + $0x1b8] sm:$0xff]
    %v2622 = vld [vmem:[%s2 + $0x1c0] sm:$0xff]
    %v2623 = vld [vmem:[%s2 + $0x1c8] sm:$0xff]
    %v2624 = vld [vmem:[%s2 + $0x1d0] sm:$0xff]
    %v2625 = vld [vmem:[%s2 + $0x1d8] sm:$0xff]
    %v2626 = vld [vmem:[%s2 + $0x1e0] sm:$0xff]
    %v2627 = vld [vmem:[%s2 + $0x1e8] sm:$0xff]
    %v2628 = vld [vmem:[%s2 + $0x1f0] sm:$0xff]
    %v2629 = vld [vmem:[%s2 + $0x1f8] sm:$0xff]
    %v2630 = vld [vmem:[%s2 + $0x200] sm:$0xff]
    %v2631 = vld [vmem:[%s2 + $0x208] sm:$0xff]
    %v2632 = vld [vmem:[%s2 + $0x210] sm:$0xff]
    %v2633 = vld [vmem:[%s2 + $0x218] sm:$0xff]
    %v2634 = vld [vmem:[%s2 + $0x220] sm:$0xff]
    %v2635 = vld [vmem:[%s2 + $0x228] sm:$0xff]
    %v2636 = vld [vmem:[%s2 + $0x230] sm:$0xff]
    %v2637 = vld [vmem:[%s2 + $0x238] sm:$0xff]
    %v2638 = vld [vmem:[%s2 + $0x240] sm:$0xff]
    %v2639 = vld [vmem:[%s2 + $0x248] sm:$0xff]
    %v2640 = vld [vmem:[%s2 + $0x250] sm:$0xff]
    %v2641 = vld [vmem:[%s2 + $0x258] sm:$0xff]
    %v2642 = vld [vmem:[%s2 + $0x260] sm:$0xff]
    %v2643 = vld [vmem:[%s2 + $0x268] sm:$0xff]
    %v2644 = vld [vmem:[%s2 + $0x270] sm:$0xff]
    %v2645 = vld [vmem:[%s2 + $0x278] sm:$0xff]
    %v2646 = vld [vmem:[%s2 + $0x280] sm:$0xff]
    %v2647 = vld [vmem:[%s2 + $0x288] sm:$0xff]
    %v2648 = vld [vmem:[%s2 + $0x290] sm:$0xff]
    %v2649 = vld [vmem:[%s2 + $0x298] sm:$0xff]
    %v2650 = vld [vmem:[%s2 + $0x2a0] sm:$0xff]
    %v2651 = vld [vmem:[%s2 + $0x2a8] sm:$0xff]
    %v2652 = vld [vmem:[%s2 + $0x2b0] sm:$0xff]
    %v2653 = vld [vmem:[%s2 + $0x2b8] sm:$0xff]
    %v2654 = vld [vmem:[%s2 + $0x2c0] sm:$0xff]
    %v2655 = vld [vmem:[%s2 + $0x2c8] sm:$0xff]
    %v2656 = vld [vmem:[%s2 + $0x2d0] sm:$0xff]
    %v2657 = vld [vmem:[%s2 + $0x2d8] sm:$0xff]
    %v2658 = vld [vmem:[%s2 + $0x2e0] sm:$0xff]
    %v2659 = vld [vmem:[%s2 + $0x2e8] sm:$0xff]
    %v2660 = vld [vmem:[%s2 + $0x2f0] sm:$0xff]
    %v2661 = vld [vmem:[%s2 + $0x2f8] sm:$0xff]
    %v2662 = vld [vmem:[%s2 + $0x300] sm:$0xff]
    %v2663 = vld [vmem:[%s2 + $0x308] sm:$0xff]
    %v2664 = vld [vmem:[%s2 + $0x310] sm:$0xff]
    %v2665 = vld [vmem:[%s2 + $0x318] sm:$0xff]
    %v2666 = vld [vmem:[%s2 + $0x320] sm:$0xff]
    %v2667 = vld [vmem:[%s2 + $0x328] sm:$0xff]
    %v2668 = vld [vmem:[%s2 + $0x330] sm:$0xff]
    %v2669 = vld [vmem:[%s2 + $0x338] sm:$0xff]
    %v2670 = vld [vmem:[%s2 + $0x340] sm:$0xff]
    %v2671 = vld [vmem:[%s2 + $0x348] sm:$0xff]
    %v2672 = vld [vmem:[%s2 + $0x350] sm:$0xff]
    %v2673 = vld [vmem:[%s2 + $0x358] sm:$0xff]
    %v2674 = vld [vmem:[%s2 + $0x360] sm:$0xff]
    %v2675 = vld [vmem:[%s2 + $0x368] sm:$0xff]
    %v2676 = vld [vmem:[%s2 + $0x370] sm:$0xff]
    %v2677 = vld [vmem:[%s2 + $0x378] sm:$0xff]
    %v2678 = vld [vmem:[%s2 + $0x380] sm:$0xff]
    %v2679 = vld [vmem:[%s2 + $0x388] sm:$0xff]
    %v2680 = vld [vmem:[%s2 + $0x390] sm:$0xff]
    %v2681 = vld [vmem:[%s2 + $0x398] sm:$0xff]
    %v2682 = vld [vmem:[%s2 + $0x3a0] sm:$0xff]
    %v2683 = vld [vmem:[%s2 + $0x3a8] sm:$0xff]
    %v2684 = vld [vmem:[%s2 + $0x3b0] sm:$0xff]
    %v2685 = vld [vmem:[%s2 + $0x3b8] sm:$0xff]
    %v2686 = vld [vmem:[%s2 + $0x3c0] sm:$0xff]
    %v2687 = vld [vmem:[%s2 + $0x3c8] sm:$0xff]
    %v2688 = vld [vmem:[%s2 + $0x3d0] sm:$0xff]
    %v2689 = vld [vmem:[%s2 + $0x3d8] sm:$0xff]
    %v2690 = vld [vmem:[%s2 + $0x3e0] sm:$0xff]
    %v2691 = vld [vmem:[%s2 + $0x3e8] sm:$0xff]
    %v2692 = vld [vmem:[%s2 + $0x3f0] sm:$0xff]
    %v2693 = vld [vmem:[%s2 + $0x3f8] sm:$0xff]
    %v2694 = vld [vmem:[%s2 + $0x400] sm:$0xff]
    %v2695 = vld [vmem:[%s2 + $0x408] sm:$0xff]
    %v2696 = vld [vmem:[%s2 + $0x410] sm:$0xff]
    %v2697 = vld [vmem:[%s2 + $0x418] sm:$0xff]
    %v2698 = vld [vmem:[%s2 + $0x420] sm:$0xff]
    %v2699 = vld [vmem:[%s2 + $0x428] sm:$0xff]
    %v2700 = vld [vmem:[%s2 + $0x430] sm:$0xff]
    %v2701 = vld [vmem:[%s2 + $0x438] sm:$0xff]
    %v2702 = vld [vmem:[%s2 + $0x440] sm:$0xff]
    %v2703 = vld [vmem:[%s2 + $0x448] sm:$0xff]
    %v2704 = vld [vmem:[%s2 + $0x450] sm:$0xff]
    %v2705 = vld [vmem:[%s2 + $0x458] sm:$0xff]
    %v2706 = vld [vmem:[%s2 + $0x460] sm:$0xff]
    %v2707 = vld [vmem:[%s2 + $0x468] sm:$0xff]
    %v2708 = vld [vmem:[%s2 + $0x470] sm:$0xff]
    %v2709 = vld [vmem:[%s2 + $0x478] sm:$0xff]
    %v2710 = vld [vmem:[%s2 + $0x480] sm:$0xff]
    %v2711 = vld [vmem:[%s2 + $0x488] sm:$0xff]
    %v2712 = vld [vmem:[%s2 + $0x490] sm:$0xff]
    %v2713 = vld [vmem:[%s2 + $0x498] sm:$0xff]
    %v2714 = vld [vmem:[%s2 + $0x4a0] sm:$0xff]
    %v2715 = vld [vmem:[%s2 + $0x4a8] sm:$0xff]
    %v2716 = vld [vmem:[%s2 + $0x4b0] sm:$0xff]
    %v2717 = vld [vmem:[%s2 + $0x4b8] sm:$0xff]
    %v2718 = vld [vmem:[%s2 + $0x4c0] sm:$0xff]
    %v2719 = vld [vmem:[%s2 + $0x4c8] sm:$0xff]
    %v2720 = vld [vmem:[%s2 + $0x4d0] sm:$0xff]
    %v2721 = vld [vmem:[%s2 + $0x4d8] sm:$0xff]
    %v2722 = vld [vmem:[%s2 + $0x4e0] sm:$0xff]
    %v2723 = vld [vmem:[%s2 + $0x4e8] sm:$0xff]
    %v2724 = vld [vmem:[%s2 + $0x4f0] sm:$0xff]
    %v2725 = vld [vmem:[%s2 + $0x4f8] sm:$0xff]
    %v2726 = vld [vmem:[%s2 + $0x500] sm:$0xff]
    %v2727 = vld [vmem:[%s2 + $0x508] sm:$0xff]
    %v2728 = vld [vmem:[%s2 + $0x510] sm:$0xff]
    %v2729 = vld [vmem:[%s2 + $0x518] sm:$0xff]
    %v2730 = vld [vmem:[%s2 + $0x520] sm:$0xff]
    %v2731 = vld [vmem:[%s2 + $0x528] sm:$0xff]
    %v2732 = vld [vmem:[%s2 + $0x530] sm:$0xff]
    %v2733 = vld [vmem:[%s2 + $0x538] sm:$0xff]
    %v2734 = vld [vmem:[%s2 + $0x540] sm:$0xff]
    %v2735 = vld [vmem:[%s2 + $0x548] sm:$0xff]
    %v2736 = vld [vmem:[%s2 + $0x550] sm:$0xff]
    %v2737 = vld [vmem:[%s2 + $0x558] sm:$0xff]
    %v2738 = vld [vmem:[%s2 + $0x560] sm:$0xff]
    %v2739 = vld [vmem:[%s2 + $0x568] sm:$0xff]
    %v2740 = vld [vmem:[%s2 + $0x570] sm:$0xff]
    %v2741 = vld [vmem:[%s2 + $0x578] sm:$0xff]
    %v2742 = vld [vmem:[%s2 + $0x580] sm:$0xff]
    %v2743 = vld [vmem:[%s2 + $0x588] sm:$0xff]
    %v2744 = vld [vmem:[%s2 + $0x590] sm:$0xff]
    %v2745 = vld [vmem:[%s2 + $0x598] sm:$0xff]
    %v2746 = vld [vmem:[%s2 + $0x5a0] sm:$0xff]
    %v2747 = vld [vmem:[%s2 + $0x5a8] sm:$0xff]
    %v2748 = vld [vmem:[%s2 + $0x5b0] sm:$0xff]
    %v2749 = vld [vmem:[%s2 + $0x5b8] sm:$0xff]
    %v2750 = vld [vmem:[%s2 + $0x5c0] sm:$0xff]
    %v2751 = vld [vmem:[%s2 + $0x5c8] sm:$0xff]
    %v2752 = vld [vmem:[%s2 + $0x5d0] sm:$0xff]
    %v2753 = vld [vmem:[%s2 + $0x5d8] sm:$0xff]
    %v2754 = vld [vmem:[%s2 + $0x5e0] sm:$0xff]
    %v2755 = vld [vmem:[%s2 + $0x5e8] sm:$0xff]
    %v2756 = vld [vmem:[%s2 + $0x5f0] sm:$0xff]
    %v2757 = vld [vmem:[%s2 + $0x5f8] sm:$0xff]
    %v2758 = vld [vmem:[%s2 + $0x600] sm:$0xff]
    %v2759 = vld [vmem:[%s2 + $0x608] sm:$0xff]
    %v2760 = vld [vmem:[%s2 + $0x610] sm:$0xff]
    %v2761 = vld [vmem:[%s2 + $0x618] sm:$0xff]
    %v2762 = vld [vmem:[%s2 + $0x620] sm:$0xff]
    %v2763 = vld [vmem:[%s2 + $0x628] sm:$0xff]
    %v2764 = vld [vmem:[%s2 + $0x630] sm:$0xff]
    %v2765 = vld [vmem:[%s2 + $0x638] sm:$0xff]
    %v2766 = vld [vmem:[%s2 + $0x640] sm:$0xff]
    %v2767 = vld [vmem:[%s2 + $0x648] sm:$0xff]
    %v2768 = vld [vmem:[%s2 + $0x650] sm:$0xff]
    %v2769 = vld [vmem:[%s2 + $0x658] sm:$0xff]
    %v2770 = vld [vmem:[%s2 + $0x660] sm:$0xff]
    %v2771 = vld [vmem:[%s2 + $0x668] sm:$0xff]
    %v2772 = vld [vmem:[%s2 + $0x670] sm:$0xff]
    %v2773 = vld [vmem:[%s2 + $0x678] sm:$0xff]
    %v2774 = vld [vmem:[%s2 + $0x680] sm:$0xff]
    %v2775 = vld [vmem:[%s2 + $0x688] sm:$0xff]
    %v2776 = vld [vmem:[%s2 + $0x690] sm:$0xff]
    %v2777 = vld [vmem:[%s2 + $0x698] sm:$0xff]
    %v2778 = vld [vmem:[%s2 + $0x6a0] sm:$0xff]
    %v2779 = vld [vmem:[%s2 + $0x6a8] sm:$0xff]
    %v2780 = vld [vmem:[%s2 + $0x6b0] sm:$0xff]
    %v2781 = vld [vmem:[%s2 + $0x6b8] sm:$0xff]
    %v2782 = vld [vmem:[%s2 + $0x6c0] sm:$0xff]
    %v2783 = vld [vmem:[%s2 + $0x6c8] sm:$0xff]
    %v2784 = vld [vmem:[%s2 + $0x6d0] sm:$0xff]
    %v2785 = vld [vmem:[%s2 + $0x6d8] sm:$0xff]
    %v2786 = vld [vmem:[%s2 + $0x6e0] sm:$0xff]
    %v2787 = vld [vmem:[%s2 + $0x6e8] sm:$0xff]
    %v2788 = vld [vmem:[%s2 + $0x6f0] sm:$0xff]
    %v2789 = vld [vmem:[%s2 + $0x6f8] sm:$0xff]
    %v2790 = vld [vmem:[%s2 + $0x700] sm:$0xff]
    %v2791 = vld [vmem:[%s2 + $0x708] sm:$0xff]
    %v2792 = vld [vmem:[%s2 + $0x710] sm:$0xff]
    %v2793 = vld [vmem:[%s2 + $0x718] sm:$0xff]
    %v2794 = vld [vmem:[%s2 + $0x720] sm:$0xff]
    %v2795 = vld [vmem:[%s2 + $0x728] sm:$0xff]
    %v2796 = vld [vmem:[%s2 + $0x730] sm:$0xff]
    %v2797 = vld [vmem:[%s2 + $0x738] sm:$0xff]
    %v2798 = vld [vmem:[%s2 + $0x740] sm:$0xff]
    %v2799 = vld [vmem:[%s2 + $0x748] sm:$0xff]
    %v2800 = vld [vmem:[%s2 + $0x750] sm:$0xff]
    %v2801 = vld [vmem:[%s2 + $0x758] sm:$0xff]
    %v2802 = vld [vmem:[%s2 + $0x760] sm:$0xff]
    %v2803 = vld [vmem:[%s2 + $0x768] sm:$0xff]
    %v2804 = vld [vmem:[%s2 + $0x770] sm:$0xff]
    %v2805 = vld [vmem:[%s2 + $0x778] sm:$0xff]
    %v2806 = vld [vmem:[%s2 + $0x780] sm:$0xff]
    %v2807 = vld [vmem:[%s2 + $0x788] sm:$0xff]
    %v2808 = vld [vmem:[%s2 + $0x790] sm:$0xff]
    %v2809 = vld [vmem:[%s2 + $0x798] sm:$0xff]
    %v2810 = vld [vmem:[%s2 + $0x7a0] sm:$0xff]
    %v2811 = vld [vmem:[%s2 + $0x7a8] sm:$0xff]
    %v2812 = vld [vmem:[%s2 + $0x7b0] sm:$0xff]
    %v2813 = vld [vmem:[%s2 + $0x7b8] sm:$0xff]
    %v2814 = vld [vmem:[%s2 + $0x7c0] sm:$0xff]
    %v2815 = vld [vmem:[%s2 + $0x7c8] sm:$0xff]
    %v2816 = vpack.c.bf16 %v2576, %v2566
    %v2817 = vpack.c.bf16 %v2577, %v2567
    %v2818 = vpack.c.bf16 %v2578, %v2568
    %v2819 = vpack.c.bf16 %v2579, %v2569
    %v2820 = vpack.c.bf16 %v2580, %v2570
    %v2821 = vpack.c.bf16 %v2581, %v2571
    %v2822 = vpack.c.bf16 %v2582, %v2572
    %v2823 = vpack.c.bf16 %v2583, %v2573
    %v2824 = vpack.c.bf16 %v2584, %v2574
    %v2825 = vpack.c.bf16 %v2585, %v2575
    %v2826 = vpack.c.bf16 %v2596, %v2586
    %v2827 = vpack.c.bf16 %v2597, %v2587
    %v2828 = vpack.c.bf16 %v2598, %v2588
    %v2829 = vpack.c.bf16 %v2599, %v2589
    %v2830 = vpack.c.bf16 %v2600, %v2590
    %v2831 = vpack.c.bf16 %v2601, %v2591
    %v2832 = vpack.c.bf16 %v2602, %v2592
    %v2833 = vpack.c.bf16 %v2603, %v2593
    %v2834 = vpack.c.bf16 %v2604, %v2594
    %v2835 = vpack.c.bf16 %v2605, %v2595
    %v2836 = vpack.c.bf16 %v2616, %v2606
    %v2837 = vpack.c.bf16 %v2617, %v2607
    %v2838 = vpack.c.bf16 %v2618, %v2608
    %v2839 = vpack.c.bf16 %v2619, %v2609
    %v2840 = vpack.c.bf16 %v2620, %v2610
    %v2841 = vpack.c.bf16 %v2621, %v2611
    %v2842 = vpack.c.bf16 %v2622, %v2612
    %v2843 = vpack.c.bf16 %v2623, %v2613
    %v2844 = vpack.c.bf16 %v2624, %v2614
    %v2845 = vpack.c.bf16 %v2625, %v2615
    %v2846 = vpack.c.bf16 %v2636, %v2626
    %v2847 = vpack.c.bf16 %v2637, %v2627
    %v2848 = vpack.c.bf16 %v2638, %v2628
    %v2849 = vpack.c.bf16 %v2639, %v2629
    %v2850 = vpack.c.bf16 %v2640, %v2630
    %v2851 = vpack.c.bf16 %v2641, %v2631
    %v2852 = vpack.c.bf16 %v2642, %v2632
    %v2853 = vpack.c.bf16 %v2643, %v2633
    %v2854 = vpack.c.bf16 %v2644, %v2634
    %v2855 = vpack.c.bf16 %v2645, %v2635
    %v2856 = vpack.c.bf16 %v2656, %v2646
    %v2857 = vpack.c.bf16 %v2657, %v2647
    %v2858 = vpack.c.bf16 %v2658, %v2648
    %v2859 = vpack.c.bf16 %v2659, %v2649
    %v2860 = vpack.c.bf16 %v2660, %v2650
    %v2861 = vpack.c.bf16 %v2661, %v2651
    %v2862 = vpack.c.bf16 %v2662, %v2652
    %v2863 = vpack.c.bf16 %v2663, %v2653
    %v2864 = vpack.c.bf16 %v2664, %v2654
    %v2865 = vpack.c.bf16 %v2665, %v2655
    %v2866 = vpack.c.bf16 %v2676, %v2666
    %v2867 = vpack.c.bf16 %v2677, %v2667
    %v2868 = vpack.c.bf16 %v2678, %v2668
    %v2869 = vpack.c.bf16 %v2679, %v2669
    %v2870 = vpack.c.bf16 %v2680, %v2670
    %v2871 = vpack.c.bf16 %v2681, %v2671
    %v2872 = vpack.c.bf16 %v2682, %v2672
    %v2873 = vpack.c.bf16 %v2683, %v2673
    %v2874 = vpack.c.bf16 %v2684, %v2674
    %v2875 = vpack.c.bf16 %v2685, %v2675
    %v2876 = vpack.c.bf16 %v2696, %v2686
    %v2877 = vpack.c.bf16 %v2697, %v2687
    %v2878 = vpack.c.bf16 %v2698, %v2688
    %v2879 = vpack.c.bf16 %v2699, %v2689
    %v2880 = vpack.c.bf16 %v2700, %v2690
    %v2881 = vpack.c.bf16 %v2701, %v2691
    %v2882 = vpack.c.bf16 %v2702, %v2692
    %v2883 = vpack.c.bf16 %v2703, %v2693
    %v2884 = vpack.c.bf16 %v2704, %v2694
    %v2885 = vpack.c.bf16 %v2705, %v2695
    %v2886 = vpack.c.bf16 %v2716, %v2706
    %v2887 = vpack.c.bf16 %v2717, %v2707
    %v2888 = vpack.c.bf16 %v2718, %v2708
    %v2889 = vpack.c.bf16 %v2719, %v2709
    %v2890 = vpack.c.bf16 %v2720, %v2710
    %v2891 = vpack.c.bf16 %v2721, %v2711
    %v2892 = vpack.c.bf16 %v2722, %v2712
    %v2893 = vpack.c.bf16 %v2723, %v2713
    %v2894 = vpack.c.bf16 %v2724, %v2714
    %v2895 = vpack.c.bf16 %v2725, %v2715
    %v2896 = vpack.c.bf16 %v2736, %v2726
    %v2897 = vpack.c.bf16 %v2737, %v2727
    %v2898 = vpack.c.bf16 %v2738, %v2728
    %v2899 = vpack.c.bf16 %v2739, %v2729
    %v2900 = vpack.c.bf16 %v2740, %v2730
    %v2901 = vpack.c.bf16 %v2741, %v2731
    %v2902 = vpack.c.bf16 %v2742, %v2732
    %v2903 = vpack.c.bf16 %v2743, %v2733
    %v2904 = vpack.c.bf16 %v2744, %v2734
    %v2905 = vpack.c.bf16 %v2745, %v2735
    %v2906 = vpack.c.bf16 %v2756, %v2746
    %v2907 = vpack.c.bf16 %v2757, %v2747
    %v2908 = vpack.c.bf16 %v2758, %v2748
    %v2909 = vpack.c.bf16 %v2759, %v2749
    %v2910 = vpack.c.bf16 %v2760, %v2750
    %v2911 = vpack.c.bf16 %v2761, %v2751
    %v2912 = vpack.c.bf16 %v2762, %v2752
    %v2913 = vpack.c.bf16 %v2763, %v2753
    %v2914 = vpack.c.bf16 %v2764, %v2754
    %v2915 = vpack.c.bf16 %v2765, %v2755
    %v2916 = vpack.c.bf16 %v2776, %v2766
    %v2917 = vpack.c.bf16 %v2777, %v2767
    %v2918 = vpack.c.bf16 %v2778, %v2768
    %v2919 = vpack.c.bf16 %v2779, %v2769
    %v2920 = vpack.c.bf16 %v2780, %v2770
    %v2921 = vpack.c.bf16 %v2781, %v2771
    %v2922 = vpack.c.bf16 %v2782, %v2772
    %v2923 = vpack.c.bf16 %v2783, %v2773
    %v2924 = vpack.c.bf16 %v2784, %v2774
    %v2925 = vpack.c.bf16 %v2785, %v2775
    %v2926 = vpack.c.bf16 %v2796, %v2786
    %v2927 = vpack.c.bf16 %v2797, %v2787
    %v2928 = vpack.c.bf16 %v2798, %v2788
    %v2929 = vpack.c.bf16 %v2799, %v2789
    %v2930 = vpack.c.bf16 %v2800, %v2790
    %v2931 = vpack.c.bf16 %v2801, %v2791
    %v2932 = vpack.c.bf16 %v2802, %v2792
    %v2933 = vpack.c.bf16 %v2803, %v2793
    %v2934 = vpack.c.bf16 %v2804, %v2794
    %v2935 = vpack.c.bf16 %v2805, %v2795
    %v2936 = vpack.c.bf16 %v2806, %v2806
    %v2937 = vpack.c.bf16 %v2807, %v2807
    %v2938 = vpack.c.bf16 %v2808, %v2808
    %v2939 = vpack.c.bf16 %v2809, %v2809
    %v2940 = vpack.c.bf16 %v2810, %v2810
    %v2941 = vpack.c.bf16 %v2811, %v2811
    %v2942 = vpack.c.bf16 %v2812, %v2812
    %v2943 = vpack.c.bf16 %v2813, %v2813
    %v2944 = vpack.c.bf16 %v2814, %v2814
    %v2945 = vpack.c.bf16 %v2815, %v2815
    %vm2946 = vcmask 392192
    %v2948 = vsel %vm2946, %v2825, 0
    %v2951 = vsel %vm2946, %v2835, 0
    %v2954 = vsel %vm2946, %v2845, 0
    %v2957 = vsel %vm2946, %v2855, 0
    %v2960 = vsel %vm2946, %v2865, 0
    %v2963 = vsel %vm2946, %v2875, 0
    %v2966 = vsel %vm2946, %v2885, 0
    %v2969 = vsel %vm2946, %v2895, 0
    %v2972 = vsel %vm2946, %v2905, 0
    %v2975 = vsel %vm2946, %v2915, 0
    %v2978 = vsel %vm2946, %v2925, 0
    %v2981 = vsel %vm2946, %v2935, 0
    %v2984 = vsel %vm2946, %v2945, 0
    %2986 = vmatprep.subr.bf16.mxu0 %v2417
    %2987 = vmatpush1.bf16.msra.mxu0 %v2416
    %2988 = vmatprep.subr.bf16.mxu0 %v2419
    %2989 = vmatpush1.bf16.msra.mxu0 %v2418
    %2990 = vmatprep.subr.bf16.mxu0 %v2421
    %2991 = vmatpush1.bf16.msra.mxu0 %v2420
    %2992 = vmatprep.subr.bf16.mxu0 %v2423
    %2993 = vmatpush1.bf16.msra.mxu0 %v2422
    %2994 = vmatprep.subr.bf16.mxu0 %v2425
    %2995 = vmatpush1.bf16.msra.mxu0 %v2424
    %2996 = vmatprep.subr.bf16.mxu0 %v2427
    %2997 = vmatpush1.bf16.msra.mxu0 %v2426
    %2998 = vmatprep.subr.bf16.mxu0 %v2429
    %2999 = vmatpush1.bf16.msra.mxu0 %v2428
    %3000 = vmatprep.subr.bf16.mxu0 %v2431
    %3001 = vmatpush1.bf16.msra.mxu0 %v2430
    %3002 = vmatprep.subr.bf16.mxu0 %v2433
    %3003 = vmatpush1.bf16.msra.mxu0 %v2432
    %3004 = vmatprep.subr.bf16.mxu0 %v2435
    %3005 = vmatpush1.bf16.msra.mxu0 %v2434
    %3006 = vmatprep.subr.bf16.mxu0 %v2437
    %3007 = vmatpush1.bf16.msra.mxu0 %v2436
    %3008 = vmatprep.subr.bf16.mxu0 %v2439
    %3009 = vmatpush1.bf16.msra.mxu0 %v2438
    %3010 = vmatprep.subr.bf16.mxu0 %v2441
    %3011 = vmatpush1.bf16.msra.mxu0 %v2440
    %3012 = vmatprep.subr.bf16.mxu0 %v2443
    %3013 = vmatpush1.bf16.msra.mxu0 %v2442
    %3014 = vmatprep.subr.bf16.mxu0 %v2445
    %3015 = vmatpush1.bf16.msra.mxu0 %v2444
    %3016 = vmatprep.subr.bf16.mxu0 %v2447
    %3017 = vmatpush1.bf16.msra.mxu0 %v2446
    %3018 = vmatprep.mubr.bf16.mxu0 %v2817
    %3019 = vmatmul.mubr.bf16.gmra.mrb[0].mxu0 %v2816
    %v3020 = vpop.f32.mrb[0].mxu0
    %v3021 = vadd.f32 0.0, %v3020
    %v3022 = vpop.f32.mrb[0].mxu0
    %v3023 = vadd.f32 0.0, %v3022
    %v3024 = vpop.f32.mrb[0].mxu0
    %v3025 = vadd.f32 0.0, %v3024
    %v3026 = vpop.f32.mrb[0].mxu0
    %v3027 = vadd.f32 0.0, %v3026
    %3028 = vmatprep.mubr.bf16.mxu0 %v2827
    %3029 = vmatmul.mubr.bf16.gmra.mrb[0].mxu0 %v2826
    %v3030 = vpop.f32.mrb[0].mxu0
    %v3031 = vadd.f32 0.0, %v3030
    %v3032 = vpop.f32.mrb[0].mxu0
    %v3033 = vadd.f32 0.0, %v3032
    %v3034 = vpop.f32.mrb[0].mxu0
    %v3035 = vadd.f32 0.0, %v3034
    %v3036 = vpop.f32.mrb[0].mxu0
    %v3037 = vadd.f32 0.0, %v3036
    %3038 = vmatprep.mubr.bf16.mxu0 %v2837
    %3039 = vmatmul.mubr.bf16.gmra.mrb[0].mxu0 %v2836
    %v3040 = vpop.f32.mrb[0].mxu0
    %v3041 = vadd.f32 0.0, %v3040
    %v3042 = vpop.f32.mrb[0].mxu0
    %v3043 = vadd.f32 0.0, %v3042
    %v3044 = vpop.f32.mrb[0].mxu0
    %v3045 = vadd.f32 0.0, %v3044
    %v3046 = vpop.f32.mrb[0].mxu0
    %v3047 = vadd.f32 0.0, %v3046
    %3048 = vmatprep.mubr.bf16.mxu0 %v2847
    %3049 = vmatmul.mubr.bf16.gmra.mrb[0].mxu0 %v2846
    %v3050 = vpop.f32.mrb[0].mxu0
    %v3051 = vadd.f32 0.0, %v3050
    %v3052 = vpop.f32.mrb[0].mxu0
    %v3053 = vadd.f32 0.0, %v3052
    %v3054 = vpop.f32.mrb[0].mxu0
    %v3055 = vadd.f32 0.0, %v3054
    %v3056 = vpop.f32.mrb[0].mxu0
    %v3057 = vadd.f32 0.0, %v3056
    %3058 = vmatprep.mubr.bf16.mxu0 %v2857
    %3059 = vmatmul.mubr.bf16.gmra.mrb[0].mxu0 %v2856
    %v3060 = vpop.f32.mrb[0].mxu0
    %v3061 = vadd.f32 0.0, %v3060
    %v3062 = vpop.f32.mrb[0].mxu0
    %v3063 = vadd.f32 0.0, %v3062
    %v3064 = vpop.f32.mrb[0].mxu0
    %v3065 = vadd.f32 0.0, %v3064
    %v3066 = vpop.f32.mrb[0].mxu0
    %v3067 = vadd.f32 0.0, %v3066
    %3068 = vmatprep.mubr.bf16.mxu0 %v2867
    %3069 = vmatmul.mubr.bf16.gmra.mrb[0].mxu0 %v2866
    %v3070 = vpop.f32.mrb[0].mxu0
    %v3071 = vadd.f32 0.0, %v3070
    %v3072 = vpop.f32.mrb[0].mxu0
    %v3073 = vadd.f32 0.0, %v3072
    %v3074 = vpop.f32.mrb[0].mxu0
    %v3075 = vadd.f32 0.0, %v3074
    %v3076 = vpop.f32.mrb[0].mxu0
    %v3077 = vadd.f32 0.0, %v3076
    %3078 = vmatprep.mubr.bf16.mxu0 %v2877
    %3079 = vmatmul.mubr.bf16.gmra.mrb[0].mxu0 %v2876
    %v3080 = vpop.f32.mrb[0].mxu0
    %v3081 = vadd.f32 0.0, %v3080
    %v3082 = vpop.f32.mrb[0].mxu0
    %v3083 = vadd.f32 0.0, %v3082
    %v3084 = vpop.f32.mrb[0].mxu0
    %v3085 = vadd.f32 0.0, %v3084
    %v3086 = vpop.f32.mrb[0].mxu0
    %v3087 = vadd.f32 0.0, %v3086
    %3088 = vmatprep.mubr.bf16.mxu0 %v2887
    %3089 = vmatmul.mubr.bf16.gmra.mrb[0].mxu0 %v2886
    %v3090 = vpop.f32.mrb[0].mxu0
    %v3091 = vadd.f32 0.0, %v3090
    %v3092 = vpop.f32.mrb[0].mxu0
    %v3093 = vadd.f32 0.0, %v3092
    %v3094 = vpop.f32.mrb[0].mxu0
    %v3095 = vadd.f32 0.0, %v3094
    %v3096 = vpop.f32.mrb[0].mxu0
    %v3097 = vadd.f32 0.0, %v3096
    %3098 = vmatprep.mubr.bf16.mxu0 %v2897
    %3099 = vmatmul.mubr.bf16.gmra.mrb[0].mxu0 %v2896
    %v3100 = vpop.f32.mrb[0].mxu0
    %v3101 = vadd.f32 0.0, %v3100
    %v3102 = vpop.f32.mrb[0].mxu0
    %v3103 = vadd.f32 0.0, %v3102
    %v3104 = vpop.f32.mrb[0].mxu0
    %v3105 = vadd.f32 0.0, %v3104
    %v3106 = vpop.f32.mrb[0].mxu0
    %v3107 = vadd.f32 0.0, %v3106
    %3108 = vmatprep.mubr.bf16.mxu0 %v2907
    %3109 = vmatmul.mubr.bf16.gmra.mrb[0].mxu0 %v2906
    %v3110 = vpop.f32.mrb[0].mxu0
    %v3111 = vadd.f32 0.0, %v3110
    %v3112 = vpop.f32.mrb[0].mxu0
    %v3113 = vadd.f32 0.0, %v3112
    %v3114 = vpop.f32.mrb[0].mxu0
    %v3115 = vadd.f32 0.0, %v3114
    %v3116 = vpop.f32.mrb[0].mxu0
    %v3117 = vadd.f32 0.0, %v3116
    %3118 = vmatprep.mubr.bf16.mxu0 %v2917
    %3119 = vmatmul.mubr.bf16.gmra.mrb[0].mxu0 %v2916
    %v3120 = vpop.f32.mrb[0].mxu0
    %v3121 = vadd.f32 0.0, %v3120
    %v3122 = vpop.f32.mrb[0].mxu0
    %v3123 = vadd.f32 0.0, %v3122
    %v3124 = vpop.f32.mrb[0].mxu0
    %v3125 = vadd.f32 0.0, %v3124
    %v3126 = vpop.f32.mrb[0].mxu0
    %v3127 = vadd.f32 0.0, %v3126
    %3128 = vmatprep.mubr.bf16.mxu0 %v2927
    %3129 = vmatmul.mubr.bf16.gmra.mrb[0].mxu0 %v2926
    %v3130 = vpop.f32.mrb[0].mxu0
    %v3131 = vadd.f32 0.0, %v3130
    %v3132 = vpop.f32.mrb[0].mxu0
    %v3133 = vadd.f32 0.0, %v3132
    %v3134 = vpop.f32.mrb[0].mxu0
    %v3135 = vadd.f32 0.0, %v3134
    %v3136 = vpop.f32.mrb[0].mxu0
    %v3137 = vadd.f32 0.0, %v3136
    %3138 = vmatprep.mubr.bf16.mxu0 %v2937
    %3139 = vmatmul.mubr.bf16.gmra.mrb[0].mxu0 %v2936
    %v3140 = vpop.f32.mrb[0].mxu0
    %v3141 = vadd.f32 0.0, %v3140
    %v3142 = vpop.f32.mrb[0].mxu0
    %v3143 = vadd.f32 0.0, %v3142
    %v3144 = vpop.f32.mrb[0].mxu0
    %v3145 = vpop.f32.mrb[0].mxu0
    %3146 = vdwg.mxu0
    %3147 = vmatprep.subr.bf16.mxu0 %v2449
    %3148 = vmatpush1.bf16.msra.mxu0 %v2448
    %3149 = vmatprep.subr.bf16.mxu0 %v2451
    %3150 = vmatpush1.bf16.msra.mxu0 %v2450
    %3151 = vmatprep.subr.bf16.mxu0 %v2453
    %3152 = vmatpush1.bf16.msra.mxu0 %v2452
    %3153 = vmatprep.subr.bf16.mxu0 %v2455
    %3154 = vmatpush1.bf16.msra.mxu0 %v2454
    %3155 = vmatprep.subr.bf16.mxu0 %v2457
    %3156 = vmatpush1.bf16.msra.mxu0 %v2456
    %3157 = vmatprep.subr.bf16.mxu0 %v2459
    %3158 = vmatpush1.bf16.msra.mxu0 %v2458
    %3159 = vmatprep.subr.bf16.mxu0 %v2461
    %3160 = vmatpush1.bf16.msra.mxu0 %v2460
    %3161 = vmatprep.subr.bf16.mxu0 %v2463
    %3162 = vmatpush1.bf16.msra.mxu0 %v2462
    %3163 = vmatprep.subr.bf16.mxu0 %v2465
    %3164 = vmatpush1.bf16.msra.mxu0 %v2464
    %3165 = vmatprep.subr.bf16.mxu0 %v2467
    %3166 = vmatpush1.bf16.msra.mxu0 %v2466
    %3167 = vmatprep.subr.bf16.mxu0 %v2469
    %3168 = vmatpush1.bf16.msra.mxu0 %v2468
    %3169 = vmatprep.subr.bf16.mxu0 %v2471
    %3170 = vmatpush1.bf16.msra.mxu0 %v2470
    %3171 = vmatprep.subr.bf16.mxu0 %v2473
    %3172 = vmatpush1.bf16.msra.mxu0 %v2472
    %3173 = vmatprep.subr.bf16.mxu0 %v2475
    %3174 = vmatpush1.bf16.msra.mxu0 %v2474
    %3175 = vmatprep.subr.bf16.mxu0 %v2477
    %3176 = vmatpush1.bf16.msra.mxu0 %v2476
    %3177 = vmatprep.subr.bf16.mxu0 %v2479
    %3178 = vmatpush1.bf16.msra.mxu0 %v2478
    %3179 = vmatprep.mubr.bf16.mxu0 %v2819
    %3180 = vmatmul.mubr.bf16.gmra.mrb[0].mxu0 %v2818
    %v3181 = vpop.f32.mrb[0].mxu0
    %v3182 = vadd.f32 %v3021, %v3181
    %v3183 = vpop.f32.mrb[0].mxu0
    %v3184 = vadd.f32 %v3023, %v3183
    %v3185 = vpop.f32.mrb[0].mxu0
    %v3186 = vadd.f32 %v3025, %v3185
    %v3187 = vpop.f32.mrb[0].mxu0
    %v3188 = vadd.f32 %v3027, %v3187
    %3189 = vmatprep.mubr.bf16.mxu0 %v2829
    %3190 = vmatmul.mubr.bf16.gmra.mrb[0].mxu0 %v2828
    %v3191 = vpop.f32.mrb[0].mxu0
    %v3192 = vadd.f32 %v3031, %v3191
    %v3193 = vpop.f32.mrb[0].mxu0
    %v3194 = vadd.f32 %v3033, %v3193
    %v3195 = vpop.f32.mrb[0].mxu0
    %v3196 = vadd.f32 %v3035, %v3195
    %v3197 = vpop.f32.mrb[0].mxu0
    %v3198 = vadd.f32 %v3037, %v3197
    %3199 = vmatprep.mubr.bf16.mxu0 %v2839
    %3200 = vmatmul.mubr.bf16.gmra.mrb[0].mxu0 %v2838
    %v3201 = vpop.f32.mrb[0].mxu0
    %v3202 = vadd.f32 %v3041, %v3201
    %v3203 = vpop.f32.mrb[0].mxu0
    %v3204 = vadd.f32 %v3043, %v3203
    %v3205 = vpop.f32.mrb[0].mxu0
    %v3206 = vadd.f32 %v3045, %v3205
    %v3207 = vpop.f32.mrb[0].mxu0
    %v3208 = vadd.f32 %v3047, %v3207
    %3209 = vmatprep.mubr.bf16.mxu0 %v2849
    %3210 = vmatmul.mubr.bf16.gmra.mrb[0].mxu0 %v2848
    %v3211 = vpop.f32.mrb[0].mxu0
    %v3212 = vadd.f32 %v3051, %v3211
    %v3213 = vpop.f32.mrb[0].mxu0
    %v3214 = vadd.f32 %v3053, %v3213
    %v3215 = vpop.f32.mrb[0].mxu0
    %v3216 = vadd.f32 %v3055, %v3215
    %v3217 = vpop.f32.mrb[0].mxu0
    %v3218 = vadd.f32 %v3057, %v3217
    %3219 = vmatprep.mubr.bf16.mxu0 %v2859
    %3220 = vmatmul.mubr.bf16.gmra.mrb[0].mxu0 %v2858
    %v3221 = vpop.f32.mrb[0].mxu0
    %v3222 = vadd.f32 %v3061, %v3221
    %v3223 = vpop.f32.mrb[0].mxu0
    %v3224 = vadd.f32 %v3063, %v3223
    %v3225 = vpop.f32.mrb[0].mxu0
    %v3226 = vadd.f32 %v3065, %v3225
    %v3227 = vpop.f32.mrb[0].mxu0
    %v3228 = vadd.f32 %v3067, %v3227
    %3229 = vmatprep.mubr.bf16.mxu0 %v2869
    %3230 = vmatmul.mubr.bf16.gmra.mrb[0].mxu0 %v2868
    %v3231 = vpop.f32.mrb[0].mxu0
    %v3232 = vadd.f32 %v3071, %v3231
    %v3233 = vpop.f32.mrb[0].mxu0
    %v3234 = vadd.f32 %v3073, %v3233
    %v3235 = vpop.f32.mrb[0].mxu0
    %v3236 = vadd.f32 %v3075, %v3235
    %v3237 = vpop.f32.mrb[0].mxu0
    %v3238 = vadd.f32 %v3077, %v3237
    %3239 = vmatprep.mubr.bf16.mxu0 %v2879
    %3240 = vmatmul.mubr.bf16.gmra.mrb[0].mxu0 %v2878
    %v3241 = vpop.f32.mrb[0].mxu0
    %v3242 = vadd.f32 %v3081, %v3241
    %v3243 = vpop.f32.mrb[0].mxu0
    %v3244 = vadd.f32 %v3083, %v3243
    %v3245 = vpop.f32.mrb[0].mxu0
    %v3246 = vadd.f32 %v3085, %v3245
    %v3247 = vpop.f32.mrb[0].mxu0
    %v3248 = vadd.f32 %v3087, %v3247
    %3249 = vmatprep.mubr.bf16.mxu0 %v2889
    %3250 = vmatmul.mubr.bf16.gmra.mrb[0].mxu0 %v2888
    %v3251 = vpop.f32.mrb[0].mxu0
    %v3252 = vadd.f32 %v3091, %v3251
    %v3253 = vpop.f32.mrb[0].mxu0
    %v3254 = vadd.f32 %v3093, %v3253
    %v3255 = vpop.f32.mrb[0].mxu0
    %v3256 = vadd.f32 %v3095, %v3255
    %v3257 = vpop.f32.mrb[0].mxu0
    %v3258 = vadd.f32 %v3097, %v3257
    %3259 = vmatprep.mubr.bf16.mxu0 %v2899
    %3260 = vmatmul.mubr.bf16.gmra.mrb[0].mxu0 %v2898
    %v3261 = vpop.f32.mrb[0].mxu0
    %v3262 = vadd.f32 %v3101, %v3261
    %v3263 = vpop.f32.mrb[0].mxu0
    %v3264 = vadd.f32 %v3103, %v3263
    %v3265 = vpop.f32.mrb[0].mxu0
    %v3266 = vadd.f32 %v3105, %v3265
    %v3267 = vpop.f32.mrb[0].mxu0
    %v3268 = vadd.f32 %v3107, %v3267
    %3269 = vmatprep.mubr.bf16.mxu0 %v2909
    %3270 = vmatmul.mubr.bf16.gmra.mrb[0].mxu0 %v2908
    %v3271 = vpop.f32.mrb[0].mxu0
    %v3272 = vadd.f32 %v3111, %v3271
    %v3273 = vpop.f32.mrb[0].mxu0
    %v3274 = vadd.f32 %v3113, %v3273
    %v3275 = vpop.f32.mrb[0].mxu0
    %v3276 = vadd.f32 %v3115, %v3275
    %v3277 = vpop.f32.mrb[0].mxu0
    %v3278 = vadd.f32 %v3117, %v3277
    %3279 = vmatprep.mubr.bf16.mxu0 %v2919
    %3280 = vmatmul.mubr.bf16.gmra.mrb[0].mxu0 %v2918
    %v3281 = vpop.f32.mrb[0].mxu0
    %v3282 = vadd.f32 %v3121, %v3281
    %v3283 = vpop.f32.mrb[0].mxu0
    %v3284 = vadd.f32 %v3123, %v3283
    %v3285 = vpop.f32.mrb[0].mxu0
    %v3286 = vadd.f32 %v3125, %v3285
    %v3287 = vpop.f32.mrb[0].mxu0
    %v3288 = vadd.f32 %v3127, %v3287
    %3289 = vmatprep.mubr.bf16.mxu0 %v2929
    %3290 = vmatmul.mubr.bf16.gmra.mrb[0].mxu0 %v2928
    %v3291 = vpop.f32.mrb[0].mxu0
    %v3292 = vadd.f32 %v3131, %v3291
    %v3293 = vpop.f32.mrb[0].mxu0
    %v3294 = vadd.f32 %v3133, %v3293
    %v3295 = vpop.f32.mrb[0].mxu0
    %v3296 = vadd.f32 %v3135, %v3295
    %v3297 = vpop.f32.mrb[0].mxu0
    %v3298 = vadd.f32 %v3137, %v3297
    %3299 = vmatprep.mubr.bf16.mxu0 %v2939
    %3300 = vmatmul.mubr.bf16.gmra.mrb[0].mxu0 %v2938
    %v3301 = vpop.f32.mrb[0].mxu0
    %v3302 = vadd.f32 %v3141, %v3301
    %v3303 = vpop.f32.mrb[0].mxu0
    %v3304 = vadd.f32 %v3143, %v3303
    %v3305 = vpop.f32.mrb[0].mxu0
    %v3306 = vpop.f32.mrb[0].mxu0
    %3307 = vdwg.mxu0
    %3308 = vmatprep.subr.bf16.mxu0 %v2481
    %3309 = vmatpush1.bf16.msra.mxu0 %v2480
    %3310 = vmatprep.subr.bf16.mxu0 %v2483
    %3311 = vmatpush1.bf16.msra.mxu0 %v2482
    %3312 = vmatprep.subr.bf16.mxu0 %v2485
    %3313 = vmatpush1.bf16.msra.mxu0 %v2484
    %3314 = vmatprep.subr.bf16.mxu0 %v2487
    %3315 = vmatpush1.bf16.msra.mxu0 %v2486
    %3316 = vmatprep.subr.bf16.mxu0 %v2489
    %3317 = vmatpush1.bf16.msra.mxu0 %v2488
    %3318 = vmatprep.subr.bf16.mxu0 %v2491
    %3319 = vmatpush1.bf16.msra.mxu0 %v2490
    %3320 = vmatprep.subr.bf16.mxu0 %v2493
    %3321 = vmatpush1.bf16.msra.mxu0 %v2492
    %3322 = vmatprep.subr.bf16.mxu0 %v2495
    %3323 = vmatpush1.bf16.msra.mxu0 %v2494
    %3324 = vmatprep.subr.bf16.mxu0 %v2497
    %3325 = vmatpush1.bf16.msra.mxu0 %v2496
    %3326 = vmatprep.subr.bf16.mxu0 %v2499
    %3327 = vmatpush1.bf16.msra.mxu0 %v2498
    %3328 = vmatprep.subr.bf16.mxu0 %v2501
    %3329 = vmatpush1.bf16.msra.mxu0 %v2500
    %3330 = vmatprep.subr.bf16.mxu0 %v2503
    %3331 = vmatpush1.bf16.msra.mxu0 %v2502
    %3332 = vmatprep.subr.bf16.mxu0 %v2505
    %3333 = vmatpush1.bf16.msra.mxu0 %v2504
    %3334 = vmatprep.subr.bf16.mxu0 %v2507
    %3335 = vmatpush1.bf16.msra.mxu0 %v2506
    %3336 = vmatprep.subr.bf16.mxu0 %v2509
    %3337 = vmatpush1.bf16.msra.mxu0 %v2508
    %3338 = vmatprep.subr.bf16.mxu0 %v2511
    %3339 = vmatpush1.bf16.msra.mxu0 %v2510
    %3340 = vmatprep.mubr.bf16.mxu0 %v2821
    %3341 = vmatmul.mubr.bf16.gmra.mrb[0].mxu0 %v2820
    %v3342 = vpop.f32.mrb[0].mxu0
    %v3343 = vadd.f32 %v3182, %v3342
    %v3344 = vpop.f32.mrb[0].mxu0
    %v3345 = vadd.f32 %v3184, %v3344
    %v3346 = vpop.f32.mrb[0].mxu0
    %v3347 = vadd.f32 %v3186, %v3346
    %v3348 = vpop.f32.mrb[0].mxu0
    %v3349 = vadd.f32 %v3188, %v3348
    %3350 = vmatprep.mubr.bf16.mxu0 %v2831
    %3351 = vmatmul.mubr.bf16.gmra.mrb[0].mxu0 %v2830
    %v3352 = vpop.f32.mrb[0].mxu0
    %v3353 = vadd.f32 %v3192, %v3352
    %v3354 = vpop.f32.mrb[0].mxu0
    %v3355 = vadd.f32 %v3194, %v3354
    %v3356 = vpop.f32.mrb[0].mxu0
    %v3357 = vadd.f32 %v3196, %v3356
    %v3358 = vpop.f32.mrb[0].mxu0
    %v3359 = vadd.f32 %v3198, %v3358
    %3360 = vmatprep.mubr.bf16.mxu0 %v2841
    %3361 = vmatmul.mubr.bf16.gmra.mrb[0].mxu0 %v2840
    %v3362 = vpop.f32.mrb[0].mxu0
    %v3363 = vadd.f32 %v3202, %v3362
    %v3364 = vpop.f32.mrb[0].mxu0
    %v3365 = vadd.f32 %v3204, %v3364
    %v3366 = vpop.f32.mrb[0].mxu0
    %v3367 = vadd.f32 %v3206, %v3366
    %v3368 = vpop.f32.mrb[0].mxu0
    %v3369 = vadd.f32 %v3208, %v3368
    %3370 = vmatprep.mubr.bf16.mxu0 %v2851
    %3371 = vmatmul.mubr.bf16.gmra.mrb[0].mxu0 %v2850
    %v3372 = vpop.f32.mrb[0].mxu0
    %v3373 = vadd.f32 %v3212, %v3372
    %v3374 = vpop.f32.mrb[0].mxu0
    %v3375 = vadd.f32 %v3214, %v3374
    %v3376 = vpop.f32.mrb[0].mxu0
    %v3377 = vadd.f32 %v3216, %v3376
    %v3378 = vpop.f32.mrb[0].mxu0
    %v3379 = vadd.f32 %v3218, %v3378
    %3380 = vmatprep.mubr.bf16.mxu0 %v2861
    %3381 = vmatmul.mubr.bf16.gmra.mrb[0].mxu0 %v2860
    %v3382 = vpop.f32.mrb[0].mxu0
    %v3383 = vadd.f32 %v3222, %v3382
    %v3384 = vpop.f32.mrb[0].mxu0
    %v3385 = vadd.f32 %v3224, %v3384
    %v3386 = vpop.f32.mrb[0].mxu0
    %v3387 = vadd.f32 %v3226, %v3386
    %v3388 = vpop.f32.mrb[0].mxu0
    %v3389 = vadd.f32 %v3228, %v3388
    %3390 = vmatprep.mubr.bf16.mxu0 %v2871
    %3391 = vmatmul.mubr.bf16.gmra.mrb[0].mxu0 %v2870
    %v3392 = vpop.f32.mrb[0].mxu0
    %v3393 = vadd.f32 %v3232, %v3392
    %v3394 = vpop.f32.mrb[0].mxu0
    %v3395 = vadd.f32 %v3234, %v3394
    %v3396 = vpop.f32.mrb[0].mxu0
    %v3397 = vadd.f32 %v3236, %v3396
    %v3398 = vpop.f32.mrb[0].mxu0
    %v3399 = vadd.f32 %v3238, %v3398
    %3400 = vmatprep.mubr.bf16.mxu0 %v2881
    %3401 = vmatmul.mubr.bf16.gmra.mrb[0].mxu0 %v2880
    %v3402 = vpop.f32.mrb[0].mxu0
    %v3403 = vadd.f32 %v3242, %v3402
    %v3404 = vpop.f32.mrb[0].mxu0
    %v3405 = vadd.f32 %v3244, %v3404
    %v3406 = vpop.f32.mrb[0].mxu0
    %v3407 = vadd.f32 %v3246, %v3406
    %v3408 = vpop.f32.mrb[0].mxu0
    %v3409 = vadd.f32 %v3248, %v3408
    %3410 = vmatprep.mubr.bf16.mxu0 %v2891
    %3411 = vmatmul.mubr.bf16.gmra.mrb[0].mxu0 %v2890
    %v3412 = vpop.f32.mrb[0].mxu0
    %v3413 = vadd.f32 %v3252, %v3412
    %v3414 = vpop.f32.mrb[0].mxu0
    %v3415 = vadd.f32 %v3254, %v3414
    %v3416 = vpop.f32.mrb[0].mxu0
    %v3417 = vadd.f32 %v3256, %v3416
    %v3418 = vpop.f32.mrb[0].mxu0
    %v3419 = vadd.f32 %v3258, %v3418
    %3420 = vmatprep.mubr.bf16.mxu0 %v2901
    %3421 = vmatmul.mubr.bf16.gmra.mrb[0].mxu0 %v2900
    %v3422 = vpop.f32.mrb[0].mxu0
    %v3423 = vadd.f32 %v3262, %v3422
    %v3424 = vpop.f32.mrb[0].mxu0
    %v3425 = vadd.f32 %v3264, %v3424
    %v3426 = vpop.f32.mrb[0].mxu0
    %v3427 = vadd.f32 %v3266, %v3426
    %v3428 = vpop.f32.mrb[0].mxu0
    %v3429 = vadd.f32 %v3268, %v3428
    %3430 = vmatprep.mubr.bf16.mxu0 %v2911
    %3431 = vmatmul.mubr.bf16.gmra.mrb[0].mxu0 %v2910
    %v3432 = vpop.f32.mrb[0].mxu0
    %v3433 = vadd.f32 %v3272, %v3432
    %v3434 = vpop.f32.mrb[0].mxu0
    %v3435 = vadd.f32 %v3274, %v3434
    %v3436 = vpop.f32.mrb[0].mxu0
    %v3437 = vadd.f32 %v3276, %v3436
    %v3438 = vpop.f32.mrb[0].mxu0
    %v3439 = vadd.f32 %v3278, %v3438
    %3440 = vmatprep.mubr.bf16.mxu0 %v2921
    %3441 = vmatmul.mubr.bf16.gmra.mrb[0].mxu0 %v2920
    %v3442 = vpop.f32.mrb[0].mxu0
    %v3443 = vadd.f32 %v3282, %v3442
    %v3444 = vpop.f32.mrb[0].mxu0
    %v3445 = vadd.f32 %v3284, %v3444
    %v3446 = vpop.f32.mrb[0].mxu0
    %v3447 = vadd.f32 %v3286, %v3446
    %v3448 = vpop.f32.mrb[0].mxu0
    %v3449 = vadd.f32 %v3288, %v3448
    %3450 = vmatprep.mubr.bf16.mxu0 %v2931
    %3451 = vmatmul.mubr.bf16.gmra.mrb[0].mxu0 %v2930
    %v3452 = vpop.f32.mrb[0].mxu0
    %v3453 = vadd.f32 %v3292, %v3452
    %v3454 = vpop.f32.mrb[0].mxu0
    %v3455 = vadd.f32 %v3294, %v3454
    %v3456 = vpop.f32.mrb[0].mxu0
    %v3457 = vadd.f32 %v3296, %v3456
    %v3458 = vpop.f32.mrb[0].mxu0
    %v3459 = vadd.f32 %v3298, %v3458
    %3460 = vmatprep.mubr.bf16.mxu0 %v2941
    %3461 = vmatmul.mubr.bf16.gmra.mrb[0].mxu0 %v2940
    %v3462 = vpop.f32.mrb[0].mxu0
    %v3463 = vadd.f32 %v3302, %v3462
    %v3464 = vpop.f32.mrb[0].mxu0
    %v3465 = vadd.f32 %v3304, %v3464
    %v3466 = vpop.f32.mrb[0].mxu0
    %v3467 = vpop.f32.mrb[0].mxu0
    %3468 = vdwg.mxu0
    %3469 = vmatprep.subr.bf16.mxu0 %v2513
    %3470 = vmatpush1.bf16.msra.mxu0 %v2512
    %3471 = vmatprep.subr.bf16.mxu0 %v2515
    %3472 = vmatpush1.bf16.msra.mxu0 %v2514
    %3473 = vmatprep.subr.bf16.mxu0 %v2517
    %3474 = vmatpush1.bf16.msra.mxu0 %v2516
    %3475 = vmatprep.subr.bf16.mxu0 %v2519
    %3476 = vmatpush1.bf16.msra.mxu0 %v2518
    %3477 = vmatprep.subr.bf16.mxu0 %v2521
    %3478 = vmatpush1.bf16.msra.mxu0 %v2520
    %3479 = vmatprep.subr.bf16.mxu0 %v2523
    %3480 = vmatpush1.bf16.msra.mxu0 %v2522
    %3481 = vmatprep.subr.bf16.mxu0 %v2525
    %3482 = vmatpush1.bf16.msra.mxu0 %v2524
    %3483 = vmatprep.subr.bf16.mxu0 %v2527
    %3484 = vmatpush1.bf16.msra.mxu0 %v2526
    %3485 = vmatprep.subr.bf16.mxu0 %v2529
    %3486 = vmatpush1.bf16.msra.mxu0 %v2528
    %3487 = vmatprep.subr.bf16.mxu0 %v2531
    %3488 = vmatpush1.bf16.msra.mxu0 %v2530
    %3489 = vmatprep.subr.bf16.mxu0 %v2533
    %3490 = vmatpush1.bf16.msra.mxu0 %v2532
    %3491 = vmatprep.subr.bf16.mxu0 %v2535
    %3492 = vmatpush1.bf16.msra.mxu0 %v2534
    %3493 = vmatprep.subr.bf16.mxu0 %v2537
    %3494 = vmatpush1.bf16.msra.mxu0 %v2536
    %3495 = vmatprep.subr.bf16.mxu0 %v2539
    %3496 = vmatpush1.bf16.msra.mxu0 %v2538
    %3497 = vmatprep.subr.bf16.mxu0 %v2541
    %3498 = vmatpush1.bf16.msra.mxu0 %v2540
    %3499 = vmatprep.subr.bf16.mxu0 %v2543
    %3500 = vmatpush1.bf16.msra.mxu0 %v2542
    %3501 = vmatprep.mubr.bf16.mxu0 %v2823
    %3502 = vmatmul.mubr.bf16.gmra.mrb[0].mxu0 %v2822
    %v3503 = vpop.f32.mrb[0].mxu0
    %v3504 = vadd.f32 %v3343, %v3503
    %v3505 = vpop.f32.mrb[0].mxu0
    %v3506 = vadd.f32 %v3345, %v3505
    %v3507 = vpop.f32.mrb[0].mxu0
    %v3508 = vadd.f32 %v3347, %v3507
    %v3509 = vpop.f32.mrb[0].mxu0
    %v3510 = vadd.f32 %v3349, %v3509
    %3511 = vmatprep.mubr.bf16.mxu0 %v2833
    %3512 = vmatmul.mubr.bf16.gmra.mrb[0].mxu0 %v2832
    %v3513 = vpop.f32.mrb[0].mxu0
    %v3514 = vadd.f32 %v3353, %v3513
    %v3515 = vpop.f32.mrb[0].mxu0
    %v3516 = vadd.f32 %v3355, %v3515
    %v3517 = vpop.f32.mrb[0].mxu0
    %v3518 = vadd.f32 %v3357, %v3517
    %v3519 = vpop.f32.mrb[0].mxu0
    %v3520 = vadd.f32 %v3359, %v3519
    %3521 = vmatprep.mubr.bf16.mxu0 %v2843
    %3522 = vmatmul.mubr.bf16.gmra.mrb[0].mxu0 %v2842
    %v3523 = vpop.f32.mrb[0].mxu0
    %v3524 = vadd.f32 %v3363, %v3523
    %v3525 = vpop.f32.mrb[0].mxu0
    %v3526 = vadd.f32 %v3365, %v3525
    %v3527 = vpop.f32.mrb[0].mxu0
    %v3528 = vadd.f32 %v3367, %v3527
    %v3529 = vpop.f32.mrb[0].mxu0
    %v3530 = vadd.f32 %v3369, %v3529
    %3531 = vmatprep.mubr.bf16.mxu0 %v2853
    %3532 = vmatmul.mubr.bf16.gmra.mrb[0].mxu0 %v2852
    %v3533 = vpop.f32.mrb[0].mxu0
    %v3534 = vadd.f32 %v3373, %v3533
    %v3535 = vpop.f32.mrb[0].mxu0
    %v3536 = vadd.f32 %v3375, %v3535
    %v3537 = vpop.f32.mrb[0].mxu0
    %v3538 = vadd.f32 %v3377, %v3537
    %v3539 = vpop.f32.mrb[0].mxu0
    %v3540 = vadd.f32 %v3379, %v3539
    %3541 = vmatprep.mubr.bf16.mxu0 %v2863
    %3542 = vmatmul.mubr.bf16.gmra.mrb[0].mxu0 %v2862
    %v3543 = vpop.f32.mrb[0].mxu0
    %v3544 = vadd.f32 %v3383, %v3543
    %v3545 = vpop.f32.mrb[0].mxu0
    %v3546 = vadd.f32 %v3385, %v3545
    %v3547 = vpop.f32.mrb[0].mxu0
    %v3548 = vadd.f32 %v3387, %v3547
    %v3549 = vpop.f32.mrb[0].mxu0
    %v3550 = vadd.f32 %v3389, %v3549
    %3551 = vmatprep.mubr.bf16.mxu0 %v2873
    %3552 = vmatmul.mubr.bf16.gmra.mrb[0].mxu0 %v2872
    %v3553 = vpop.f32.mrb[0].mxu0
    %v3554 = vadd.f32 %v3393, %v3553
    %v3555 = vpop.f32.mrb[0].mxu0
    %v3556 = vadd.f32 %v3395, %v3555
    %v3557 = vpop.f32.mrb[0].mxu0
    %v3558 = vadd.f32 %v3397, %v3557
    %v3559 = vpop.f32.mrb[0].mxu0
    %v3560 = vadd.f32 %v3399, %v3559
    %3561 = vmatprep.mubr.bf16.mxu0 %v2883
    %3562 = vmatmul.mubr.bf16.gmra.mrb[0].mxu0 %v2882
    %v3563 = vpop.f32.mrb[0].mxu0
    %v3564 = vadd.f32 %v3403, %v3563
    %v3565 = vpop.f32.mrb[0].mxu0
    %v3566 = vadd.f32 %v3405, %v3565
    %v3567 = vpop.f32.mrb[0].mxu0
    %v3568 = vadd.f32 %v3407, %v3567
    %v3569 = vpop.f32.mrb[0].mxu0
    %v3570 = vadd.f32 %v3409, %v3569
    %3571 = vmatprep.mubr.bf16.mxu0 %v2893
    %3572 = vmatmul.mubr.bf16.gmra.mrb[0].mxu0 %v2892
    %v3573 = vpop.f32.mrb[0].mxu0
    %v3574 = vadd.f32 %v3413, %v3573
    %v3575 = vpop.f32.mrb[0].mxu0
    %v3576 = vadd.f32 %v3415, %v3575
    %v3577 = vpop.f32.mrb[0].mxu0
    %v3578 = vadd.f32 %v3417, %v3577
    %v3579 = vpop.f32.mrb[0].mxu0
    %v3580 = vadd.f32 %v3419, %v3579
    %3581 = vmatprep.mubr.bf16.mxu0 %v2903
    %3582 = vmatmul.mubr.bf16.gmra.mrb[0].mxu0 %v2902
    %v3583 = vpop.f32.mrb[0].mxu0
    %v3584 = vadd.f32 %v3423, %v3583
    %v3585 = vpop.f32.mrb[0].mxu0
    %v3586 = vadd.f32 %v3425, %v3585
    %v3587 = vpop.f32.mrb[0].mxu0
    %v3588 = vadd.f32 %v3427, %v3587
    %v3589 = vpop.f32.mrb[0].mxu0
    %v3590 = vadd.f32 %v3429, %v3589
    %3591 = vmatprep.mubr.bf16.mxu0 %v2913
    %3592 = vmatmul.mubr.bf16.gmra.mrb[0].mxu0 %v2912
    %v3593 = vpop.f32.mrb[0].mxu0
    %v3594 = vadd.f32 %v3433, %v3593
    %v3595 = vpop.f32.mrb[0].mxu0
    %v3596 = vadd.f32 %v3435, %v3595
    %v3597 = vpop.f32.mrb[0].mxu0
    %v3598 = vadd.f32 %v3437, %v3597
    %v3599 = vpop.f32.mrb[0].mxu0
    %v3600 = vadd.f32 %v3439, %v3599
    %3601 = vmatprep.mubr.bf16.mxu0 %v2923
    %3602 = vmatmul.mubr.bf16.gmra.mrb[0].mxu0 %v2922
    %v3603 = vpop.f32.mrb[0].mxu0
    %v3604 = vadd.f32 %v3443, %v3603
    %v3605 = vpop.f32.mrb[0].mxu0
    %v3606 = vadd.f32 %v3445, %v3605
    %v3607 = vpop.f32.mrb[0].mxu0
    %v3608 = vadd.f32 %v3447, %v3607
    %v3609 = vpop.f32.mrb[0].mxu0
    %v3610 = vadd.f32 %v3449, %v3609
    %3611 = vmatprep.mubr.bf16.mxu0 %v2933
    %3612 = vmatmul.mubr.bf16.gmra.mrb[0].mxu0 %v2932
    %v3613 = vpop.f32.mrb[0].mxu0
    %v3614 = vadd.f32 %v3453, %v3613
    %v3615 = vpop.f32.mrb[0].mxu0
    %v3616 = vadd.f32 %v3455, %v3615
    %v3617 = vpop.f32.mrb[0].mxu0
    %v3618 = vadd.f32 %v3457, %v3617
    %v3619 = vpop.f32.mrb[0].mxu0
    %v3620 = vadd.f32 %v3459, %v3619
    %3621 = vmatprep.mubr.bf16.mxu0 %v2943
    %3622 = vmatmul.mubr.bf16.gmra.mrb[0].mxu0 %v2942
    %v3623 = vpop.f32.mrb[0].mxu0
    %v3624 = vadd.f32 %v3463, %v3623
    %v3625 = vpop.f32.mrb[0].mxu0
    %v3626 = vadd.f32 %v3465, %v3625
    %v3627 = vpop.f32.mrb[0].mxu0
    %v3628 = vpop.f32.mrb[0].mxu0
    %3629 = vdwg.mxu0
    %3630 = vmatprep.subr.bf16.mxu0 %v2545
    %3631 = vmatpush1.bf16.msra.mxu0 %v2544
    %3632 = vmatprep.subr.bf16.mxu0 %v2547
    %3633 = vmatpush1.bf16.msra.mxu0 %v2546
    %3634 = vmatprep.subr.bf16.mxu0 %v2549
    %3635 = vmatpush1.bf16.msra.mxu0 %v2548
    %3636 = vmatprep.subr.bf16.mxu0 %v2551
    %3637 = vmatpush1.bf16.msra.mxu0 %v2550
    %3638 = vmatprep.subr.bf16.mxu0 %v2553
    %3639 = vmatpush1.bf16.msra.mxu0 %v2552
    %3640 = vmatprep.subr.bf16.mxu0 %v2555
    %3641 = vmatpush1.bf16.msra.mxu0 %v2554
    %3642 = vmatprep.subr.bf16.mxu0 %v2557
    %3643 = vmatpush1.bf16.msra.mxu0 %v2556
    %3644 = vmatprep.subr.bf16.mxu0 %v2559
    %3645 = vmatpush1.bf16.msra.mxu0 %v2558
    %3646 = vmatprep.subr.bf16.mxu0 %v2561
    %3647 = vmatpush1.bf16.msra.mxu0 %v2560
    %3648 = vmatprep.subr.bf16.mxu0 %v2563
    %3649 = vmatpush1.bf16.msra.mxu0 %v2562
    %3650 = vmatprep.subr.bf16.mxu0 %v2565
    %3651 = vmatpush1.bf16.msra.mxu0 %v2564
    %3652 = vmatprep.subr.bf16.mxu0 0
    %3653 = vmatpush1.bf16.msra.mxu0 0
    %3654 = vmatprep.subr.bf16.mxu0 0
    %3655 = vmatpush1.bf16.msra.mxu0 0
    %3656 = vmatprep.subr.bf16.mxu0 0
    %3657 = vmatpush1.bf16.msra.mxu0 0
    %3658 = vmatprep.subr.bf16.mxu0 0
    %3659 = vmatpush1.bf16.msra.mxu0 0
    %3660 = vmatprep.subr.bf16.mxu0 0
    %3661 = vmatpush1.bf16.msra.mxu0 0
    %3662 = vmatprep.mubr.bf16.mxu0 %v2948
    %3663 = vmatmul.mubr.bf16.gmra.mrb[0].mxu0 %v2824
    %v3664 = vpop.f32.mrb[0].mxu0
    %v3665 = vadd.f32 %v3504, %v3664
    %v3666 = vpop.f32.mrb[0].mxu0
    %v3667 = vadd.f32 %v3506, %v3666
    %v3668 = vpop.f32.mrb[0].mxu0
    %v3669 = vadd.f32 %v3508, %v3668
    %v3670 = vpop.f32.mrb[0].mxu0
    %v3671 = vadd.f32 %v3510, %v3670
    %3672 = vmatprep.mubr.bf16.mxu0 %v2951
    %3673 = vmatmul.mubr.bf16.gmra.mrb[0].mxu0 %v2834
    %v3674 = vpop.f32.mrb[0].mxu0
    %v3675 = vadd.f32 %v3514, %v3674
    %v3676 = vpop.f32.mrb[0].mxu0
    %v3677 = vadd.f32 %v3516, %v3676
    %v3678 = vpop.f32.mrb[0].mxu0
    %v3679 = vadd.f32 %v3518, %v3678
    %v3680 = vpop.f32.mrb[0].mxu0
    %v3681 = vadd.f32 %v3520, %v3680
    %3682 = vmatprep.mubr.bf16.mxu0 %v2954
    %3683 = vmatmul.mubr.bf16.gmra.mrb[0].mxu0 %v2844
    %v3684 = vpop.f32.mrb[0].mxu0
    %v3685 = vadd.f32 %v3524, %v3684
    %v3686 = vpop.f32.mrb[0].mxu0
    %v3687 = vadd.f32 %v3526, %v3686
    %v3688 = vpop.f32.mrb[0].mxu0
    %v3689 = vadd.f32 %v3528, %v3688
    %v3690 = vpop.f32.mrb[0].mxu0
    %v3691 = vadd.f32 %v3530, %v3690
    %3692 = vmatprep.mubr.bf16.mxu0 %v2957
    %3693 = vmatmul.mubr.bf16.gmra.mrb[0].mxu0 %v2854
    %v3694 = vpop.f32.mrb[0].mxu0
    %v3695 = vadd.f32 %v3534, %v3694
    %v3696 = vpop.f32.mrb[0].mxu0
    %v3697 = vadd.f32 %v3536, %v3696
    %v3698 = vpop.f32.mrb[0].mxu0
    %v3699 = vadd.f32 %v3538, %v3698
    %v3700 = vpop.f32.mrb[0].mxu0
    %v3701 = vadd.f32 %v3540, %v3700
    %3702 = vmatprep.mubr.bf16.mxu0 %v2960
    %3703 = vmatmul.mubr.bf16.gmra.mrb[0].mxu0 %v2864
    %v3704 = vpop.f32.mrb[0].mxu0
    %v3705 = vadd.f32 %v3544, %v3704
    %v3706 = vpop.f32.mrb[0].mxu0
    %v3707 = vadd.f32 %v3546, %v3706
    %v3708 = vpop.f32.mrb[0].mxu0
    %v3709 = vadd.f32 %v3548, %v3708
    %v3710 = vpop.f32.mrb[0].mxu0
    %v3711 = vadd.f32 %v3550, %v3710
    %3712 = vmatprep.mubr.bf16.mxu0 %v2963
    %3713 = vmatmul.mubr.bf16.gmra.mrb[0].mxu0 %v2874
    %v3714 = vpop.f32.mrb[0].mxu0
    %v3715 = vadd.f32 %v3554, %v3714
    %v3716 = vpop.f32.mrb[0].mxu0
    %v3717 = vadd.f32 %v3556, %v3716
    %v3718 = vpop.f32.mrb[0].mxu0
    %v3719 = vadd.f32 %v3558, %v3718
    %v3720 = vpop.f32.mrb[0].mxu0
    %v3721 = vadd.f32 %v3560, %v3720
    %3722 = vmatprep.mubr.bf16.mxu0 %v2966
    %3723 = vmatmul.mubr.bf16.gmra.mrb[0].mxu0 %v2884
    %v3724 = vpop.f32.mrb[0].mxu0
    %v3725 = vadd.f32 %v3564, %v3724
    %v3726 = vpop.f32.mrb[0].mxu0
    %v3727 = vadd.f32 %v3566, %v3726
    %v3728 = vpop.f32.mrb[0].mxu0
    %v3729 = vadd.f32 %v3568, %v3728
    %v3730 = vpop.f32.mrb[0].mxu0
    %v3731 = vadd.f32 %v3570, %v3730
    %3732 = vmatprep.mubr.bf16.mxu0 %v2969
    %3733 = vmatmul.mubr.bf16.gmra.mrb[0].mxu0 %v2894
    %v3734 = vpop.f32.mrb[0].mxu0
    %v3735 = vadd.f32 %v3574, %v3734
    %v3736 = vpop.f32.mrb[0].mxu0
    %v3737 = vadd.f32 %v3576, %v3736
    %v3738 = vpop.f32.mrb[0].mxu0
    %v3739 = vadd.f32 %v3578, %v3738
    %v3740 = vpop.f32.mrb[0].mxu0
    %v3741 = vadd.f32 %v3580, %v3740
    %3742 = vmatprep.mubr.bf16.mxu0 %v2972
    %3743 = vmatmul.mubr.bf16.gmra.mrb[0].mxu0 %v2904
    %v3744 = vpop.f32.mrb[0].mxu0
    %v3745 = vadd.f32 %v3584, %v3744
    %v3746 = vpop.f32.mrb[0].mxu0
    %v3747 = vadd.f32 %v3586, %v3746
    %v3748 = vpop.f32.mrb[0].mxu0
    %v3749 = vadd.f32 %v3588, %v3748
    %v3750 = vpop.f32.mrb[0].mxu0
    %v3751 = vadd.f32 %v3590, %v3750
    %3752 = vmatprep.mubr.bf16.mxu0 %v2975
    %3753 = vmatmul.mubr.bf16.gmra.mrb[0].mxu0 %v2914
    %v3754 = vpop.f32.mrb[0].mxu0
    %v3755 = vadd.f32 %v3594, %v3754
    %v3756 = vpop.f32.mrb[0].mxu0
    %v3757 = vadd.f32 %v3596, %v3756
    %v3758 = vpop.f32.mrb[0].mxu0
    %v3759 = vadd.f32 %v3598, %v3758
    %v3760 = vpop.f32.mrb[0].mxu0
    %v3761 = vadd.f32 %v3600, %v3760
    %3762 = vmatprep.mubr.bf16.mxu0 %v2978
    %3763 = vmatmul.mubr.bf16.gmra.mrb[0].mxu0 %v2924
    %v3764 = vpop.f32.mrb[0].mxu0
    %v3765 = vadd.f32 %v3604, %v3764
    %v3766 = vpop.f32.mrb[0].mxu0
    %v3767 = vadd.f32 %v3606, %v3766
    %v3768 = vpop.f32.mrb[0].mxu0
    %v3769 = vadd.f32 %v3608, %v3768
    %v3770 = vpop.f32.mrb[0].mxu0
    %v3771 = vadd.f32 %v3610, %v3770
    %3772 = vmatprep.mubr.bf16.mxu0 %v2981
    %3773 = vmatmul.mubr.bf16.gmra.mrb[0].mxu0 %v2934
    %v3774 = vpop.f32.mrb[0].mxu0
    %v3775 = vadd.f32 %v3614, %v3774
    %v3776 = vpop.f32.mrb[0].mxu0
    %v3777 = vadd.f32 %v3616, %v3776
    %v3778 = vpop.f32.mrb[0].mxu0
    %v3779 = vadd.f32 %v3618, %v3778
    %v3780 = vpop.f32.mrb[0].mxu0
    %v3781 = vadd.f32 %v3620, %v3780
    %3782 = vmatprep.mubr.bf16.mxu0 %v2984
    %3783 = vmatmul.mubr.bf16.gmra.mrb[0].mxu0 %v2944
    %v3784 = vpop.f32.mrb[0].mxu0
    %v3785 = vadd.f32 %v3624, %v3784
    %v3786 = vpop.f32.mrb[0].mxu0
    %v3787 = vadd.f32 %v3626, %v3786
    %v3788 = vpop.f32.mrb[0].mxu0
    %v3789 = vpop.f32.mrb[0].mxu0
    %3790 = vdwg.mxu0
    %3791 = vst [vmem:[#allocation2] sm:$0xff] %v3665
    %vm3792 = vcmask 556032
    %3793 = vst.msk [vmem:[#allocation2 + $0x8] sm:$0xff] %vm3792, %v3667
    %3794 = vst [vmem:[#allocation2 + $0x10] sm:$0xff] %v3669
    %3795 = vst.msk [vmem:[#allocation2 + $0x18] sm:$0xff] %vm3792, %v3671
    %3796 = vst [vmem:[#allocation2 + $0x20] sm:$0xff] %v3675
    %3797 = vst.msk [vmem:[#allocation2 + $0x28] sm:$0xff] %vm3792, %v3677
    %3798 = vst [vmem:[#allocation2 + $0x30] sm:$0xff] %v3679
    %3799 = vst.msk [vmem:[#allocation2 + $0x38] sm:$0xff] %vm3792, %v3681
    %3800 = vst [vmem:[#allocation2 + $0x40] sm:$0xff] %v3685
    %3801 = vst.msk [vmem:[#allocation2 + $0x48] sm:$0xff] %vm3792, %v3687
    %3802 = vst [vmem:[#allocation2 + $0x50] sm:$0xff] %v3689
    %3803 = vst.msk [vmem:[#allocation2 + $0x58] sm:$0xff] %vm3792, %v3691
    %3804 = vst [vmem:[#allocation2 + $0x60] sm:$0xff] %v3695
    %3805 = vst.msk [vmem:[#allocation2 + $0x68] sm:$0xff] %vm3792, %v3697
    %3806 = vst [vmem:[#allocation2 + $0x70] sm:$0xff] %v3699
    %3807 = vst.msk [vmem:[#allocation2 + $0x78] sm:$0xff] %vm3792, %v3701
    %3808 = vst [vmem:[#allocation2 + $0x80] sm:$0xff] %v3705
    %3809 = vst.msk [vmem:[#allocation2 + $0x88] sm:$0xff] %vm3792, %v3707
    %3810 = vst [vmem:[#allocation2 + $0x90] sm:$0xff] %v3709
    %3811 = vst.msk [vmem:[#allocation2 + $0x98] sm:$0xff] %vm3792, %v3711
    %3812 = vst [vmem:[#allocation2 + $0xa0] sm:$0xff] %v3715
    %3813 = vst.msk [vmem:[#allocation2 + $0xa8] sm:$0xff] %vm3792, %v3717
    %3814 = vst [vmem:[#allocation2 + $0xb0] sm:$0xff] %v3719
    %3815 = vst.msk [vmem:[#allocation2 + $0xb8] sm:$0xff] %vm3792, %v3721
    %3816 = vst [vmem:[#allocation2 + $0xc0] sm:$0xff] %v3725
    %3817 = vst.msk [vmem:[#allocation2 + $0xc8] sm:$0xff] %vm3792, %v3727
    %3818 = vst [vmem:[#allocation2 + $0xd0] sm:$0xff] %v3729
    %3819 = vst.msk [vmem:[#allocation2 + $0xd8] sm:$0xff] %vm3792, %v3731
    %3820 = vst [vmem:[#allocation2 + $0xe0] sm:$0xff] %v3735
    %3821 = vst.msk [vmem:[#allocation2 + $0xe8] sm:$0xff] %vm3792, %v3737
    %3822 = vst [vmem:[#allocation2 + $0xf0] sm:$0xff] %v3739
    %3823 = vst.msk [vmem:[#allocation2 + $0xf8] sm:$0xff] %vm3792, %v3741
    %3824 = vst [vmem:[#allocation2 + $0x100] sm:$0xff] %v3745
    %3825 = vst.msk [vmem:[#allocation2 + $0x108] sm:$0xff] %vm3792, %v3747
    %3826 = vst [vmem:[#allocation2 + $0x110] sm:$0xff] %v3749
    %3827 = vst.msk [vmem:[#allocation2 + $0x118] sm:$0xff] %vm3792, %v3751
    %3828 = vst [vmem:[#allocation2 + $0x120] sm:$0xff] %v3755
    %3829 = vst.msk [vmem:[#allocation2 + $0x128] sm:$0xff] %vm3792, %v3757
    %3830 = vst [vmem:[#allocation2 + $0x130] sm:$0xff] %v3759
    %3831 = vst.msk [vmem:[#allocation2 + $0x138] sm:$0xff] %vm3792, %v3761
    %3832 = vst [vmem:[#allocation2 + $0x140] sm:$0xff] %v3765
    %3833 = vst.msk [vmem:[#allocation2 + $0x148] sm:$0xff] %vm3792, %v3767
    %3834 = vst [vmem:[#allocation2 + $0x150] sm:$0xff] %v3769
    %3835 = vst.msk [vmem:[#allocation2 + $0x158] sm:$0xff] %vm3792, %v3771
    %3836 = vst [vmem:[#allocation2 + $0x160] sm:$0xff] %v3775
    %3837 = vst.msk [vmem:[#allocation2 + $0x168] sm:$0xff] %vm3792, %v3777
    %3838 = vst [vmem:[#allocation2 + $0x170] sm:$0xff] %v3779
    %3839 = vst.msk [vmem:[#allocation2 + $0x178] sm:$0xff] %vm3792, %v3781
    %3840 = vst [vmem:[#allocation2 + $0x180] sm:$0xff] %v3785
    %3841 = vst.msk [vmem:[#allocation2 + $0x188] sm:$0xff] %vm3792, %v3787
    // Predicated region
    $region14: #{tpu_custom_call.1} parent=1 // pred_check
      _
    $region15: #{tpu_custom_call.1} parent=1 // pred_check_branch
      %3843 = sbr.rel (0) target = $region17
    $region16: #{tpu_custom_call.1} parent=1 // pred_region
      %s3845 = ssub.s32 6400, 6400
      %3846 = vsyncadd [#allocation3], %s3845
      %s3847 = sshll.u32 [#allocation2], 4
      %s3848 = int_to_ptr.vmem [resolvable:$true] %s3847
      %3853 = dma.vmem_to_hbm [thread:$0]  %s3848, 6400, %s3, [#allocation3], 256, 256, 16
    $region17: #{tpu_custom_call.1} parent=1 // pred_fallthru
      _
    // Predicated region
    $region18: #{tpu_custom_call.1} parent=1 // pred_check
      _
    $region19: #{tpu_custom_call.1} parent=1 // pred_check_branch
      %3855 = sbr.rel (0) target = $region21
    $region20: #{tpu_custom_call.1} parent=1 // pred_region
      %3856 = dma.done [#allocation3], 6400
    $region21: #{tpu_custom_call.1} parent=1 // pred_fallthru
      _
    %3857 = vsyncpa [#allocation3], 1

</llo_original>
